<compile_context>
chip_gen: v5e
topology: v5e:2x2
jax: 0.10.0
libtpu: 0.0.40
codegen_flags: <defaults>
</compile_context>

<pallas_src>
import functools

import jax
import jax.numpy as jnp
import numpy as np
from jax import lax
from jax.experimental import pallas as pl
from jax.experimental.pallas import tpu as pltpu

_BN_EPS = 1e-5
_LEAKY_SLOPE = 0.1
_LANE = 128


def _round_up(x, m):
    return (x + m - 1) // m * m


def _vmem_block_bytes(shape, dtype):
    """Conservative VMEM footprint of one block (lane/sublane-padded tiles)."""
    itemsize = jnp.dtype(dtype).itemsize
    sub = 8 * (4 // itemsize) if itemsize < 4 else 8
    s = list(shape)
    if len(s) >= 1:
        s[-1] = _round_up(s[-1], _LANE)
    if len(s) >= 2:
        s[-2] = _round_up(s[-2], sub)
    n = 1
    for d in s:
        n *= int(d)
    return n * itemsize


def _largest_divisor(n, cap, even=False):
    cap = max(1, min(int(cap), n))
    best = 2 if even else 1
    for d in range(1, cap + 1):
        if n % d == 0 and (not even or d % 2 == 0):
            best = d
    return best


def _vmem_capacity_bytes():
    """Generation-aware VMEM capacity; conservative fallback (v7x per-TC)."""
    try:
        info = pltpu.get_tpu_info()
        for attr in ("vmem_capacity_bytes", "vmem_bytes", "vmem_size_bytes"):
            v = getattr(info, attr, None)
            if isinstance(v, (int, np.integer)) and int(v) > 0:
                return int(v)
    except Exception:
        pass
    return 64 * 1024 * 1024


# ---------------------------------------------------------------------------
# Pass 1: H-tiled conv (2-row halo), bf16 output + f32 per-tile BN partials
# ---------------------------------------------------------------------------
def _make_conv_stats_kernel(th):
    def kernel(xm_ref, xh1_ref, xh2_ref, w_ref, y_ref, ssum_ref, ssq_ref):
        # xm:  (th, R, K3) bf16  -- padded rows [i*th, i*th+th)
        # xh1: (1, R, K3)  bf16  -- padded row  i*th+th       (halo)
        # xh2: (1, R, K3)  bf16  -- padded row  i*th+th+1     (halo)
        # w:   (3, K3, Cp) bf16  -- per-dh weight slabs (dw,cin ordered)
        # y:   (th, R, Cp) bf16 ; ssum/ssq: (1, 1, Cp) f32
        w0 = w_ref[0]
        w1 = w_ref[1]
        w2 = w_ref[2]

        def row(t):  # padded row t of the (th+2)-row window, leading-dim index
            if t < th:
                return xm_ref[t]
            if t == th:
                return xh1_ref[0]
            return xh2_ref[0]

        cp = ssum_ref.shape[-1]
        s = jnp.zeros((1, cp), jnp.float32)
        sq = jnp.zeros((1, cp), jnp.float32)
        for t in range(th):  # static unrolled loop, th bounded by wrapper
            acc = jnp.dot(row(t), w0, preferred_element_type=jnp.float32)
            acc = acc + jnp.dot(row(t + 1), w1, preferred_element_type=jnp.float32)
            acc = acc + jnp.dot(row(t + 2), w2, preferred_element_type=jnp.float32)
            y_ref[t] = acc.astype(y_ref.dtype)          # bf16 storage
            s = s + jnp.sum(acc, axis=0, keepdims=True)  # stats from exact f32
            sq = sq + jnp.sum(acc * acc, axis=0, keepdims=True)
        ssum_ref[0] = s
        ssq_ref[0] = sq

    return kernel


# ---------------------------------------------------------------------------
# Pass 2a: folded BN affine + LeakyReLU (no maxpool)
# ---------------------------------------------------------------------------
def _bn_act_kernel(y_ref, scale_ref, shift_ref, o_ref):
    t = y_ref[...].astype(jnp.float32) * scale_ref[...] + shift_ref[...]
    o_ref[...] = jnp.where(t >= 0, t, _LEAKY_SLOPE * t)


# ---------------------------------------------------------------------------
# Pass 2b: BN affine + LeakyReLU + 2x2 stride-2 maxpool (TH rows per step)
# ---------------------------------------------------------------------------
def _bn_act_pool2_kernel(y_ref, scale_ref, shift_ref, o_ref):
    t = y_ref[...].astype(jnp.float32) * scale_ref[...] + shift_ref[...]
    t = jnp.where(t >= 0, t, _LEAKY_SLOPE * t)
    th, w, n, c = t.shape
    t = t.reshape(th // 2, 2, w, n, c)                 # leading-dim split only
    hmax = jnp.maximum(t[:, 0], t[:, 1])               # (th//2, w, n, c)
    hmax = hmax.reshape(th // 2, w // 2, 2, n, c)      # leading-dim split only
    o_ref[...] = jnp.maximum(hmax[:, :, 0], hmax[:, :, 1])


# ---------------------------------------------------------------------------
# Pass 2c: BN affine + LeakyReLU + 2x2 stride-1 'same' maxpool (1-row halo)
# ---------------------------------------------------------------------------
def _bn_act_poolsame_kernel(y_ref, yh_ref, scale_ref, shift_ref, o_ref):
    s = scale_ref[...]
    b = shift_ref[...]
    t = y_ref[...].astype(jnp.float32) * s + b
    t = jnp.where(t >= 0, t, _LEAKY_SLOPE * t)
    h = yh_ref[...].astype(jnp.float32) * s + b        # halo row (clamped index
    h = jnp.where(h >= 0, h, _LEAKY_SLOPE * h)         #  -> replicate bottom pad)
    tall = jnp.concatenate([t, h], axis=0)             # (th+1, W, N, Cp)
    hmax = jnp.maximum(tall[:-1], tall[1:])            # (th, W, N, Cp)
    w = hmax.shape[1]
    # replicate right pad without a (W+1)-row concat copy: two direct stores
    o_ref[:, :w - 1] = jnp.maximum(hmax[:, :w - 1], hmax[:, 1:])
    o_ref[:, w - 1:w] = hmax[:, w - 1:w]


# ---------------------------------------------------------------------------
# Wrapper
# ---------------------------------------------------------------------------
@functools.partial(jax.jit, static_argnames=("maxpool",))
def block_forward(x_nchw, conv_w, gamma, beta, maxpool=None):
    """Forward of `Block`. x: (N,Cin,H,W); conv_w: (Cout,Cin,3,3) OIHW; returns NCHW."""
    N, Cin, H, W = x_nchw.shape
    Cout = conv_w.shape[0]
    K3 = 3 * Cin
    Cp = _round_up(Cout, _LANE)
    R = W * N
    M = H * R                      # true pixel count for BN statistics
    Hp = H + 2

    # ---- channels-last activation + dw-only im2col (dense K3, no 128 pad) ----
    xt = jnp.transpose(x_nchw, (2, 3, 0, 1)).astype(jnp.bfloat16)     # (H, W, N, Cin)
    xpad = jnp.pad(xt, ((1, 1), (1, 1), (0, 0), (0, 0)))              # (Hp, W+2, N, Cin)
    xcw = jnp.concatenate(
        [xpad[:, 0:W], xpad[:, 1:W + 1], xpad[:, 2:W + 2]], axis=-1)  # (Hp, W, N, 3Cin)
    xcw = xcw.reshape(Hp, R, K3)

    wt = jnp.transpose(conv_w.astype(jnp.float32), (2, 3, 1, 0))      # (dh, dw, cin, cout)
    w3 = wt.reshape(3, K3, Cout)
    w3 = jnp.pad(w3, ((0, 0), (0, 0), (0, Cp - Cout))).astype(jnp.bfloat16)

    gamma_p = jnp.pad(gamma.astype(jnp.float32), (0, Cp - Cout))
    beta_p = jnp.pad(beta.astype(jnp.float32), (0, Cp - Cout))

    # ---- generation-aware VMEM budget ----
    vmem_cap = _vmem_capacity_bytes()
    budget = int(0.40 * vmem_cap)
    vmem_limit = min(int(0.55 * vmem_cap), 96 * 1024 * 1024)
    cparams = pltpu.CompilerParams(
        dimension_semantics=("parallel",),
        vmem_limit_bytes=vmem_limit,
    )

    # ---- pass 1: H-tiled conv with 2-row halo + BN partial sums --------------
    fixed1 = (2 * _vmem_block_bytes((3, K3, Cp), jnp.bfloat16)
              + 4 * _vmem_block_bytes((1, R, K3), jnp.bfloat16)
              + 4 * _vmem_block_bytes((1, 1, Cp), jnp.float32))
    per_row1 = (2 * _vmem_block_bytes((1, R, K3), jnp.bfloat16)     # x in (dbuf)
                + 2 * _vmem_block_bytes((1, R, Cp), jnp.bfloat16)   # y out (dbuf)
                + 2 * _vmem_block_bytes((1, R, Cp), jnp.float32))   # f32 acc temps
    th1 = _largest_divisor(H, min((budget - fixed1) // per_row1, 16))
    g1 = H // th1

    yconv, ssum, ssq = pl.pallas_call(
        _make_conv_stats_kernel(th1),
        grid=(g1,),
        in_specs=[
            pl.BlockSpec((th1, R, K3), lambda i: (i, 0, 0)),
            pl.BlockSpec((1, R, K3), lambda i: (i * th1 + th1, 0, 0)),      # halo row 0
            pl.BlockSpec((1, R, K3), lambda i: (i * th1 + th1 + 1, 0, 0)),  # halo row 1
            pl.BlockSpec((3, K3, Cp), lambda i: (0, 0, 0)),
        ],
        out_specs=[
            pl.BlockSpec((th1, R, Cp), lambda i: (i, 0, 0)),
            pl.BlockSpec((1, 1, Cp), lambda i: (i, 0, 0)),
            pl.BlockSpec((1, 1, Cp), lambda i: (i, 0, 0)),
        ],
        out_shape=[
            jax.ShapeDtypeStruct((H, R, Cp), jnp.bfloat16),
            jax.ShapeDtypeStruct((g1, 1, Cp), jnp.float32),
            jax.ShapeDtypeStruct((g1, 1, Cp), jnp.float32),
        ],
        compiler_params=cparams,
    )(xcw, xcw, xcw, w3)

    # ---- exact full-batch BN stats (f32) folded into scale/shift -------------
    tot_s = jnp.sum(ssum, axis=(0, 1))                  # (Cp,)
    tot_sq = jnp.sum(ssq, axis=(0, 1))                  # (Cp,)
    mean = tot_s / M
    var = jnp.maximum(tot_sq / M - mean * mean, 0.0)    # biased (training BN)
    scale = gamma_p * lax.rsqrt(var + _BN_EPS)
    shift = beta_p - mean * scale
    scale2 = scale.reshape(1, Cp)
    shift2 = shift.reshape(1, Cp)

    # ---- pass 2: BN affine + LeakyReLU (+ fused maxpool) ---------------------
    if maxpool == 'normal':
        assert H % 2 == 0 and W % 2 == 0, "2x2/s2 maxpool needs even H and W"
        y4 = yconv.reshape(H, W, N, Cp)                 # free: HBM layout identical
        fixed2 = 4 * _vmem_block_bytes((1, Cp), jnp.float32)
        per_row2 = (2 * _vmem_block_bytes((1, W, N, Cp), jnp.bfloat16)
                    + 1 * _vmem_block_bytes((1, W // 2, N, Cp), jnp.float32)
                    + 2 * _vmem_block_bytes((1, W, N, Cp), jnp.float32))
        th2 = _largest_divisor(H, min((budget - fixed2) // per_row2, 32), even=True)
        out = pl.pallas_call(
            _bn_act_pool2_kernel,
            grid=(H // th2,),
            in_specs=[
                pl.BlockSpec((th2, W, N, Cp), lambda i: (i, 0, 0, 0)),
                pl.BlockSpec((1, Cp), lambda i: (0, 0)),
                pl.BlockSpec((1, Cp), lambda i: (0, 0)),
            ],
            out_specs=pl.BlockSpec((th2 // 2, W // 2, N, Cp), lambda i: (i, 0, 0, 0)),
            out_shape=jax.ShapeDtypeStruct((H // 2, W // 2, N, Cp), jnp.float32),
            compiler_params=cparams,
        )(y4, scale2, shift2)
    elif maxpool == 'same':
        y4 = yconv.reshape(H, W, N, Cp)
        fixed2 = (4 * _vmem_block_bytes((1, Cp), jnp.float32)
                  + 2 * _vmem_block_bytes((1, W, N, Cp), jnp.bfloat16)
                  + 2 * _vmem_block_bytes((1, W, N, Cp), jnp.float32))
        per_row2 = (2 * _vmem_block_bytes((1, W, N, Cp), jnp.bfloat16)
                    + 2 * _vmem_block_bytes((1, W, N, Cp), jnp.float32)
                    + 2 * _vmem_block_bytes((1, W, N, Cp), jnp.float32))
        th2 = _largest_divisor(H, min((budget - fixed2) // per_row2, 32))
        out = pl.pallas_call(
            _bn_act_poolsame_kernel,
            grid=(H // th2,),
            in_specs=[
                pl.BlockSpec((th2, W, N, Cp), lambda i: (i, 0, 0, 0)),
                pl.BlockSpec((1, W, N, Cp),
                             lambda i: (jnp.minimum(i * th2 + th2, H - 1), 0, 0, 0)),
                pl.BlockSpec((1, Cp), lambda i: (0, 0)),
                pl.BlockSpec((1, Cp), lambda i: (0, 0)),
            ],
            out_specs=pl.BlockSpec((th2, W, N, Cp), lambda i: (i, 0, 0, 0)),
            out_shape=jax.ShapeDtypeStruct((H, W, N, Cp), jnp.float32),
            compiler_params=cparams,
        )(y4, y4, scale2, shift2)
    else:  # Identity maxpool
        fixed2 = 4 * _vmem_block_bytes((1, Cp), jnp.float32)
        per_row2 = (2 * _vmem_block_bytes((1, R, Cp), jnp.bfloat16)
                    + 2 * _vmem_block_bytes((1, R, Cp), jnp.float32)
                    + 1 * _vmem_block_bytes((1, R, Cp), jnp.float32))
        th2 = _largest_divisor(H, min((budget - fixed2) // per_row2, 64))
        out3 = pl.pallas_call(
            _bn_act_kernel,
            grid=(H // th2,),
            in_specs=[
                pl.BlockSpec((th2, R, Cp), lambda i: (i, 0, 0)),
                pl.BlockSpec((1, Cp), lambda i: (0, 0)),
                pl.BlockSpec((1, Cp), lambda i: (0, 0)),
            ],
            out_specs=pl.BlockSpec((th2, R, Cp), lambda i: (i, 0, 0)),
            out_shape=jax.ShapeDtypeStruct((H, R, Cp), jnp.float32),
            compiler_params=cparams,
        )(yconv, scale2, shift2)
        out = out3.reshape(H, W, N, Cp)

    # (H', W', N, Cp) -> NCHW, drop the channel padding.
    # TODO(synk): when Blocks are chained, keep the (H, W, N, C) layout between
    # blocks and only convert at the network boundary to avoid these transposes.
    return jnp.transpose(out[..., :Cout], (2, 3, 0, 1))


# ---------------------------------------------------------------------------
# Pure-JAX reference (module semantics; bf16 operand quantization, f32 accum)
# ---------------------------------------------------------------------------
def block_reference(x_nchw, conv_w, gamma, beta, maxpool=None):
    xq = x_nchw.astype(jnp.bfloat16).astype(jnp.float32)
    wq = conv_w.astype(jnp.bfloat16).astype(jnp.float32)
    y = lax.conv_general_dilated(
        xq, wq, window_strides=(1, 1), padding='SAME',
        dimension_numbers=('NCHW', 'OIHW', 'NCHW'),
        precision=lax.Precision.HIGHEST)
    mean = jnp.mean(y, axis=(0, 2, 3), keepdims=True)
    var = jnp.mean((y - mean) ** 2, axis=(0, 2, 3), keepdims=True)  # biased (training BN)
    y = (y - mean) / jnp.sqrt(var + _BN_EPS)
    y = y * gamma.reshape(1, -1, 1, 1) + beta.reshape(1, -1, 1, 1)
    y = jnp.where(y >= 0, y, _LEAKY_SLOPE * y)
    if maxpool == 'normal':
        y = lax.reduce_window(y, -jnp.inf, lax.max, (1, 1, 2, 2), (1, 1, 2, 2), 'VALID')
    elif maxpool == 'same':
        yp = jnp.pad(y, ((0, 0), (0, 0), (0, 1), (0, 1)), mode='edge')
        y = lax.reduce_window(yp, -jnp.inf, lax.max, (1, 1, 2, 2), (1, 1, 1, 1), 'VALID')
    return y


# ---------------------------------------------------------------------------
if __name__ == "__main__":
    key = jax.random.PRNGKey(0)
    kx, kw, kg, kb = jax.random.split(key, 4)

    N, Cin, Cout, H, W = 2, 4, 8, 16, 16
    x = jax.random.normal(kx, (N, Cin, H, W), dtype=jnp.float32)
    conv_w = 0.1 * jax.random.normal(kw, (Cout, Cin, 3, 3), dtype=jnp.float32)
    gamma = 1.0 + 0.1 * jax.random.normal(kg, (Cout,), dtype=jnp.float32)
    beta = 0.1 * jax.random.normal(kb, (Cout,), dtype=jnp.float32)

    for mode in (None, 'normal', 'same'):
        out = jax.block_until_ready(block_forward(x, conv_w, gamma, beta, maxpool=mode))
        ref = jax.block_until_ready(block_reference(x, conv_w, gamma, beta, maxpool=mode))
        assert out.shape == ref.shape, (mode, out.shape, ref.shape)
        # Tolerance accounts for the bf16 storage of the conv intermediate
        # (perf-review request); BN statistics themselves are exact f32.
        np.testing.assert_allclose(np.asarray(out), np.asarray(ref),
                                   rtol=3e-2, atol=3e-2)

    print("KERNEL_OK")
</pallas_src>

<mosaic_0001>
module attributes {stable_mosaic.version = 11 : i64} {
  func.func @kernel(%arg0: i32, %arg1: memref<16x32x12xbf16, #tpu.memory_space<vmem>>, %arg2: memref<1x32x12xbf16, #tpu.memory_space<vmem>>, %arg3: memref<1x32x12xbf16, #tpu.memory_space<vmem>>, %arg4: memref<3x12x128xbf16, #tpu.memory_space<vmem>>, %arg5: memref<16x32x128xbf16, #tpu.memory_space<vmem>>, %arg6: memref<1x1x128xf32, #tpu.memory_space<vmem>>, %arg7: memref<1x1x128xf32, #tpu.memory_space<vmem>>) attributes {dimension_semantics = [#tpu.dimension_semantics<parallel>], iteration_bounds = array<i64: 1>, scalar_prefetch = 0 : i64, scratch_operands = 0 : i64, tpu.core_type = #tpu.core_type<tc>, window_params = [{transform_indices = @transform_0, window_bounds = array<i64: 16, 32, 12>}, {transform_indices = @transform_1, window_bounds = array<i64: 1, 32, 12>}, {transform_indices = @transform_2, window_bounds = array<i64: 1, 32, 12>}, {pipeline_mode = #tpu.pipeline_mode<synchronous>, transform_indices = @transform_3, window_bounds = array<i64: 3, 12, 128>}, {transform_indices = @transform_4, window_bounds = array<i64: 16, 32, 128>}, {transform_indices = @transform_5, window_bounds = array<i64: 1, 1, 128>}, {transform_indices = @transform_6, window_bounds = array<i64: 1, 1, 128>}]} {
    %c0 = arith.constant 0 : index
    %c0_0 = arith.constant 0 : index
    %c0_1 = arith.constant 0 : index
    %0 = vector.load %arg4[%c0, %c0_0, %c0_1] : memref<3x12x128xbf16, #tpu.memory_space<vmem>>, vector<1x12x128xbf16>
    %1 = vector.shape_cast %0 : vector<1x12x128xbf16> to vector<12x128xbf16>
    %c1 = arith.constant 1 : index
    %c0_2 = arith.constant 0 : index
    %c0_3 = arith.constant 0 : index
    %2 = vector.load %arg4[%c1, %c0_2, %c0_3] : memref<3x12x128xbf16, #tpu.memory_space<vmem>>, vector<1x12x128xbf16>
    %3 = vector.shape_cast %2 : vector<1x12x128xbf16> to vector<12x128xbf16>
    %c2 = arith.constant 2 : index
    %c0_4 = arith.constant 0 : index
    %c0_5 = arith.constant 0 : index
    %4 = vector.load %arg4[%c2, %c0_4, %c0_5] : memref<3x12x128xbf16, #tpu.memory_space<vmem>>, vector<1x12x128xbf16>
    %5 = vector.shape_cast %4 : vector<1x12x128xbf16> to vector<12x128xbf16>
    %cst = arith.constant 0.000000e+00 : f32
    %6 = vector.broadcast %cst : f32 to vector<1x128xf32>
    %cst_6 = arith.constant 0.000000e+00 : f32
    %7 = vector.broadcast %cst_6 : f32 to vector<1x128xf32>
    %c0_7 = arith.constant 0 : index
    %c0_8 = arith.constant 0 : index
    %c0_9 = arith.constant 0 : index
    %8 = vector.load %arg1[%c0_7, %c0_8, %c0_9] : memref<16x32x12xbf16, #tpu.memory_space<vmem>>, vector<1x32x12xbf16>
    %9 = vector.shape_cast %8 : vector<1x32x12xbf16> to vector<32x12xbf16>
    %cst_10 = arith.constant dense<0.000000e+00> : vector<32x128xf32>
    %10 = tpu.matmul %9, %1, %cst_10 {dimension_numbers = #tpu.dot_dimension_numbers<[1], [0], [0], [1], [0, 0, 1, 1], [], []>} : vector<32x12xbf16>, vector<12x128xbf16>, vector<32x128xf32> -> vector<32x128xf32>
    %c1_11 = arith.constant 1 : index
    %c0_12 = arith.constant 0 : index
    %c0_13 = arith.constant 0 : index
    %11 = vector.load %arg1[%c1_11, %c0_12, %c0_13] : memref<16x32x12xbf16, #tpu.memory_space<vmem>>, vector<1x32x12xbf16>
    %12 = vector.shape_cast %11 : vector<1x32x12xbf16> to vector<32x12xbf16>
    %cst_14 = arith.constant dense<0.000000e+00> : vector<32x128xf32>
    %13 = tpu.matmul %12, %3, %cst_14 {dimension_numbers = #tpu.dot_dimension_numbers<[1], [0], [0], [1], [0, 0, 1, 1], [], []>} : vector<32x12xbf16>, vector<12x128xbf16>, vector<32x128xf32> -> vector<32x128xf32>
    %14 = arith.addf %10, %13 : vector<32x128xf32>
    %c2_15 = arith.constant 2 : index
    %c0_16 = arith.constant 0 : index
    %c0_17 = arith.constant 0 : index
    %15 = vector.load %arg1[%c2_15, %c0_16, %c0_17] : memref<16x32x12xbf16, #tpu.memory_space<vmem>>, vector<1x32x12xbf16>
    %16 = vector.shape_cast %15 : vector<1x32x12xbf16> to vector<32x12xbf16>
    %cst_18 = arith.constant dense<0.000000e+00> : vector<32x128xf32>
    %17 = tpu.matmul %16, %5, %cst_18 {dimension_numbers = #tpu.dot_dimension_numbers<[1], [0], [0], [1], [0, 0, 1, 1], [], []>} : vector<32x12xbf16>, vector<12x128xbf16>, vector<32x128xf32> -> vector<32x128xf32>
    %18 = arith.addf %14, %17 : vector<32x128xf32>
    %19 = arith.truncf %18 : vector<32x128xf32> to vector<32x128xbf16>
    %c0_19 = arith.constant 0 : index
    %c0_20 = arith.constant 0 : index
    %c0_21 = arith.constant 0 : index
    %20 = vector.load %arg5[%c0_19, %c0_20, %c0_21] : memref<16x32x128xbf16, #tpu.memory_space<vmem>>, vector<1x32x128xbf16>
    %21 = vector.shape_cast %20 : vector<1x32x128xbf16> to vector<32x128xbf16>
    %22 = vector.shape_cast %19 : vector<32x128xbf16> to vector<1x32x128xbf16>
    tpu.vector_store %arg5[%c0_19, %c0_20, %c0_21], %22 {strides = array<i32>} : memref<16x32x128xbf16, #tpu.memory_space<vmem>>, vector<1x32x128xbf16>,
    %cst_22 = arith.constant dense<0.000000e+00> : vector<128xf32>
    %23 = vector.multi_reduction <add>, %18, %cst_22 [0] : vector<32x128xf32> to vector<128xf32>
    %24 = vector.shape_cast %23 : vector<128xf32> to vector<1x128xf32>
    %25 = arith.addf %6, %24 : vector<1x128xf32>
    %26 = arith.mulf %18, %18 : vector<32x128xf32>
    %cst_23 = arith.constant dense<0.000000e+00> : vector<128xf32>
    %27 = vector.multi_reduction <add>, %26, %cst_23 [0] : vector<32x128xf32> to vector<128xf32>
    %28 = vector.shape_cast %27 : vector<128xf32> to vector<1x128xf32>
    %29 = arith.addf %7, %28 : vector<1x128xf32>
    %c1_24 = arith.constant 1 : index
    %c0_25 = arith.constant 0 : index
    %c0_26 = arith.constant 0 : index
    %30 = vector.load %arg1[%c1_24, %c0_25, %c0_26] : memref<16x32x12xbf16, #tpu.memory_space<vmem>>, vector<1x32x12xbf16>
    %31 = vector.shape_cast %30 : vector<1x32x12xbf16> to vector<32x12xbf16>
    %cst_27 = arith.constant dense<0.000000e+00> : vector<32x128xf32>
    %32 = tpu.matmul %31, %1, %cst_27 {dimension_numbers = #tpu.dot_dimension_numbers<[1], [0], [0], [1], [0, 0, 1, 1], [], []>} : vector<32x12xbf16>, vector<12x128xbf16>, vector<32x128xf32> -> vector<32x128xf32>
    %c2_28 = arith.constant 2 : index
    %c0_29 = arith.constant 0 : index
    %c0_30 = arith.constant 0 : index
    %33 = vector.load %arg1[%c2_28, %c0_29, %c0_30] : memref<16x32x12xbf16, #tpu.memory_space<vmem>>, vector<1x32x12xbf16>
    %34 = vector.shape_cast %33 : vector<1x32x12xbf16> to vector<32x12xbf16>
    %cst_31 = arith.constant dense<0.000000e+00> : vector<32x128xf32>
    %35 = tpu.matmul %34, %3, %cst_31 {dimension_numbers = #tpu.dot_dimension_numbers<[1], [0], [0], [1], [0, 0, 1, 1], [], []>} : vector<32x12xbf16>, vector<12x128xbf16>, vector<32x128xf32> -> vector<32x128xf32>
    %36 = arith.addf %32, %35 : vector<32x128xf32>
    %c3 = arith.constant 3 : index
    %c0_32 = arith.constant 0 : index
    %c0_33 = arith.constant 0 : index
    %37 = vector.load %arg1[%c3, %c0_32, %c0_33] : memref<16x32x12xbf16, #tpu.memory_space<vmem>>, vector<1x32x12xbf16>
    %38 = vector.shape_cast %37 : vector<1x32x12xbf16> to vector<32x12xbf16>
    %cst_34 = arith.constant dense<0.000000e+00> : vector<32x128xf32>
    %39 = tpu.matmul %38, %5, %cst_34 {dimension_numbers = #tpu.dot_dimension_numbers<[1], [0], [0], [1], [0, 0, 1, 1], [], []>} : vector<32x12xbf16>, vector<12x128xbf16>, vector<32x128xf32> -> vector<32x128xf32>
    %40 = arith.addf %36, %39 : vector<32x128xf32>
    %41 = arith.truncf %40 : vector<32x128xf32> to vector<32x128xbf16>
    %c1_35 = arith.constant 1 : index
    %c0_36 = arith.constant 0 : index
    %c0_37 = arith.constant 0 : index
    %42 = vector.load %arg5[%c1_35, %c0_36, %c0_37] : memref<16x32x128xbf16, #tpu.memory_space<vmem>>, vector<1x32x128xbf16>
    %43 = vector.shape_cast %42 : vector<1x32x128xbf16> to vector<32x128xbf16>
    %44 = vector.shape_cast %41 : vector<32x128xbf16> to vector<1x32x128xbf16>
    tpu.vector_store %arg5[%c1_35, %c0_36, %c0_37], %44 {strides = array<i32>} : memref<16x32x128xbf16, #tpu.memory_space<vmem>>, vector<1x32x128xbf16>,
    %cst_38 = arith.constant dense<0.000000e+00> : vector<128xf32>
    %45 = vector.multi_reduction <add>, %40, %cst_38 [0] : vector<32x128xf32> to vector<128xf32>
    %46 = vector.shape_cast %45 : vector<128xf32> to vector<1x128xf32>
    %47 = arith.addf %25, %46 : vector<1x128xf32>
    %48 = arith.mulf %40, %40 : vector<32x128xf32>
    %cst_39 = arith.constant dense<0.000000e+00> : vector<128xf32>
    %49 = vector.multi_reduction <add>, %48, %cst_39 [0] : vector<32x128xf32> to vector<128xf32>
    %50 = vector.shape_cast %49 : vector<128xf32> to vector<1x128xf32>
    %51 = arith.addf %29, %50 : vector<1x128xf32>
    %c2_40 = arith.constant 2 : index
    %c0_41 = arith.constant 0 : index
    %c0_42 = arith.constant 0 : index
    %52 = vector.load %arg1[%c2_40, %c0_41, %c0_42] : memref<16x32x12xbf16, #tpu.memory_space<vmem>>, vector<1x32x12xbf16>
    %53 = vector.shape_cast %52 : vector<1x32x12xbf16> to vector<32x12xbf16>
    %cst_43 = arith.constant dense<0.000000e+00> : vector<32x128xf32>
    %54 = tpu.matmul %53, %1, %cst_43 {dimension_numbers = #tpu.dot_dimension_numbers<[1], [0], [0], [1], [0, 0, 1, 1], [], []>} : vector<32x12xbf16>, vector<12x128xbf16>, vector<32x128xf32> -> vector<32x128xf32>
    %c3_44 = arith.constant 3 : index
    %c0_45 = arith.constant 0 : index
    %c0_46 = arith.constant 0 : index
    %55 = vector.load %arg1[%c3_44, %c0_45, %c0_46] : memref<16x32x12xbf16, #tpu.memory_space<vmem>>, vector<1x32x12xbf16>
    %56 = vector.shape_cast %55 : vector<1x32x12xbf16> to vector<32x12xbf16>
    %cst_47 = arith.constant dense<0.000000e+00> : vector<32x128xf32>
    %57 = tpu.matmul %56, %3, %cst_47 {dimension_numbers = #tpu.dot_dimension_numbers<[1], [0], [0], [1], [0, 0, 1, 1], [], []>} : vector<32x12xbf16>, vector<12x128xbf16>, vector<32x128xf32> -> vector<32x128xf32>
    %58 = arith.addf %54, %57 : vector<32x128xf32>
    %c4 = arith.constant 4 : index
    %c0_48 = arith.constant 0 : index
    %c0_49 = arith.constant 0 : index
    %59 = vector.load %arg1[%c4, %c0_48, %c0_49] : memref<16x32x12xbf16, #tpu.memory_space<vmem>>, vector<1x32x12xbf16>
    %60 = vector.shape_cast %59 : vector<1x32x12xbf16> to vector<32x12xbf16>
    %cst_50 = arith.constant dense<0.000000e+00> : vector<32x128xf32>
    %61 = tpu.matmul %60, %5, %cst_50 {dimension_numbers = #tpu.dot_dimension_numbers<[1], [0], [0], [1], [0, 0, 1, 1], [], []>} : vector<32x12xbf16>, vector<12x128xbf16>, vector<32x128xf32> -> vector<32x128xf32>
    %62 = arith.addf %58, %61 : vector<32x128xf32>
    %63 = arith.truncf %62 : vector<32x128xf32> to vector<32x128xbf16>
    %c2_51 = arith.constant 2 : index
    %c0_52 = arith.constant 0 : index
    %c0_53 = arith.constant 0 : index
    %64 = vector.load %arg5[%c2_51, %c0_52, %c0_53] : memref<16x32x128xbf16, #tpu.memory_space<vmem>>, vector<1x32x128xbf16>
    %65 = vector.shape_cast %64 : vector<1x32x128xbf16> to vector<32x128xbf16>
    %66 = vector.shape_cast %63 : vector<32x128xbf16> to vector<1x32x128xbf16>
    tpu.vector_store %arg5[%c2_51, %c0_52, %c0_53], %66 {strides = array<i32>} : memref<16x32x128xbf16, #tpu.memory_space<vmem>>, vector<1x32x128xbf16>,
    %cst_54 = arith.constant dense<0.000000e+00> : vector<128xf32>
    %67 = vector.multi_reduction <add>, %62, %cst_54 [0] : vector<32x128xf32> to vector<128xf32>
    %68 = vector.shape_cast %67 : vector<128xf32> to vector<1x128xf32>
    %69 = arith.addf %47, %68 : vector<1x128xf32>
    %70 = arith.mulf %62, %62 : vector<32x128xf32>
    %cst_55 = arith.constant dense<0.000000e+00> : vector<128xf32>
    %71 = vector.multi_reduction <add>, %70, %cst_55 [0] : vector<32x128xf32> to vector<128xf32>
    %72 = vector.shape_cast %71 : vector<128xf32> to vector<1x128xf32>
    %73 = arith.addf %51, %72 : vector<1x128xf32>
    %c3_56 = arith.constant 3 : index
    %c0_57 = arith.constant 0 : index
    %c0_58 = arith.constant 0 : index
    %74 = vector.load %arg1[%c3_56, %c0_57, %c0_58] : memref<16x32x12xbf16, #tpu.memory_space<vmem>>, vector<1x32x12xbf16>
    %75 = vector.shape_cast %74 : vector<1x32x12xbf16> to vector<32x12xbf16>
    %cst_59 = arith.constant dense<0.000000e+00> : vector<32x128xf32>
    %76 = tpu.matmul %75, %1, %cst_59 {dimension_numbers = #tpu.dot_dimension_numbers<[1], [0], [0], [1], [0, 0, 1, 1], [], []>} : vector<32x12xbf16>, vector<12x128xbf16>, vector<32x128xf32> -> vector<32x128xf32>
    %c4_60 = arith.constant 4 : index
    %c0_61 = arith.constant 0 : index
    %c0_62 = arith.constant 0 : index
    %77 = vector.load %arg1[%c4_60, %c0_61, %c0_62] : memref<16x32x12xbf16, #tpu.memory_space<vmem>>, vector<1x32x12xbf16>
    %78 = vector.shape_cast %77 : vector<1x32x12xbf16> to vector<32x12xbf16>
    %cst_63 = arith.constant dense<0.000000e+00> : vector<32x128xf32>
    %79 = tpu.matmul %78, %3, %cst_63 {dimension_numbers = #tpu.dot_dimension_numbers<[1], [0], [0], [1], [0, 0, 1, 1], [], []>} : vector<32x12xbf16>, vector<12x128xbf16>, vector<32x128xf32> -> vector<32x128xf32>
    %80 = arith.addf %76, %79 : vector<32x128xf32>
    %c5 = arith.constant 5 : index
    %c0_64 = arith.constant 0 : index
    %c0_65 = arith.constant 0 : index
    %81 = vector.load %arg1[%c5, %c0_64, %c0_65] : memref<16x32x12xbf16, #tpu.memory_space<vmem>>, vector<1x32x12xbf16>
    %82 = vector.shape_cast %81 : vector<1x32x12xbf16> to vector<32x12xbf16>
    %cst_66 = arith.constant dense<0.000000e+00> : vector<32x128xf32>
    %83 = tpu.matmul %82, %5, %cst_66 {dimension_numbers = #tpu.dot_dimension_numbers<[1], [0], [0], [1], [0, 0, 1, 1], [], []>} : vector<32x12xbf16>, vector<12x128xbf16>, vector<32x128xf32> -> vector<32x128xf32>
    %84 = arith.addf %80, %83 : vector<32x128xf32>
    %85 = arith.truncf %84 : vector<32x128xf32> to vector<32x128xbf16>
    %c3_67 = arith.constant 3 : index
    %c0_68 = arith.constant 0 : index
    %c0_69 = arith.constant 0 : index
    %86 = vector.load %arg5[%c3_67, %c0_68, %c0_69] : memref<16x32x128xbf16, #tpu.memory_space<vmem>>, vector<1x32x128xbf16>
    %87 = vector.shape_cast %86 : vector<1x32x128xbf16> to vector<32x128xbf16>
    %88 = vector.shape_cast %85 : vector<32x128xbf16> to vector<1x32x128xbf16>
    tpu.vector_store %arg5[%c3_67, %c0_68, %c0_69], %88 {strides = array<i32>} : memref<16x32x128xbf16, #tpu.memory_space<vmem>>, vector<1x32x128xbf16>,
    %cst_70 = arith.constant dense<0.000000e+00> : vector<128xf32>
    %89 = vector.multi_reduction <add>, %84, %cst_70 [0] : vector<32x128xf32> to vector<128xf32>
    %90 = vector.shape_cast %89 : vector<128xf32> to vector<1x128xf32>
    %91 = arith.addf %69, %90 : vector<1x128xf32>
    %92 = arith.mulf %84, %84 : vector<32x128xf32>
    %cst_71 = arith.constant dense<0.000000e+00> : vector<128xf32>
    %93 = vector.multi_reduction <add>, %92, %cst_71 [0] : vector<32x128xf32> to vector<128xf32>
    %94 = vector.shape_cast %93 : vector<128xf32> to vector<1x128xf32>
    %95 = arith.addf %73, %94 : vector<1x128xf32>
    %c4_72 = arith.constant 4 : index
    %c0_73 = arith.constant 0 : index
    %c0_74 = arith.constant 0 : index
    %96 = vector.load %arg1[%c4_72, %c0_73, %c0_74] : memref<16x32x12xbf16, #tpu.memory_space<vmem>>, vector<1x32x12xbf16>
    %97 = vector.shape_cast %96 : vector<1x32x12xbf16> to vector<32x12xbf16>
    %cst_75 = arith.constant dense<0.000000e+00> : vector<32x128xf32>
    %98 = tpu.matmul %97, %1, %cst_75 {dimension_numbers = #tpu.dot_dimension_numbers<[1], [0], [0], [1], [0, 0, 1, 1], [], []>} : vector<32x12xbf16>, vector<12x128xbf16>, vector<32x128xf32> -> vector<32x128xf32>
    %c5_76 = arith.constant 5 : index
    %c0_77 = arith.constant 0 : index
    %c0_78 = arith.constant 0 : index
    %99 = vector.load %arg1[%c5_76, %c0_77, %c0_78] : memref<16x32x12xbf16, #tpu.memory_space<vmem>>, vector<1x32x12xbf16>
    %100 = vector.shape_cast %99 : vector<1x32x12xbf16> to vector<32x12xbf16>
    %cst_79 = arith.constant dense<0.000000e+00> : vector<32x128xf32>
    %101 = tpu.matmul %100, %3, %cst_79 {dimension_numbers = #tpu.dot_dimension_numbers<[1], [0], [0], [1], [0, 0, 1, 1], [], []>} : vector<32x12xbf16>, vector<12x128xbf16>, vector<32x128xf32> -> vector<32x128xf32>
    %102 = arith.addf %98, %101 : vector<32x128xf32>
    %c6 = arith.constant 6 : index
    %c0_80 = arith.constant 0 : index
    %c0_81 = arith.constant 0 : index
    %103 = vector.load %arg1[%c6, %c0_80, %c0_81] : memref<16x32x12xbf16, #tpu.memory_space<vmem>>, vector<1x32x12xbf16>
    %104 = vector.shape_cast %103 : vector<1x32x12xbf16> to vector<32x12xbf16>
    %cst_82 = arith.constant dense<0.000000e+00> : vector<32x128xf32>
    %105 = tpu.matmul %104, %5, %cst_82 {dimension_numbers = #tpu.dot_dimension_numbers<[1], [0], [0], [1], [0, 0, 1, 1], [], []>} : vector<32x12xbf16>, vector<12x128xbf16>, vector<32x128xf32> -> vector<32x128xf32>
    %106 = arith.addf %102, %105 : vector<32x128xf32>
    %107 = arith.truncf %106 : vector<32x128xf32> to vector<32x128xbf16>
    %c4_83 = arith.constant 4 : index
    %c0_84 = arith.constant 0 : index
    %c0_85 = arith.constant 0 : index
    %108 = vector.load %arg5[%c4_83, %c0_84, %c0_85] : memref<16x32x128xbf16, #tpu.memory_space<vmem>>, vector<1x32x128xbf16>
    %109 = vector.shape_cast %108 : vector<1x32x128xbf16> to vector<32x128xbf16>
    %110 = vector.shape_cast %107 : vector<32x128xbf16> to vector<1x32x128xbf16>
    tpu.vector_store %arg5[%c4_83, %c0_84, %c0_85], %110 {strides = array<i32>} : memref<16x32x128xbf16, #tpu.memory_space<vmem>>, vector<1x32x128xbf16>,
    %cst_86 = arith.constant dense<0.000000e+00> : vector<128xf32>
    %111 = vector.multi_reduction <add>, %106, %cst_86 [0] : vector<32x128xf32> to vector<128xf32>
    %112 = vector.shape_cast %111 : vector<128xf32> to vector<1x128xf32>
    %113 = arith.addf %91, %112 : vector<1x128xf32>
    %114 = arith.mulf %106, %106 : vector<32x128xf32>
    %cst_87 = arith.constant dense<0.000000e+00> : vector<128xf32>
    %115 = vector.multi_reduction <add>, %114, %cst_87 [0] : vector<32x128xf32> to vector<128xf32>
    %116 = vector.shape_cast %115 : vector<128xf32> to vector<1x128xf32>
    %117 = arith.addf %95, %116 : vector<1x128xf32>
    %c5_88 = arith.constant 5 : index
    %c0_89 = arith.constant 0 : index
    %c0_90 = arith.constant 0 : index
    %118 = vector.load %arg1[%c5_88, %c0_89, %c0_90] : memref<16x32x12xbf16, #tpu.memory_space<vmem>>, vector<1x32x12xbf16>
    %119 = vector.shape_cast %118 : vector<1x32x12xbf16> to vector<32x12xbf16>
    %cst_91 = arith.constant dense<0.000000e+00> : vector<32x128xf32>
    %120 = tpu.matmul %119, %1, %cst_91 {dimension_numbers = #tpu.dot_dimension_numbers<[1], [0], [0], [1], [0, 0, 1, 1], [], []>} : vector<32x12xbf16>, vector<12x128xbf16>, vector<32x128xf32> -> vector<32x128xf32>
    %c6_92 = arith.constant 6 : index
    %c0_93 = arith.constant 0 : index
    %c0_94 = arith.constant 0 : index
    %121 = vector.load %arg1[%c6_92, %c0_93, %c0_94] : memref<16x32x12xbf16, #tpu.memory_space<vmem>>, vector<1x32x12xbf16>
    %122 = vector.shape_cast %121 : vector<1x32x12xbf16> to vector<32x12xbf16>
    %cst_95 = arith.constant dense<0.000000e+00> : vector<32x128xf32>
    %123 = tpu.matmul %122, %3, %cst_95 {dimension_numbers = #tpu.dot_dimension_numbers<[1], [0], [0], [1], [0, 0, 1, 1], [], []>} : vector<32x12xbf16>, vector<12x128xbf16>, vector<32x128xf32> -> vector<32x128xf32>
    %124 = arith.addf %120, %123 : vector<32x128xf32>
    %c7 = arith.constant 7 : index
    %c0_96 = arith.constant 0 : index
    %c0_97 = arith.constant 0 : index
    %125 = vector.load %arg1[%c7, %c0_96, %c0_97] : memref<16x32x12xbf16, #tpu.memory_space<vmem>>, vector<1x32x12xbf16>
    %126 = vector.shape_cast %125 : vector<1x32x12xbf16> to vector<32x12xbf16>
    %cst_98 = arith.constant dense<0.000000e+00> : vector<32x128xf32>
    %127 = tpu.matmul %126, %5, %cst_98 {dimension_numbers = #tpu.dot_dimension_numbers<[1], [0], [0], [1], [0, 0, 1, 1], [], []>} : vector<32x12xbf16>, vector<12x128xbf16>, vector<32x128xf32> -> vector<32x128xf32>
    %128 = arith.addf %124, %127 : vector<32x128xf32>
    %129 = arith.truncf %128 : vector<32x128xf32> to vector<32x128xbf16>
    %c5_99 = arith.constant 5 : index
    %c0_100 = arith.constant 0 : index
    %c0_101 = arith.constant 0 : index
    %130 = vector.load %arg5[%c5_99, %c0_100, %c0_101] : memref<16x32x128xbf16, #tpu.memory_space<vmem>>, vector<1x32x128xbf16>
    %131 = vector.shape_cast %130 : vector<1x32x128xbf16> to vector<32x128xbf16>
    %132 = vector.shape_cast %129 : vector<32x128xbf16> to vector<1x32x128xbf16>
    tpu.vector_store %arg5[%c5_99, %c0_100, %c0_101], %132 {strides = array<i32>} : memref<16x32x128xbf16, #tpu.memory_space<vmem>>, vector<1x32x128xbf16>,
    %cst_102 = arith.constant dense<0.000000e+00> : vector<128xf32>
    %133 = vector.multi_reduction <add>, %128, %cst_102 [0] : vector<32x128xf32> to vector<128xf32>
    %134 = vector.shape_cast %133 : vector<128xf32> to vector<1x128xf32>
    %135 = arith.addf %113, %134 : vector<1x128xf32>
    %136 = arith.mulf %128, %128 : vector<32x128xf32>
    %cst_103 = arith.constant dense<0.000000e+00> : vector<128xf32>
    %137 = vector.multi_reduction <add>, %136, %cst_103 [0] : vector<32x128xf32> to vector<128xf32>
    %138 = vector.shape_cast %137 : vector<128xf32> to vector<1x128xf32>
    %139 = arith.addf %117, %138 : vector<1x128xf32>
    %c6_104 = arith.constant 6 : index
    %c0_105 = arith.constant 0 : index
    %c0_106 = arith.constant 0 : index
    %140 = vector.load %arg1[%c6_104, %c0_105, %c0_106] : memref<16x32x12xbf16, #tpu.memory_space<vmem>>, vector<1x32x12xbf16>
    %141 = vector.shape_cast %140 : vector<1x32x12xbf16> to vector<32x12xbf16>
    %cst_107 = arith.constant dense<0.000000e+00> : vector<32x128xf32>
    %142 = tpu.matmul %141, %1, %cst_107 {dimension_numbers = #tpu.dot_dimension_numbers<[1], [0], [0], [1], [0, 0, 1, 1], [], []>} : vector<32x12xbf16>, vector<12x128xbf16>, vector<32x128xf32> -> vector<32x128xf32>
    %c7_108 = arith.constant 7 : index
    %c0_109 = arith.constant 0 : index
    %c0_110 = arith.constant 0 : index
    %143 = vector.load %arg1[%c7_108, %c0_109, %c0_110] : memref<16x32x12xbf16, #tpu.memory_space<vmem>>, vector<1x32x12xbf16>
    %144 = vector.shape_cast %143 : vector<1x32x12xbf16> to vector<32x12xbf16>
    %cst_111 = arith.constant dense<0.000000e+00> : vector<32x128xf32>
    %145 = tpu.matmul %144, %3, %cst_111 {dimension_numbers = #tpu.dot_dimension_numbers<[1], [0], [0], [1], [0, 0, 1, 1], [], []>} : vector<32x12xbf16>, vector<12x128xbf16>, vector<32x128xf32> -> vector<32x128xf32>
    %146 = arith.addf %142, %145 : vector<32x128xf32>
    %c8 = arith.constant 8 : index
    %c0_112 = arith.constant 0 : index
    %c0_113 = arith.constant 0 : index
    %147 = vector.load %arg1[%c8, %c0_112, %c0_113] : memref<16x32x12xbf16, #tpu.memory_space<vmem>>, vector<1x32x12xbf16>
    %148 = vector.shape_cast %147 : vector<1x32x12xbf16> to vector<32x12xbf16>
    %cst_114 = arith.constant dense<0.000000e+00> : vector<32x128xf32>
    %149 = tpu.matmul %148, %5, %cst_114 {dimension_numbers = #tpu.dot_dimension_numbers<[1], [0], [0], [1], [0, 0, 1, 1], [], []>} : vector<32x12xbf16>, vector<12x128xbf16>, vector<32x128xf32> -> vector<32x128xf32>
    %150 = arith.addf %146, %149 : vector<32x128xf32>
    %151 = arith.truncf %150 : vector<32x128xf32> to vector<32x128xbf16>
    %c6_115 = arith.constant 6 : index
    %c0_116 = arith.constant 0 : index
    %c0_117 = arith.constant 0 : index
    %152 = vector.load %arg5[%c6_115, %c0_116, %c0_117] : memref<16x32x128xbf16, #tpu.memory_space<vmem>>, vector<1x32x128xbf16>
    %153 = vector.shape_cast %152 : vector<1x32x128xbf16> to vector<32x128xbf16>
    %154 = vector.shape_cast %151 : vector<32x128xbf16> to vector<1x32x128xbf16>
    tpu.vector_store %arg5[%c6_115, %c0_116, %c0_117], %154 {strides = array<i32>} : memref<16x32x128xbf16, #tpu.memory_space<vmem>>, vector<1x32x128xbf16>,
    %cst_118 = arith.constant dense<0.000000e+00> : vector<128xf32>
    %155 = vector.multi_reduction <add>, %150, %cst_118 [0] : vector<32x128xf32> to vector<128xf32>
    %156 = vector.shape_cast %155 : vector<128xf32> to vector<1x128xf32>
    %157 = arith.addf %135, %156 : vector<1x128xf32>
    %158 = arith.mulf %150, %150 : vector<32x128xf32>
    %cst_119 = arith.constant dense<0.000000e+00> : vector<128xf32>
    %159 = vector.multi_reduction <add>, %158, %cst_119 [0] : vector<32x128xf32> to vector<128xf32>
    %160 = vector.shape_cast %159 : vector<128xf32> to vector<1x128xf32>
    %161 = arith.addf %139, %160 : vector<1x128xf32>
    %c7_120 = arith.constant 7 : index
    %c0_121 = arith.constant 0 : index
    %c0_122 = arith.constant 0 : index
    %162 = vector.load %arg1[%c7_120, %c0_121, %c0_122] : memref<16x32x12xbf16, #tpu.memory_space<vmem>>, vector<1x32x12xbf16>
    %163 = vector.shape_cast %162 : vector<1x32x12xbf16> to vector<32x12xbf16>
    %cst_123 = arith.constant dense<0.000000e+00> : vector<32x128xf32>
    %164 = tpu.matmul %163, %1, %cst_123 {dimension_numbers = #tpu.dot_dimension_numbers<[1], [0], [0], [1], [0, 0, 1, 1], [], []>} : vector<32x12xbf16>, vector<12x128xbf16>, vector<32x128xf32> -> vector<32x128xf32>
    %c8_124 = arith.constant 8 : index
    %c0_125 = arith.constant 0 : index
    %c0_126 = arith.constant 0 : index
    %165 = vector.load %arg1[%c8_124, %c0_125, %c0_126] : memref<16x32x12xbf16, #tpu.memory_space<vmem>>, vector<1x32x12xbf16>
    %166 = vector.shape_cast %165 : vector<1x32x12xbf16> to vector<32x12xbf16>
    %cst_127 = arith.constant dense<0.000000e+00> : vector<32x128xf32>
    %167 = tpu.matmul %166, %3, %cst_127 {dimension_numbers = #tpu.dot_dimension_numbers<[1], [0], [0], [1], [0, 0, 1, 1], [], []>} : vector<32x12xbf16>, vector<12x128xbf16>, vector<32x128xf32> -> vector<32x128xf32>
    %168 = arith.addf %164, %167 : vector<32x128xf32>
    %c9 = arith.constant 9 : index
    %c0_128 = arith.constant 0 : index
    %c0_129 = arith.constant 0 : index
    %169 = vector.load %arg1[%c9, %c0_128, %c0_129] : memref<16x32x12xbf16, #tpu.memory_space<vmem>>, vector<1x32x12xbf16>
    %170 = vector.shape_cast %169 : vector<1x32x12xbf16> to vector<32x12xbf16>
    %cst_130 = arith.constant dense<0.000000e+00> : vector<32x128xf32>
    %171 = tpu.matmul %170, %5, %cst_130 {dimension_numbers = #tpu.dot_dimension_numbers<[1], [0], [0], [1], [0, 0, 1, 1], [], []>} : vector<32x12xbf16>, vector<12x128xbf16>, vector<32x128xf32> -> vector<32x128xf32>
    %172 = arith.addf %168, %171 : vector<32x128xf32>
    %173 = arith.truncf %172 : vector<32x128xf32> to vector<32x128xbf16>
    %c7_131 = arith.constant 7 : index
    %c0_132 = arith.constant 0 : index
    %c0_133 = arith.constant 0 : index
    %174 = vector.load %arg5[%c7_131, %c0_132, %c0_133] : memref<16x32x128xbf16, #tpu.memory_space<vmem>>, vector<1x32x128xbf16>
    %175 = vector.shape_cast %174 : vector<1x32x128xbf16> to vector<32x128xbf16>
    %176 = vector.shape_cast %173 : vector<32x128xbf16> to vector<1x32x128xbf16>
    tpu.vector_store %arg5[%c7_131, %c0_132, %c0_133], %176 {strides = array<i32>} : memref<16x32x128xbf16, #tpu.memory_space<vmem>>, vector<1x32x128xbf16>,
    %cst_134 = arith.constant dense<0.000000e+00> : vector<128xf32>
    %177 = vector.multi_reduction <add>, %172, %cst_134 [0] : vector<32x128xf32> to vector<128xf32>
    %178 = vector.shape_cast %177 : vector<128xf32> to vector<1x128xf32>
    %179 = arith.addf %157, %178 : vector<1x128xf32>
    %180 = arith.mulf %172, %172 : vector<32x128xf32>
    %cst_135 = arith.constant dense<0.000000e+00> : vector<128xf32>
    %181 = vector.multi_reduction <add>, %180, %cst_135 [0] : vector<32x128xf32> to vector<128xf32>
    %182 = vector.shape_cast %181 : vector<128xf32> to vector<1x128xf32>
    %183 = arith.addf %161, %182 : vector<1x128xf32>
    %c8_136 = arith.constant 8 : index
    %c0_137 = arith.constant 0 : index
    %c0_138 = arith.constant 0 : index
    %184 = vector.load %arg1[%c8_136, %c0_137, %c0_138] : memref<16x32x12xbf16, #tpu.memory_space<vmem>>, vector<1x32x12xbf16>
    %185 = vector.shape_cast %184 : vector<1x32x12xbf16> to vector<32x12xbf16>
    %cst_139 = arith.constant dense<0.000000e+00> : vector<32x128xf32>
    %186 = tpu.matmul %185, %1, %cst_139 {dimension_numbers = #tpu.dot_dimension_numbers<[1], [0], [0], [1], [0, 0, 1, 1], [], []>} : vector<32x12xbf16>, vector<12x128xbf16>, vector<32x128xf32> -> vector<32x128xf32>
    %c9_140 = arith.constant 9 : index
    %c0_141 = arith.constant 0 : index
    %c0_142 = arith.constant 0 : index
    %187 = vector.load %arg1[%c9_140, %c0_141, %c0_142] : memref<16x32x12xbf16, #tpu.memory_space<vmem>>, vector<1x32x12xbf16>
    %188 = vector.shape_cast %187 : vector<1x32x12xbf16> to vector<32x12xbf16>
    %cst_143 = arith.constant dense<0.000000e+00> : vector<32x128xf32>
    %189 = tpu.matmul %188, %3, %cst_143 {dimension_numbers = #tpu.dot_dimension_numbers<[1], [0], [0], [1], [0, 0, 1, 1], [], []>} : vector<32x12xbf16>, vector<12x128xbf16>, vector<32x128xf32> -> vector<32x128xf32>
    %190 = arith.addf %186, %189 : vector<32x128xf32>
    %c10 = arith.constant 10 : index
    %c0_144 = arith.constant 0 : index
    %c0_145 = arith.constant 0 : index
    %191 = vector.load %arg1[%c10, %c0_144, %c0_145] : memref<16x32x12xbf16, #tpu.memory_space<vmem>>, vector<1x32x12xbf16>
    %192 = vector.shape_cast %191 : vector<1x32x12xbf16> to vector<32x12xbf16>
    %cst_146 = arith.constant dense<0.000000e+00> : vector<32x128xf32>
    %193 = tpu.matmul %192, %5, %cst_146 {dimension_numbers = #tpu.dot_dimension_numbers<[1], [0], [0], [1], [0, 0, 1, 1], [], []>} : vector<32x12xbf16>, vector<12x128xbf16>, vector<32x128xf32> -> vector<32x128xf32>
    %194 = arith.addf %190, %193 : vector<32x128xf32>
    %195 = arith.truncf %194 : vector<32x128xf32> to vector<32x128xbf16>
    %c8_147 = arith.constant 8 : index
    %c0_148 = arith.constant 0 : index
    %c0_149 = arith.constant 0 : index
    %196 = vector.load %arg5[%c8_147, %c0_148, %c0_149] : memref<16x32x128xbf16, #tpu.memory_space<vmem>>, vector<1x32x128xbf16>
    %197 = vector.shape_cast %196 : vector<1x32x128xbf16> to vector<32x128xbf16>
    %198 = vector.shape_cast %195 : vector<32x128xbf16> to vector<1x32x128xbf16>
    tpu.vector_store %arg5[%c8_147, %c0_148, %c0_149], %198 {strides = array<i32>} : memref<16x32x128xbf16, #tpu.memory_space<vmem>>, vector<1x32x128xbf16>,
    %cst_150 = arith.constant dense<0.000000e+00> : vector<128xf32>
    %199 = vector.multi_reduction <add>, %194, %cst_150 [0] : vector<32x128xf32> to vector<128xf32>
    %200 = vector.shape_cast %199 : vector<128xf32> to vector<1x128xf32>
    %201 = arith.addf %179, %200 : vector<1x128xf32>
    %202 = arith.mulf %194, %194 : vector<32x128xf32>
    %cst_151 = arith.constant dense<0.000000e+00> : vector<128xf32>
    %203 = vector.multi_reduction <add>, %202, %cst_151 [0] : vector<32x128xf32> to vector<128xf32>
    %204 = vector.shape_cast %203 : vector<128xf32> to vector<1x128xf32>
    %205 = arith.addf %183, %204 : vector<1x128xf32>
    %c9_152 = arith.constant 9 : index
    %c0_153 = arith.constant 0 : index
    %c0_154 = arith.constant 0 : index
    %206 = vector.load %arg1[%c9_152, %c0_153, %c0_154] : memref<16x32x12xbf16, #tpu.memory_space<vmem>>, vector<1x32x12xbf16>
    %207 = vector.shape_cast %206 : vector<1x32x12xbf16> to vector<32x12xbf16>
    %cst_155 = arith.constant dense<0.000000e+00> : vector<32x128xf32>
    %208 = tpu.matmul %207, %1, %cst_155 {dimension_numbers = #tpu.dot_dimension_numbers<[1], [0], [0], [1], [0, 0, 1, 1], [], []>} : vector<32x12xbf16>, vector<12x128xbf16>, vector<32x128xf32> -> vector<32x128xf32>
    %c10_156 = arith.constant 10 : index
    %c0_157 = arith.constant 0 : index
    %c0_158 = arith.constant 0 : index
    %209 = vector.load %arg1[%c10_156, %c0_157, %c0_158] : memref<16x32x12xbf16, #tpu.memory_space<vmem>>, vector<1x32x12xbf16>
    %210 = vector.shape_cast %209 : vector<1x32x12xbf16> to vector<32x12xbf16>
    %cst_159 = arith.constant dense<0.000000e+00> : vector<32x128xf32>
    %211 = tpu.matmul %210, %3, %cst_159 {dimension_numbers = #tpu.dot_dimension_numbers<[1], [0], [0], [1], [0, 0, 1, 1], [], []>} : vector<32x12xbf16>, vector<12x128xbf16>, vector<32x128xf32> -> vector<32x128xf32>
    %212 = arith.addf %208, %211 : vector<32x128xf32>
    %c11 = arith.constant 11 : index
    %c0_160 = arith.constant 0 : index
    %c0_161 = arith.constant 0 : index
    %213 = vector.load %arg1[%c11, %c0_160, %c0_161] : memref<16x32x12xbf16, #tpu.memory_space<vmem>>, vector<1x32x12xbf16>
    %214 = vector.shape_cast %213 : vector<1x32x12xbf16> to vector<32x12xbf16>
    %cst_162 = arith.constant dense<0.000000e+00> : vector<32x128xf32>
    %215 = tpu.matmul %214, %5, %cst_162 {dimension_numbers = #tpu.dot_dimension_numbers<[1], [0], [0], [1], [0, 0, 1, 1], [], []>} : vector<32x12xbf16>, vector<12x128xbf16>, vector<32x128xf32> -> vector<32x128xf32>
    %216 = arith.addf %212, %215 : vector<32x128xf32>
    %217 = arith.truncf %216 : vector<32x128xf32> to vector<32x128xbf16>
    %c9_163 = arith.constant 9 : index
    %c0_164 = arith.constant 0 : index
    %c0_165 = arith.constant 0 : index
    %218 = vector.load %arg5[%c9_163, %c0_164, %c0_165] : memref<16x32x128xbf16, #tpu.memory_space<vmem>>, vector<1x32x128xbf16>
    %219 = vector.shape_cast %218 : vector<1x32x128xbf16> to vector<32x128xbf16>
    %220 = vector.shape_cast %217 : vector<32x128xbf16> to vector<1x32x128xbf16>
    tpu.vector_store %arg5[%c9_163, %c0_164, %c0_165], %220 {strides = array<i32>} : memref<16x32x128xbf16, #tpu.memory_space<vmem>>, vector<1x32x128xbf16>,
    %cst_166 = arith.constant dense<0.000000e+00> : vector<128xf32>
    %221 = vector.multi_reduction <add>, %216, %cst_166 [0] : vector<32x128xf32> to vector<128xf32>
    %222 = vector.shape_cast %221 : vector<128xf32> to vector<1x128xf32>
    %223 = arith.addf %201, %222 : vector<1x128xf32>
    %224 = arith.mulf %216, %216 : vector<32x128xf32>
    %cst_167 = arith.constant dense<0.000000e+00> : vector<128xf32>
    %225 = vector.multi_reduction <add>, %224, %cst_167 [0] : vector<32x128xf32> to vector<128xf32>
    %226 = vector.shape_cast %225 : vector<128xf32> to vector<1x128xf32>
    %227 = arith.addf %205, %226 : vector<1x128xf32>
    %c10_168 = arith.constant 10 : index
    %c0_169 = arith.constant 0 : index
    %c0_170 = arith.constant 0 : index
    %228 = vector.load %arg1[%c10_168, %c0_169, %c0_170] : memref<16x32x12xbf16, #tpu.memory_space<vmem>>, vector<1x32x12xbf16>
    %229 = vector.shape_cast %228 : vector<1x32x12xbf16> to vector<32x12xbf16>
    %cst_171 = arith.constant dense<0.000000e+00> : vector<32x128xf32>
    %230 = tpu.matmul %229, %1, %cst_171 {dimension_numbers = #tpu.dot_dimension_numbers<[1], [0], [0], [1], [0, 0, 1, 1], [], []>} : vector<32x12xbf16>, vector<12x128xbf16>, vector<32x128xf32> -> vector<32x128xf32>
    %c11_172 = arith.constant 11 : index
    %c0_173 = arith.constant 0 : index
    %c0_174 = arith.constant 0 : index
    %231 = vector.load %arg1[%c11_172, %c0_173, %c0_174] : memref<16x32x12xbf16, #tpu.memory_space<vmem>>, vector<1x32x12xbf16>
    %232 = vector.shape_cast %231 : vector<1x32x12xbf16> to vector<32x12xbf16>
    %cst_175 = arith.constant dense<0.000000e+00> : vector<32x128xf32>
    %233 = tpu.matmul %232, %3, %cst_175 {dimension_numbers = #tpu.dot_dimension_numbers<[1], [0], [0], [1], [0, 0, 1, 1], [], []>} : vector<32x12xbf16>, vector<12x128xbf16>, vector<32x128xf32> -> vector<32x128xf32>
    %234 = arith.addf %230, %233 : vector<32x128xf32>
    %c12 = arith.constant 12 : index
    %c0_176 = arith.constant 0 : index
    %c0_177 = arith.constant 0 : index
    %235 = vector.load %arg1[%c12, %c0_176, %c0_177] : memref<16x32x12xbf16, #tpu.memory_space<vmem>>, vector<1x32x12xbf16>
    %236 = vector.shape_cast %235 : vector<1x32x12xbf16> to vector<32x12xbf16>
    %cst_178 = arith.constant dense<0.000000e+00> : vector<32x128xf32>
    %237 = tpu.matmul %236, %5, %cst_178 {dimension_numbers = #tpu.dot_dimension_numbers<[1], [0], [0], [1], [0, 0, 1, 1], [], []>} : vector<32x12xbf16>, vector<12x128xbf16>, vector<32x128xf32> -> vector<32x128xf32>
    %238 = arith.addf %234, %237 : vector<32x128xf32>
    %239 = arith.truncf %238 : vector<32x128xf32> to vector<32x128xbf16>
    %c10_179 = arith.constant 10 : index
    %c0_180 = arith.constant 0 : index
    %c0_181 = arith.constant 0 : index
    %240 = vector.load %arg5[%c10_179, %c0_180, %c0_181] : memref<16x32x128xbf16, #tpu.memory_space<vmem>>, vector<1x32x128xbf16>
    %241 = vector.shape_cast %240 : vector<1x32x128xbf16> to vector<32x128xbf16>
    %242 = vector.shape_cast %239 : vector<32x128xbf16> to vector<1x32x128xbf16>
    tpu.vector_store %arg5[%c10_179, %c0_180, %c0_181], %242 {strides = array<i32>} : memref<16x32x128xbf16, #tpu.memory_space<vmem>>, vector<1x32x128xbf16>,
    %cst_182 = arith.constant dense<0.000000e+00> : vector<128xf32>
    %243 = vector.multi_reduction <add>, %238, %cst_182 [0] : vector<32x128xf32> to vector<128xf32>
    %244 = vector.shape_cast %243 : vector<128xf32> to vector<1x128xf32>
    %245 = arith.addf %223, %244 : vector<1x128xf32>
    %246 = arith.mulf %238, %238 : vector<32x128xf32>
    %cst_183 = arith.constant dense<0.000000e+00> : vector<128xf32>
    %247 = vector.multi_reduction <add>, %246, %cst_183 [0] : vector<32x128xf32> to vector<128xf32>
    %248 = vector.shape_cast %247 : vector<128xf32> to vector<1x128xf32>
    %249 = arith.addf %227, %248 : vector<1x128xf32>
    %c11_184 = arith.constant 11 : index
    %c0_185 = arith.constant 0 : index
    %c0_186 = arith.constant 0 : index
    %250 = vector.load %arg1[%c11_184, %c0_185, %c0_186] : memref<16x32x12xbf16, #tpu.memory_space<vmem>>, vector<1x32x12xbf16>
    %251 = vector.shape_cast %250 : vector<1x32x12xbf16> to vector<32x12xbf16>
    %cst_187 = arith.constant dense<0.000000e+00> : vector<32x128xf32>
    %252 = tpu.matmul %251, %1, %cst_187 {dimension_numbers = #tpu.dot_dimension_numbers<[1], [0], [0], [1], [0, 0, 1, 1], [], []>} : vector<32x12xbf16>, vector<12x128xbf16>, vector<32x128xf32> -> vector<32x128xf32>
    %c12_188 = arith.constant 12 : index
    %c0_189 = arith.constant 0 : index
    %c0_190 = arith.constant 0 : index
    %253 = vector.load %arg1[%c12_188, %c0_189, %c0_190] : memref<16x32x12xbf16, #tpu.memory_space<vmem>>, vector<1x32x12xbf16>
    %254 = vector.shape_cast %253 : vector<1x32x12xbf16> to vector<32x12xbf16>
    %cst_191 = arith.constant dense<0.000000e+00> : vector<32x128xf32>
    %255 = tpu.matmul %254, %3, %cst_191 {dimension_numbers = #tpu.dot_dimension_numbers<[1], [0], [0], [1], [0, 0, 1, 1], [], []>} : vector<32x12xbf16>, vector<12x128xbf16>, vector<32x128xf32> -> vector<32x128xf32>
    %256 = arith.addf %252, %255 : vector<32x128xf32>
    %c13 = arith.constant 13 : index
    %c0_192 = arith.constant 0 : index
    %c0_193 = arith.constant 0 : index
    %257 = vector.load %arg1[%c13, %c0_192, %c0_193] : memref<16x32x12xbf16, #tpu.memory_space<vmem>>, vector<1x32x12xbf16>
    %258 = vector.shape_cast %257 : vector<1x32x12xbf16> to vector<32x12xbf16>
    %cst_194 = arith.constant dense<0.000000e+00> : vector<32x128xf32>
    %259 = tpu.matmul %258, %5, %cst_194 {dimension_numbers = #tpu.dot_dimension_numbers<[1], [0], [0], [1], [0, 0, 1, 1], [], []>} : vector<32x12xbf16>, vector<12x128xbf16>, vector<32x128xf32> -> vector<32x128xf32>
    %260 = arith.addf %256, %259 : vector<32x128xf32>
    %261 = arith.truncf %260 : vector<32x128xf32> to vector<32x128xbf16>
    %c11_195 = arith.constant 11 : index
    %c0_196 = arith.constant 0 : index
    %c0_197 = arith.constant 0 : index
    %262 = vector.load %arg5[%c11_195, %c0_196, %c0_197] : memref<16x32x128xbf16, #tpu.memory_space<vmem>>, vector<1x32x128xbf16>
    %263 = vector.shape_cast %262 : vector<1x32x128xbf16> to vector<32x128xbf16>
    %264 = vector.shape_cast %261 : vector<32x128xbf16> to vector<1x32x128xbf16>
    tpu.vector_store %arg5[%c11_195, %c0_196, %c0_197], %264 {strides = array<i32>} : memref<16x32x128xbf16, #tpu.memory_space<vmem>>, vector<1x32x128xbf16>,
    %cst_198 = arith.constant dense<0.000000e+00> : vector<128xf32>
    %265 = vector.multi_reduction <add>, %260, %cst_198 [0] : vector<32x128xf32> to vector<128xf32>
    %266 = vector.shape_cast %265 : vector<128xf32> to vector<1x128xf32>
    %267 = arith.addf %245, %266 : vector<1x128xf32>
    %268 = arith.mulf %260, %260 : vector<32x128xf32>
    %cst_199 = arith.constant dense<0.000000e+00> : vector<128xf32>
    %269 = vector.multi_reduction <add>, %268, %cst_199 [0] : vector<32x128xf32> to vector<128xf32>
    %270 = vector.shape_cast %269 : vector<128xf32> to vector<1x128xf32>
    %271 = arith.addf %249, %270 : vector<1x128xf32>
    %c12_200 = arith.constant 12 : index
    %c0_201 = arith.constant 0 : index
    %c0_202 = arith.constant 0 : index
    %272 = vector.load %arg1[%c12_200, %c0_201, %c0_202] : memref<16x32x12xbf16, #tpu.memory_space<vmem>>, vector<1x32x12xbf16>
    %273 = vector.shape_cast %272 : vector<1x32x12xbf16> to vector<32x12xbf16>
    %cst_203 = arith.constant dense<0.000000e+00> : vector<32x128xf32>
    %274 = tpu.matmul %273, %1, %cst_203 {dimension_numbers = #tpu.dot_dimension_numbers<[1], [0], [0], [1], [0, 0, 1, 1], [], []>} : vector<32x12xbf16>, vector<12x128xbf16>, vector<32x128xf32> -> vector<32x128xf32>
    %c13_204 = arith.constant 13 : index
    %c0_205 = arith.constant 0 : index
    %c0_206 = arith.constant 0 : index
    %275 = vector.load %arg1[%c13_204, %c0_205, %c0_206] : memref<16x32x12xbf16, #tpu.memory_space<vmem>>, vector<1x32x12xbf16>
    %276 = vector.shape_cast %275 : vector<1x32x12xbf16> to vector<32x12xbf16>
    %cst_207 = arith.constant dense<0.000000e+00> : vector<32x128xf32>
    %277 = tpu.matmul %276, %3, %cst_207 {dimension_numbers = #tpu.dot_dimension_numbers<[1], [0], [0], [1], [0, 0, 1, 1], [], []>} : vector<32x12xbf16>, vector<12x128xbf16>, vector<32x128xf32> -> vector<32x128xf32>
    %278 = arith.addf %274, %277 : vector<32x128xf32>
    %c14 = arith.constant 14 : index
    %c0_208 = arith.constant 0 : index
    %c0_209 = arith.constant 0 : index
    %279 = vector.load %arg1[%c14, %c0_208, %c0_209] : memref<16x32x12xbf16, #tpu.memory_space<vmem>>, vector<1x32x12xbf16>
    %280 = vector.shape_cast %279 : vector<1x32x12xbf16> to vector<32x12xbf16>
    %cst_210 = arith.constant dense<0.000000e+00> : vector<32x128xf32>
    %281 = tpu.matmul %280, %5, %cst_210 {dimension_numbers = #tpu.dot_dimension_numbers<[1], [0], [0], [1], [0, 0, 1, 1], [], []>} : vector<32x12xbf16>, vector<12x128xbf16>, vector<32x128xf32> -> vector<32x128xf32>
    %282 = arith.addf %278, %281 : vector<32x128xf32>
    %283 = arith.truncf %282 : vector<32x128xf32> to vector<32x128xbf16>
    %c12_211 = arith.constant 12 : index
    %c0_212 = arith.constant 0 : index
    %c0_213 = arith.constant 0 : index
    %284 = vector.load %arg5[%c12_211, %c0_212, %c0_213] : memref<16x32x128xbf16, #tpu.memory_space<vmem>>, vector<1x32x128xbf16>
    %285 = vector.shape_cast %284 : vector<1x32x128xbf16> to vector<32x128xbf16>
    %286 = vector.shape_cast %283 : vector<32x128xbf16> to vector<1x32x128xbf16>
    tpu.vector_store %arg5[%c12_211, %c0_212, %c0_213], %286 {strides = array<i32>} : memref<16x32x128xbf16, #tpu.memory_space<vmem>>, vector<1x32x128xbf16>,
    %cst_214 = arith.constant dense<0.000000e+00> : vector<128xf32>
    %287 = vector.multi_reduction <add>, %282, %cst_214 [0] : vector<32x128xf32> to vector<128xf32>
    %288 = vector.shape_cast %287 : vector<128xf32> to vector<1x128xf32>
    %289 = arith.addf %267, %288 : vector<1x128xf32>
    %290 = arith.mulf %282, %282 : vector<32x128xf32>
    %cst_215 = arith.constant dense<0.000000e+00> : vector<128xf32>
    %291 = vector.multi_reduction <add>, %290, %cst_215 [0] : vector<32x128xf32> to vector<128xf32>
    %292 = vector.shape_cast %291 : vector<128xf32> to vector<1x128xf32>
    %293 = arith.addf %271, %292 : vector<1x128xf32>
    %c13_216 = arith.constant 13 : index
    %c0_217 = arith.constant 0 : index
    %c0_218 = arith.constant 0 : index
    %294 = vector.load %arg1[%c13_216, %c0_217, %c0_218] : memref<16x32x12xbf16, #tpu.memory_space<vmem>>, vector<1x32x12xbf16>
    %295 = vector.shape_cast %294 : vector<1x32x12xbf16> to vector<32x12xbf16>
    %cst_219 = arith.constant dense<0.000000e+00> : vector<32x128xf32>
    %296 = tpu.matmul %295, %1, %cst_219 {dimension_numbers = #tpu.dot_dimension_numbers<[1], [0], [0], [1], [0, 0, 1, 1], [], []>} : vector<32x12xbf16>, vector<12x128xbf16>, vector<32x128xf32> -> vector<32x128xf32>
    %c14_220 = arith.constant 14 : index
    %c0_221 = arith.constant 0 : index
    %c0_222 = arith.constant 0 : index
    %297 = vector.load %arg1[%c14_220, %c0_221, %c0_222] : memref<16x32x12xbf16, #tpu.memory_space<vmem>>, vector<1x32x12xbf16>
    %298 = vector.shape_cast %297 : vector<1x32x12xbf16> to vector<32x12xbf16>
    %cst_223 = arith.constant dense<0.000000e+00> : vector<32x128xf32>
    %299 = tpu.matmul %298, %3, %cst_223 {dimension_numbers = #tpu.dot_dimension_numbers<[1], [0], [0], [1], [0, 0, 1, 1], [], []>} : vector<32x12xbf16>, vector<12x128xbf16>, vector<32x128xf32> -> vector<32x128xf32>
    %300 = arith.addf %296, %299 : vector<32x128xf32>
    %c15 = arith.constant 15 : index
    %c0_224 = arith.constant 0 : index
    %c0_225 = arith.constant 0 : index
    %301 = vector.load %arg1[%c15, %c0_224, %c0_225] : memref<16x32x12xbf16, #tpu.memory_space<vmem>>, vector<1x32x12xbf16>
    %302 = vector.shape_cast %301 : vector<1x32x12xbf16> to vector<32x12xbf16>
    %cst_226 = arith.constant dense<0.000000e+00> : vector<32x128xf32>
    %303 = tpu.matmul %302, %5, %cst_226 {dimension_numbers = #tpu.dot_dimension_numbers<[1], [0], [0], [1], [0, 0, 1, 1], [], []>} : vector<32x12xbf16>, vector<12x128xbf16>, vector<32x128xf32> -> vector<32x128xf32>
    %304 = arith.addf %300, %303 : vector<32x128xf32>
    %305 = arith.truncf %304 : vector<32x128xf32> to vector<32x128xbf16>
    %c13_227 = arith.constant 13 : index
    %c0_228 = arith.constant 0 : index
    %c0_229 = arith.constant 0 : index
    %306 = vector.load %arg5[%c13_227, %c0_228, %c0_229] : memref<16x32x128xbf16, #tpu.memory_space<vmem>>, vector<1x32x128xbf16>
    %307 = vector.shape_cast %306 : vector<1x32x128xbf16> to vector<32x128xbf16>
    %308 = vector.shape_cast %305 : vector<32x128xbf16> to vector<1x32x128xbf16>
    tpu.vector_store %arg5[%c13_227, %c0_228, %c0_229], %308 {strides = array<i32>} : memref<16x32x128xbf16, #tpu.memory_space<vmem>>, vector<1x32x128xbf16>,
    %cst_230 = arith.constant dense<0.000000e+00> : vector<128xf32>
    %309 = vector.multi_reduction <add>, %304, %cst_230 [0] : vector<32x128xf32> to vector<128xf32>
    %310 = vector.shape_cast %309 : vector<128xf32> to vector<1x128xf32>
    %311 = arith.addf %289, %310 : vector<1x128xf32>
    %312 = arith.mulf %304, %304 : vector<32x128xf32>
    %cst_231 = arith.constant dense<0.000000e+00> : vector<128xf32>
    %313 = vector.multi_reduction <add>, %312, %cst_231 [0] : vector<32x128xf32> to vector<128xf32>
    %314 = vector.shape_cast %313 : vector<128xf32> to vector<1x128xf32>
    %315 = arith.addf %293, %314 : vector<1x128xf32>
    %c14_232 = arith.constant 14 : index
    %c0_233 = arith.constant 0 : index
    %c0_234 = arith.constant 0 : index
    %316 = vector.load %arg1[%c14_232, %c0_233, %c0_234] : memref<16x32x12xbf16, #tpu.memory_space<vmem>>, vector<1x32x12xbf16>
    %317 = vector.shape_cast %316 : vector<1x32x12xbf16> to vector<32x12xbf16>
    %cst_235 = arith.constant dense<0.000000e+00> : vector<32x128xf32>
    %318 = tpu.matmul %317, %1, %cst_235 {dimension_numbers = #tpu.dot_dimension_numbers<[1], [0], [0], [1], [0, 0, 1, 1], [], []>} : vector<32x12xbf16>, vector<12x128xbf16>, vector<32x128xf32> -> vector<32x128xf32>
    %c15_236 = arith.constant 15 : index
    %c0_237 = arith.constant 0 : index
    %c0_238 = arith.constant 0 : index
    %319 = vector.load %arg1[%c15_236, %c0_237, %c0_238] : memref<16x32x12xbf16, #tpu.memory_space<vmem>>, vector<1x32x12xbf16>
    %320 = vector.shape_cast %319 : vector<1x32x12xbf16> to vector<32x12xbf16>
    %cst_239 = arith.constant dense<0.000000e+00> : vector<32x128xf32>
    %321 = tpu.matmul %320, %3, %cst_239 {dimension_numbers = #tpu.dot_dimension_numbers<[1], [0], [0], [1], [0, 0, 1, 1], [], []>} : vector<32x12xbf16>, vector<12x128xbf16>, vector<32x128xf32> -> vector<32x128xf32>
    %322 = arith.addf %318, %321 : vector<32x128xf32>
    %c0_240 = arith.constant 0 : index
    %c0_241 = arith.constant 0 : index
    %c0_242 = arith.constant 0 : index
    %323 = vector.load %arg2[%c0_240, %c0_241, %c0_242] : memref<1x32x12xbf16, #tpu.memory_space<vmem>>, vector<1x32x12xbf16>
    %324 = vector.shape_cast %323 : vector<1x32x12xbf16> to vector<32x12xbf16>
    %cst_243 = arith.constant dense<0.000000e+00> : vector<32x128xf32>
    %325 = tpu.matmul %324, %5, %cst_243 {dimension_numbers = #tpu.dot_dimension_numbers<[1], [0], [0], [1], [0, 0, 1, 1], [], []>} : vector<32x12xbf16>, vector<12x128xbf16>, vector<32x128xf32> -> vector<32x128xf32>
    %326 = arith.addf %322, %325 : vector<32x128xf32>
    %327 = arith.truncf %326 : vector<32x128xf32> to vector<32x128xbf16>
    %c14_244 = arith.constant 14 : index
    %c0_245 = arith.constant 0 : index
    %c0_246 = arith.constant 0 : index
    %328 = vector.load %arg5[%c14_244, %c0_245, %c0_246] : memref<16x32x128xbf16, #tpu.memory_space<vmem>>, vector<1x32x128xbf16>
    %329 = vector.shape_cast %328 : vector<1x32x128xbf16> to vector<32x128xbf16>
    %330 = vector.shape_cast %327 : vector<32x128xbf16> to vector<1x32x128xbf16>
    tpu.vector_store %arg5[%c14_244, %c0_245, %c0_246], %330 {strides = array<i32>} : memref<16x32x128xbf16, #tpu.memory_space<vmem>>, vector<1x32x128xbf16>,
    %cst_247 = arith.constant dense<0.000000e+00> : vector<128xf32>
    %331 = vector.multi_reduction <add>, %326, %cst_247 [0] : vector<32x128xf32> to vector<128xf32>
    %332 = vector.shape_cast %331 : vector<128xf32> to vector<1x128xf32>
    %333 = arith.addf %311, %332 : vector<1x128xf32>
    %334 = arith.mulf %326, %326 : vector<32x128xf32>
    %cst_248 = arith.constant dense<0.000000e+00> : vector<128xf32>
    %335 = vector.multi_reduction <add>, %334, %cst_248 [0] : vector<32x128xf32> to vector<128xf32>
    %336 = vector.shape_cast %335 : vector<128xf32> to vector<1x128xf32>
    %337 = arith.addf %315, %336 : vector<1x128xf32>
    %c15_249 = arith.constant 15 : index
    %c0_250 = arith.constant 0 : index
    %c0_251 = arith.constant 0 : index
    %338 = vector.load %arg1[%c15_249, %c0_250, %c0_251] : memref<16x32x12xbf16, #tpu.memory_space<vmem>>, vector<1x32x12xbf16>
    %339 = vector.shape_cast %338 : vector<1x32x12xbf16> to vector<32x12xbf16>
    %cst_252 = arith.constant dense<0.000000e+00> : vector<32x128xf32>
    %340 = tpu.matmul %339, %1, %cst_252 {dimension_numbers = #tpu.dot_dimension_numbers<[1], [0], [0], [1], [0, 0, 1, 1], [], []>} : vector<32x12xbf16>, vector<12x128xbf16>, vector<32x128xf32> -> vector<32x128xf32>
    %c0_253 = arith.constant 0 : index
    %c0_254 = arith.constant 0 : index
    %c0_255 = arith.constant 0 : index
    %341 = vector.load %arg2[%c0_253, %c0_254, %c0_255] : memref<1x32x12xbf16, #tpu.memory_space<vmem>>, vector<1x32x12xbf16>
    %342 = vector.shape_cast %341 : vector<1x32x12xbf16> to vector<32x12xbf16>
    %cst_256 = arith.constant dense<0.000000e+00> : vector<32x128xf32>
    %343 = tpu.matmul %342, %3, %cst_256 {dimension_numbers = #tpu.dot_dimension_numbers<[1], [0], [0], [1], [0, 0, 1, 1], [], []>} : vector<32x12xbf16>, vector<12x128xbf16>, vector<32x128xf32> -> vector<32x128xf32>
    %344 = arith.addf %340, %343 : vector<32x128xf32>
    %c0_257 = arith.constant 0 : index
    %c0_258 = arith.constant 0 : index
    %c0_259 = arith.constant 0 : index
    %345 = vector.load %arg3[%c0_257, %c0_258, %c0_259] : memref<1x32x12xbf16, #tpu.memory_space<vmem>>, vector<1x32x12xbf16>
    %346 = vector.shape_cast %345 : vector<1x32x12xbf16> to vector<32x12xbf16>
    %cst_260 = arith.constant dense<0.000000e+00> : vector<32x128xf32>
    %347 = tpu.matmul %346, %5, %cst_260 {dimension_numbers = #tpu.dot_dimension_numbers<[1], [0], [0], [1], [0, 0, 1, 1], [], []>} : vector<32x12xbf16>, vector<12x128xbf16>, vector<32x128xf32> -> vector<32x128xf32>
    %348 = arith.addf %344, %347 : vector<32x128xf32>
    %349 = arith.truncf %348 : vector<32x128xf32> to vector<32x128xbf16>
    %c15_261 = arith.constant 15 : index
    %c0_262 = arith.constant 0 : index
    %c0_263 = arith.constant 0 : index
    %350 = vector.load %arg5[%c15_261, %c0_262, %c0_263] : memref<16x32x128xbf16, #tpu.memory_space<vmem>>, vector<1x32x128xbf16>
    %351 = vector.shape_cast %350 : vector<1x32x128xbf16> to vector<32x128xbf16>
    %352 = vector.shape_cast %349 : vector<32x128xbf16> to vector<1x32x128xbf16>
    tpu.vector_store %arg5[%c15_261, %c0_262, %c0_263], %352 {strides = array<i32>} : memref<16x32x128xbf16, #tpu.memory_space<vmem>>, vector<1x32x128xbf16>,
    %cst_264 = arith.constant dense<0.000000e+00> : vector<128xf32>
    %353 = vector.multi_reduction <add>, %348, %cst_264 [0] : vector<32x128xf32> to vector<128xf32>
    %354 = vector.shape_cast %353 : vector<128xf32> to vector<1x128xf32>
    %355 = arith.addf %333, %354 : vector<1x128xf32>
    %356 = arith.mulf %348, %348 : vector<32x128xf32>
    %cst_265 = arith.constant dense<0.000000e+00> : vector<128xf32>
    %357 = vector.multi_reduction <add>, %356, %cst_265 [0] : vector<32x128xf32> to vector<128xf32>
    %358 = vector.shape_cast %357 : vector<128xf32> to vector<1x128xf32>
    %359 = arith.addf %337, %358 : vector<1x128xf32>
    %c0_266 = arith.constant 0 : index
    %c0_267 = arith.constant 0 : index
    %c0_268 = arith.constant 0 : index
    %360 = vector.load %arg6[%c0_266, %c0_267, %c0_268] : memref<1x1x128xf32, #tpu.memory_space<vmem>>, vector<1x1x128xf32>
    %361 = vector.shape_cast %360 : vector<1x1x128xf32> to vector<1x128xf32>
    %362 = vector.shape_cast %355 : vector<1x128xf32> to vector<1x1x128xf32>
    tpu.vector_store %arg6[%c0_266, %c0_267, %c0_268], %362 {strides = array<i32>} : memref<1x1x128xf32, #tpu.memory_space<vmem>>, vector<1x1x128xf32>,
    %c0_269 = arith.constant 0 : index
    %c0_270 = arith.constant 0 : index
    %c0_271 = arith.constant 0 : index
    %363 = vector.load %arg7[%c0_269, %c0_270, %c0_271] : memref<1x1x128xf32, #tpu.memory_space<vmem>>, vector<1x1x128xf32>
    %364 = vector.shape_cast %363 : vector<1x1x128xf32> to vector<1x128xf32>
    %365 = vector.shape_cast %359 : vector<1x128xf32> to vector<1x1x128xf32>
    tpu.vector_store %arg7[%c0_269, %c0_270, %c0_271], %365 {strides = array<i32>} : memref<1x1x128xf32, #tpu.memory_space<vmem>>, vector<1x1x128xf32>,
    return
  }
  func.func @transform_0(%arg0: i32) -> (i32, i32, i32) {
    %c0_i32 = arith.constant 0 : i32
    %c0_i32_0 = arith.constant 0 : i32
    %c0_i32_1 = arith.constant 0 : i32
    return %arg0, %c0_i32, %c0_i32_0 : i32, i32, i32
  }
  func.func @transform_1(%arg0: i32) -> (i32, i32, i32) {
    %c16_i32 = arith.constant 16 : i32
    %0 = arith.muli %arg0, %c16_i32 : i32
    %c16_i32_0 = arith.constant 16 : i32
    %1 = arith.addi %0, %c16_i32_0 : i32
    %c0_i32 = arith.constant 0 : i32
    %c0_i32_1 = arith.constant 0 : i32
    %c0_i32_2 = arith.constant 0 : i32
    return %1, %c0_i32, %c0_i32_1 : i32, i32, i32
  }
  func.func @transform_2(%arg0: i32) -> (i32, i32, i32) {
    %c16_i32 = arith.constant 16 : i32
    %0 = arith.muli %arg0, %c16_i32 : i32
    %c16_i32_0 = arith.constant 16 : i32
    %1 = arith.addi %0, %c16_i32_0 : i32
    %c1_i32 = arith.constant 1 : i32
    %2 = arith.addi %1, %c1_i32 : i32
    %c0_i32 = arith.constant 0 : i32
    %c0_i32_1 = arith.constant 0 : i32
    %c0_i32_2 = arith.constant 0 : i32
    return %2, %c0_i32, %c0_i32_1 : i32, i32, i32
  }
  func.func @transform_3(%arg0: i32) -> (i32, i32, i32) {
    %c0_i32 = arith.constant 0 : i32
    %c0_i32_0 = arith.constant 0 : i32
    %c0_i32_1 = arith.constant 0 : i32
    %c0_i32_2 = arith.constant 0 : i32
    return %c0_i32, %c0_i32_0, %c0_i32_1 : i32, i32, i32
  }
  func.func @transform_4(%arg0: i32) -> (i32, i32, i32) {
    %c0_i32 = arith.constant 0 : i32
    %c0_i32_0 = arith.constant 0 : i32
    %c0_i32_1 = arith.constant 0 : i32
    return %arg0, %c0_i32, %c0_i32_0 : i32, i32, i32
  }
  func.func @transform_5(%arg0: i32) -> (i32, i32, i32) {
    %c0_i32 = arith.constant 0 : i32
    %c0_i32_0 = arith.constant 0 : i32
    %c0_i32_1 = arith.constant 0 : i32
    return %arg0, %c0_i32, %c0_i32_0 : i32, i32, i32
  }
  func.func @transform_6(%arg0: i32) -> (i32, i32, i32) {
    %c0_i32 = arith.constant 0 : i32
    %c0_i32_0 = arith.constant 0 : i32
    %c0_i32_1 = arith.constant 0 : i32
    return %arg0, %c0_i32, %c0_i32_0 : i32, i32, i32
  }
}

module attributes {stable_mosaic.version = 11 : i64} {
  func.func @_bn_act_kernel(%arg0: i32, %arg1: memref<16x32x128xbf16, #tpu.memory_space<vmem>>, %arg2: memref<1x128xf32, #tpu.memory_space<vmem>>, %arg3: memref<1x128xf32, #tpu.memory_space<vmem>>, %arg4: memref<16x32x128xf32, #tpu.memory_space<vmem>>) attributes {dimension_semantics = [#tpu.dimension_semantics<parallel>], iteration_bounds = array<i64: 1>, scalar_prefetch = 0 : i64, scratch_operands = 0 : i64, tpu.core_type = #tpu.core_type<tc>, window_params = [{transform_indices = @transform_0, window_bounds = array<i64: 16, 32, 128>}, {pipeline_mode = #tpu.pipeline_mode<synchronous>, transform_indices = @transform_1, window_bounds = array<i64: 1, 128>}, {pipeline_mode = #tpu.pipeline_mode<synchronous>, transform_indices = @transform_2, window_bounds = array<i64: 1, 128>}, {transform_indices = @transform_3, window_bounds = array<i64: 16, 32, 128>}]} {
    %c0 = arith.constant 0 : index
    %c0_0 = arith.constant 0 : index
    %c0_1 = arith.constant 0 : index
    %0 = vector.load %arg1[%c0, %c0_0, %c0_1] : memref<16x32x128xbf16, #tpu.memory_space<vmem>>, vector<16x32x128xbf16>
    %1 = arith.extf %0 : vector<16x32x128xbf16> to vector<16x32x128xf32>
    %c0_2 = arith.constant 0 : index
    %c0_3 = arith.constant 0 : index
    %2 = vector.load %arg2[%c0_2, %c0_3] : memref<1x128xf32, #tpu.memory_space<vmem>>, vector<1x128xf32>
    %3 = vector.shape_cast %2 : vector<1x128xf32> to vector<1x1x128xf32>
    %4 = vector.broadcast %3 : vector<1x1x128xf32> to vector<16x32x128xf32>
    %5 = arith.mulf %1, %4 : vector<16x32x128xf32>
    %c0_4 = arith.constant 0 : index
    %c0_5 = arith.constant 0 : index
    %6 = vector.load %arg3[%c0_4, %c0_5] : memref<1x128xf32, #tpu.memory_space<vmem>>, vector<1x128xf32>
    %7 = vector.shape_cast %6 : vector<1x128xf32> to vector<1x1x128xf32>
    %8 = vector.broadcast %7 : vector<1x1x128xf32> to vector<16x32x128xf32>
    %9 = arith.addf %5, %8 : vector<16x32x128xf32>
    %cst = arith.constant 0.000000e+00 : f32
    %10 = vector.broadcast %cst : f32 to vector<16x32x128xf32>
    %11 = arith.cmpf oge, %9, %10 : vector<16x32x128xf32>
    %cst_6 = arith.constant 1.000000e-01 : f32
    %12 = vector.broadcast %cst_6 : f32 to vector<16x32x128xf32>
    %13 = arith.mulf %12, %9 : vector<16x32x128xf32>
    %14 = arith.select %11, %9, %13 : vector<16x32x128xi1>, vector<16x32x128xf32>
    %c0_7 = arith.constant 0 : index
    %c0_8 = arith.constant 0 : index
    %c0_9 = arith.constant 0 : index
    %15 = vector.load %arg4[%c0_7, %c0_8, %c0_9] : memref<16x32x128xf32, #tpu.memory_space<vmem>>, vector<16x32x128xf32>
    tpu.vector_store %arg4[%c0_7, %c0_8, %c0_9], %14 {strides = array<i32>} : memref<16x32x128xf32, #tpu.memory_space<vmem>>, vector<16x32x128xf32>,
    return
  }
  func.func @transform_0(%arg0: i32) -> (i32, i32, i32) {
    %c0_i32 = arith.constant 0 : i32
    %c0_i32_0 = arith.constant 0 : i32
    %c0_i32_1 = arith.constant 0 : i32
    return %arg0, %c0_i32, %c0_i32_0 : i32, i32, i32
  }
  func.func @transform_1(%arg0: i32) -> (i32, i32) {
    %c0_i32 = arith.constant 0 : i32
    %c0_i32_0 = arith.constant 0 : i32
    %c0_i32_1 = arith.constant 0 : i32
    return %c0_i32, %c0_i32_0 : i32, i32
  }
  func.func @transform_2(%arg0: i32) -> (i32, i32) {
    %c0_i32 = arith.constant 0 : i32
    %c0_i32_0 = arith.constant 0 : i32
    %c0_i32_1 = arith.constant 0 : i32
    return %c0_i32, %c0_i32_0 : i32, i32
  }
  func.func @transform_3(%arg0: i32) -> (i32, i32, i32) {
    %c0_i32 = arith.constant 0 : i32
    %c0_i32_0 = arith.constant 0 : i32
    %c0_i32_1 = arith.constant 0 : i32
    return %arg0, %c0_i32, %c0_i32_0 : i32, i32, i32
  }
}

</mosaic_0001>

<llo_original>
// kernel: block_forward.3
$region0: #{block_forward.3}
  #allocation0 [shape = 'u32[]', space=smem, size = 0x4, offset = 0x4, fixed_abs, tag = 'smem constant byte address 0x4 - core index']
  #allocation1 [shape = 'u32[72,128]{1,0:T(1,128)}', space=vmem, size = 0x9000, scoped, tag = 'internal scratch']
  %s0 = inlined_call_operand.vmem [shape: bf16[16,32,128], index: 0, kind: input, shape index: {}]
  %s1 = inlined_call_operand.vmem [shape: f32[1,128], index: 1, kind: input, shape index: {}]
  %s2 = inlined_call_operand.vmem [shape: f32[1,128], index: 2, kind: input, shape index: {}]
  %s3 = inlined_call_operand.vmem [shape: f32[16,32,128], index: 3, kind: output, shape index: {}]
  %s4 = sld [smem:[#allocation0]]
  $region22: #{block_forward.3} parent=0
    _
  %s6 = ssub.s32 1, %s4
  %s7 = scalar_select 0, %s6, %s4
  // Predicated region
  $region2: #{block_forward.3} parent=0 // pred_check
    _
  $region3: #{block_forward.3} parent=0 // pred_check_branch
    %9 = sbr.rel (0) target = $region5
  $region4: #{block_forward.3} parent=0 // pred_region
    _
  $region5: #{block_forward.3} parent=0 // pred_fallthru
    _
  // Predicated region
  $region6: #{block_forward.3} parent=0 // pred_check
    _
  $region7: #{block_forward.3} parent=0 // pred_check_branch
    %11 = sbr.rel (0) target = $region9
  $region8: #{block_forward.3} parent=0 // pred_region
    _
  $region9: #{block_forward.3} parent=0 // pred_fallthru
    _
  // Predicated region
  $region10: #{block_forward.3} parent=0 // pred_check
    _
  $region11: #{block_forward.3} parent=0 // pred_check_branch
    %13 = sbr.rel (0) target = $region13
  $region12: #{block_forward.3} parent=0 // pred_region
    _
  $region13: #{block_forward.3} parent=0 // pred_fallthru
    _
  %v14 = vld [vmem:[%s0] sm:$0xf]
  %v15 = vld [vmem:[%s0 + $0x4] sm:$0xf]
  %v16 = vld [vmem:[%s0 + $0x8] sm:$0xf]
  %v17 = vld [vmem:[%s0 + $0xc] sm:$0xf]
  %v18 = vld [vmem:[%s0 + $0x10] sm:$0xf]
  %v19 = vld [vmem:[%s0 + $0x14] sm:$0xf]
  %v20 = vld [vmem:[%s0 + $0x18] sm:$0xf]
  %v21 = vld [vmem:[%s0 + $0x1c] sm:$0xf]
  %v22 = vld [vmem:[%s0 + $0x20] sm:$0xf]
  %v23 = vld [vmem:[%s0 + $0x24] sm:$0xf]
  %v24 = vld [vmem:[%s0 + $0x28] sm:$0xf]
  %v25 = vld [vmem:[%s0 + $0x2c] sm:$0xf]
  %v26 = vld [vmem:[%s0 + $0x30] sm:$0xf]
  %v27 = vld [vmem:[%s0 + $0x34] sm:$0xf]
  %v28 = vld [vmem:[%s0 + $0x38] sm:$0xf]
  %v29 = vld [vmem:[%s0 + $0x3c] sm:$0xf]
  %v30 = vld [vmem:[%s0 + $0x40] sm:$0xf]
  %v31 = vld [vmem:[%s0 + $0x44] sm:$0xf]
  %v32 = vld [vmem:[%s0 + $0x48] sm:$0xf]
  %v33 = vld [vmem:[%s0 + $0x4c] sm:$0xf]
  %v34 = vld [vmem:[%s0 + $0x50] sm:$0xf]
  %v35 = vld [vmem:[%s0 + $0x54] sm:$0xf]
  %v36 = vld [vmem:[%s0 + $0x58] sm:$0xf]
  %v37 = vld [vmem:[%s0 + $0x5c] sm:$0xf]
  %v38 = vld [vmem:[%s0 + $0x60] sm:$0xf]
  %v39 = vld [vmem:[%s0 + $0x64] sm:$0xf]
  %v40 = vld [vmem:[%s0 + $0x68] sm:$0xf]
  %v41 = vld [vmem:[%s0 + $0x6c] sm:$0xf]
  %v42 = vld [vmem:[%s0 + $0x70] sm:$0xf]
  %v43 = vld [vmem:[%s0 + $0x74] sm:$0xf]
  %v44 = vld [vmem:[%s0 + $0x78] sm:$0xf]
  %v45 = vld [vmem:[%s0 + $0x7c] sm:$0xf]
  %v46 = vld [vmem:[%s0 + $0x80] sm:$0xf]
  %v47 = vld [vmem:[%s0 + $0x84] sm:$0xf]
  %v48 = vld [vmem:[%s0 + $0x88] sm:$0xf]
  %v49 = vld [vmem:[%s0 + $0x8c] sm:$0xf]
  %v50 = vld [vmem:[%s0 + $0x90] sm:$0xf]
  %v51 = vld [vmem:[%s0 + $0x94] sm:$0xf]
  %v52 = vld [vmem:[%s0 + $0x98] sm:$0xf]
  %v53 = vld [vmem:[%s0 + $0x9c] sm:$0xf]
  %v54 = vld [vmem:[%s0 + $0xa0] sm:$0xf]
  %v55 = vld [vmem:[%s0 + $0xa4] sm:$0xf]
  %v56 = vld [vmem:[%s0 + $0xa8] sm:$0xf]
  %v57 = vld [vmem:[%s0 + $0xac] sm:$0xf]
  %v58 = vld [vmem:[%s0 + $0xb0] sm:$0xf]
  %v59 = vld [vmem:[%s0 + $0xb4] sm:$0xf]
  %v60 = vld [vmem:[%s0 + $0xb8] sm:$0xf]
  %v61 = vld [vmem:[%s0 + $0xbc] sm:$0xf]
  %v62 = vld [vmem:[%s0 + $0xc0] sm:$0xf]
  %v63 = vld [vmem:[%s0 + $0xc4] sm:$0xf]
  %v64 = vld [vmem:[%s0 + $0xc8] sm:$0xf]
  %v65 = vld [vmem:[%s0 + $0xcc] sm:$0xf]
  %v66 = vld [vmem:[%s0 + $0xd0] sm:$0xf]
  %v67 = vld [vmem:[%s0 + $0xd4] sm:$0xf]
  %v68 = vld [vmem:[%s0 + $0xd8] sm:$0xf]
  %v69 = vld [vmem:[%s0 + $0xdc] sm:$0xf]
  %v70 = vld [vmem:[%s0 + $0xe0] sm:$0xf]
  %v71 = vld [vmem:[%s0 + $0xe4] sm:$0xf]
  %v72 = vld [vmem:[%s0 + $0xe8] sm:$0xf]
  %v73 = vld [vmem:[%s0 + $0xec] sm:$0xf]
  %v74 = vld [vmem:[%s0 + $0xf0] sm:$0xf]
  %v75 = vld [vmem:[%s0 + $0xf4] sm:$0xf]
  %v76 = vld [vmem:[%s0 + $0xf8] sm:$0xf]
  %v77 = vld [vmem:[%s0 + $0xfc] sm:$0xf]
  %v78 = vunpack.c.l.bf16 %v14
  %v79 = vunpack.c.l.bf16 %v15
  %v80 = vunpack.c.l.bf16 %v16
  %v81 = vunpack.c.l.bf16 %v17
  %v82 = vunpack.c.l.bf16 %v18
  %v83 = vunpack.c.l.bf16 %v19
  %v84 = vunpack.c.l.bf16 %v20
  %v85 = vunpack.c.l.bf16 %v21
  %v86 = vunpack.c.l.bf16 %v22
  %v87 = vunpack.c.l.bf16 %v23
  %v88 = vunpack.c.l.bf16 %v24
  %v89 = vunpack.c.l.bf16 %v25
  %v90 = vunpack.c.l.bf16 %v26
  %v91 = vunpack.c.l.bf16 %v27
  %v92 = vunpack.c.l.bf16 %v28
  %v93 = vunpack.c.l.bf16 %v29
  %v94 = vunpack.c.l.bf16 %v30
  %v95 = vunpack.c.l.bf16 %v31
  %v96 = vunpack.c.l.bf16 %v32
  %v97 = vunpack.c.l.bf16 %v33
  %v98 = vunpack.c.l.bf16 %v34
  %v99 = vunpack.c.l.bf16 %v35
  %v100 = vunpack.c.l.bf16 %v36
  %v101 = vunpack.c.l.bf16 %v37
  %v102 = vunpack.c.l.bf16 %v38
  %v103 = vunpack.c.l.bf16 %v39
  %v104 = vunpack.c.l.bf16 %v40
  %v105 = vunpack.c.l.bf16 %v41
  %v106 = vunpack.c.l.bf16 %v42
  %v107 = vunpack.c.l.bf16 %v43
  %v108 = vunpack.c.l.bf16 %v44
  %v109 = vunpack.c.l.bf16 %v45
  %v110 = vunpack.c.l.bf16 %v46
  %v111 = vunpack.c.l.bf16 %v47
  %v112 = vunpack.c.l.bf16 %v48
  %v113 = vunpack.c.l.bf16 %v49
  %v114 = vunpack.c.l.bf16 %v50
  %v115 = vunpack.c.l.bf16 %v51
  %v116 = vunpack.c.l.bf16 %v52
  %v117 = vunpack.c.l.bf16 %v53
  %v118 = vunpack.c.l.bf16 %v54
  %v119 = vunpack.c.l.bf16 %v55
  %v120 = vunpack.c.l.bf16 %v56
  %v121 = vunpack.c.l.bf16 %v57
  %v122 = vunpack.c.l.bf16 %v58
  %v123 = vunpack.c.l.bf16 %v59
  %v124 = vunpack.c.l.bf16 %v60
  %v125 = vunpack.c.l.bf16 %v61
  %v126 = vunpack.c.l.bf16 %v62
  %v127 = vunpack.c.l.bf16 %v63
  %v128 = vunpack.c.l.bf16 %v64
  %v129 = vunpack.c.l.bf16 %v65
  %v130 = vunpack.c.l.bf16 %v66
  %v131 = vunpack.c.l.bf16 %v67
  %v132 = vunpack.c.l.bf16 %v68
  %v133 = vunpack.c.l.bf16 %v69
  %v134 = vunpack.c.l.bf16 %v70
  %v135 = vunpack.c.l.bf16 %v71
  %v136 = vunpack.c.l.bf16 %v72
  %v137 = vunpack.c.l.bf16 %v73
  %v138 = vunpack.c.l.bf16 %v74
  %v139 = vunpack.c.l.bf16 %v75
  %v140 = vunpack.c.l.bf16 %v76
  %v141 = vunpack.c.l.bf16 %v77
  %v142 = vld [vmem:[%s1] sm:$0x1]
  %v144 = vperm.slane %v142, 0
  %v146 = vmul.f32 %v78, %v144
  %v147 = vmul.f32 %v79, %v144
  %v148 = vmul.f32 %v80, %v144
  %v149 = vmul.f32 %v81, %v144
  %v150 = vmul.f32 %v82, %v144
  %v151 = vmul.f32 %v83, %v144
  %v152 = vmul.f32 %v84, %v144
  %v153 = vmul.f32 %v85, %v144
  %v154 = vmul.f32 %v86, %v144
  %v155 = vmul.f32 %v87, %v144
  %v156 = vmul.f32 %v88, %v144
  %v157 = vmul.f32 %v89, %v144
  %v158 = vmul.f32 %v90, %v144
  %v159 = vmul.f32 %v91, %v144
  %v160 = vmul.f32 %v92, %v144
  %v161 = vmul.f32 %v93, %v144
  %v162 = vmul.f32 %v94, %v144
  %v163 = vmul.f32 %v95, %v144
  %v164 = vmul.f32 %v96, %v144
  %v165 = vmul.f32 %v97, %v144
  %v166 = vmul.f32 %v98, %v144
  %v167 = vmul.f32 %v99, %v144
  %v168 = vmul.f32 %v100, %v144
  %v169 = vmul.f32 %v101, %v144
  %v170 = vmul.f32 %v102, %v144
  %v171 = vmul.f32 %v103, %v144
  %v172 = vmul.f32 %v104, %v144
  %v173 = vmul.f32 %v105, %v144
  %v174 = vmul.f32 %v106, %v144
  %v175 = vmul.f32 %v107, %v144
  %v176 = vmul.f32 %v108, %v144
  %v177 = vmul.f32 %v109, %v144
  %v178 = vmul.f32 %v110, %v144
  %v179 = vmul.f32 %v111, %v144
  %v180 = vmul.f32 %v112, %v144
  %v181 = vmul.f32 %v113, %v144
  %v182 = vmul.f32 %v114, %v144
  %v183 = vmul.f32 %v115, %v144
  %v184 = vmul.f32 %v116, %v144
  %v185 = vmul.f32 %v117, %v144
  %v186 = vmul.f32 %v118, %v144
  %v187 = vmul.f32 %v119, %v144
  %v188 = vmul.f32 %v120, %v144
  %v189 = vmul.f32 %v121, %v144
  %v190 = vmul.f32 %v122, %v144
  %v191 = vmul.f32 %v123, %v144
  %v192 = vmul.f32 %v124, %v144
  %v193 = vmul.f32 %v125, %v144
  %v194 = vmul.f32 %v126, %v144
  %v195 = vmul.f32 %v127, %v144
  %v196 = vmul.f32 %v128, %v144
  %v197 = vmul.f32 %v129, %v144
  %v198 = vmul.f32 %v130, %v144
  %v199 = vmul.f32 %v131, %v144
  %v200 = vmul.f32 %v132, %v144
  %v201 = vmul.f32 %v133, %v144
  %v202 = vmul.f32 %v134, %v144
  %v203 = vmul.f32 %v135, %v144
  %v204 = vmul.f32 %v136, %v144
  %v205 = vmul.f32 %v137, %v144
  %v206 = vmul.f32 %v138, %v144
  %v207 = vmul.f32 %v139, %v144
  %v208 = vmul.f32 %v140, %v144
  %v209 = vmul.f32 %v141, %v144
  %v210 = vld [vmem:[%s2] sm:$0x1]
  %v212 = vperm.slane %v210, 0
  %v214 = vadd.f32 %v146, %v212
  %v215 = vadd.f32 %v147, %v212
  %v216 = vadd.f32 %v148, %v212
  %v217 = vadd.f32 %v149, %v212
  %v218 = vadd.f32 %v150, %v212
  %v219 = vadd.f32 %v151, %v212
  %v220 = vadd.f32 %v152, %v212
  %v221 = vadd.f32 %v153, %v212
  %v222 = vadd.f32 %v154, %v212
  %v223 = vadd.f32 %v155, %v212
  %v224 = vadd.f32 %v156, %v212
  %v225 = vadd.f32 %v157, %v212
  %v226 = vadd.f32 %v158, %v212
  %v227 = vadd.f32 %v159, %v212
  %v228 = vadd.f32 %v160, %v212
  %v229 = vadd.f32 %v161, %v212
  %v230 = vadd.f32 %v162, %v212
  %v231 = vadd.f32 %v163, %v212
  %v232 = vadd.f32 %v164, %v212
  %v233 = vadd.f32 %v165, %v212
  %v234 = vadd.f32 %v166, %v212
  %v235 = vadd.f32 %v167, %v212
  %v236 = vadd.f32 %v168, %v212
  %v237 = vadd.f32 %v169, %v212
  %v238 = vadd.f32 %v170, %v212
  %v239 = vadd.f32 %v171, %v212
  %v240 = vadd.f32 %v172, %v212
  %v241 = vadd.f32 %v173, %v212
  %v242 = vadd.f32 %v174, %v212
  %v243 = vadd.f32 %v175, %v212
  %v244 = vadd.f32 %v176, %v212
  %v245 = vadd.f32 %v177, %v212
  %v246 = vadd.f32 %v178, %v212
  %v247 = vadd.f32 %v179, %v212
  %v248 = vadd.f32 %v180, %v212
  %v249 = vadd.f32 %v181, %v212
  %v250 = vadd.f32 %v182, %v212
  %v251 = vadd.f32 %v183, %v212
  %v252 = vadd.f32 %v184, %v212
  %v253 = vadd.f32 %v185, %v212
  %v254 = vadd.f32 %v186, %v212
  %v255 = vadd.f32 %v187, %v212
  %v256 = vadd.f32 %v188, %v212
  %v257 = vadd.f32 %v189, %v212
  %v258 = vadd.f32 %v190, %v212
  %v259 = vadd.f32 %v191, %v212
  %v260 = vadd.f32 %v192, %v212
  %v261 = vadd.f32 %v193, %v212
  %v262 = vadd.f32 %v194, %v212
  %v263 = vadd.f32 %v195, %v212
  %v264 = vadd.f32 %v196, %v212
  %v265 = vadd.f32 %v197, %v212
  %v266 = vadd.f32 %v198, %v212
  %v267 = vadd.f32 %v199, %v212
  %v268 = vadd.f32 %v200, %v212
  %v269 = vadd.f32 %v201, %v212
  %v270 = vadd.f32 %v202, %v212
  %v271 = vadd.f32 %v203, %v212
  %v272 = vadd.f32 %v204, %v212
  %v273 = vadd.f32 %v205, %v212
  %v274 = vadd.f32 %v206, %v212
  %v275 = vadd.f32 %v207, %v212
  %v276 = vadd.f32 %v208, %v212
  %v277 = vadd.f32 %v209, %v212
  %vm278 = vcmp.ge.f32.partialorder %v214, 0.0
  %vm279 = vcmp.ge.f32.partialorder %v215, 0.0
  %vm280 = vcmp.ge.f32.partialorder %v216, 0.0
  %vm281 = vcmp.ge.f32.partialorder %v217, 0.0
  %vm282 = vcmp.ge.f32.partialorder %v218, 0.0
  %vm283 = vcmp.ge.f32.partialorder %v219, 0.0
  %vm284 = vcmp.ge.f32.partialorder %v220, 0.0
  %vm285 = vcmp.ge.f32.partialorder %v221, 0.0
  %vm286 = vcmp.ge.f32.partialorder %v222, 0.0
  %vm287 = vcmp.ge.f32.partialorder %v223, 0.0
  %vm288 = vcmp.ge.f32.partialorder %v224, 0.0
  %vm289 = vcmp.ge.f32.partialorder %v225, 0.0
  %vm290 = vcmp.ge.f32.partialorder %v226, 0.0
  %vm291 = vcmp.ge.f32.partialorder %v227, 0.0
  %vm292 = vcmp.ge.f32.partialorder %v228, 0.0
  %vm293 = vcmp.ge.f32.partialorder %v229, 0.0
  %vm294 = vcmp.ge.f32.partialorder %v230, 0.0
  %vm295 = vcmp.ge.f32.partialorder %v231, 0.0
  %vm296 = vcmp.ge.f32.partialorder %v232, 0.0
  %vm297 = vcmp.ge.f32.partialorder %v233, 0.0
  %vm298 = vcmp.ge.f32.partialorder %v234, 0.0
  %vm299 = vcmp.ge.f32.partialorder %v235, 0.0
  %vm300 = vcmp.ge.f32.partialorder %v236, 0.0
  %vm301 = vcmp.ge.f32.partialorder %v237, 0.0
  %vm302 = vcmp.ge.f32.partialorder %v238, 0.0
  %vm303 = vcmp.ge.f32.partialorder %v239, 0.0
  %vm304 = vcmp.ge.f32.partialorder %v240, 0.0
  %vm305 = vcmp.ge.f32.partialorder %v241, 0.0
  %vm306 = vcmp.ge.f32.partialorder %v242, 0.0
  %vm307 = vcmp.ge.f32.partialorder %v243, 0.0
  %vm308 = vcmp.ge.f32.partialorder %v244, 0.0
  %vm309 = vcmp.ge.f32.partialorder %v245, 0.0
  %vm310 = vcmp.ge.f32.partialorder %v246, 0.0
  %vm311 = vcmp.ge.f32.partialorder %v247, 0.0
  %vm312 = vcmp.ge.f32.partialorder %v248, 0.0
  %vm313 = vcmp.ge.f32.partialorder %v249, 0.0
  %vm314 = vcmp.ge.f32.partialorder %v250, 0.0
  %vm315 = vcmp.ge.f32.partialorder %v251, 0.0
  %vm316 = vcmp.ge.f32.partialorder %v252, 0.0
  %vm317 = vcmp.ge.f32.partialorder %v253, 0.0
  %vm318 = vcmp.ge.f32.partialorder %v254, 0.0
  %vm319 = vcmp.ge.f32.partialorder %v255, 0.0
  %vm320 = vcmp.ge.f32.partialorder %v256, 0.0
  %vm321 = vcmp.ge.f32.partialorder %v257, 0.0
  %vm322 = vcmp.ge.f32.partialorder %v258, 0.0
  %vm323 = vcmp.ge.f32.partialorder %v259, 0.0
  %vm324 = vcmp.ge.f32.partialorder %v260, 0.0
  %vm325 = vcmp.ge.f32.partialorder %v261, 0.0
  %vm326 = vcmp.ge.f32.partialorder %v262, 0.0
  %vm327 = vcmp.ge.f32.partialorder %v263, 0.0
  %vm328 = vcmp.ge.f32.partialorder %v264, 0.0
  %vm329 = vcmp.ge.f32.partialorder %v265, 0.0
  %vm330 = vcmp.ge.f32.partialorder %v266, 0.0
  %vm331 = vcmp.ge.f32.partialorder %v267, 0.0
  %vm332 = vcmp.ge.f32.partialorder %v268, 0.0
  %vm333 = vcmp.ge.f32.partialorder %v269, 0.0
  %vm334 = vcmp.ge.f32.partialorder %v270, 0.0
  %vm335 = vcmp.ge.f32.partialorder %v271, 0.0
  %vm336 = vcmp.ge.f32.partialorder %v272, 0.0
  %vm337 = vcmp.ge.f32.partialorder %v273, 0.0
  %vm338 = vcmp.ge.f32.partialorder %v274, 0.0
  %vm339 = vcmp.ge.f32.partialorder %v275, 0.0
  %vm340 = vcmp.ge.f32.partialorder %v276, 0.0
  %vm341 = vcmp.ge.f32.partialorder %v277, 0.0
  %v342 = vmul.f32 %v214, 0.1
  %v343 = vmul.f32 %v215, 0.1
  %v344 = vmul.f32 %v216, 0.1
  %v345 = vmul.f32 %v217, 0.1
  %v346 = vmul.f32 %v218, 0.1
  %v347 = vmul.f32 %v219, 0.1
  %v348 = vmul.f32 %v220, 0.1
  %v349 = vmul.f32 %v221, 0.1
  %v350 = vmul.f32 %v222, 0.1
  %v351 = vmul.f32 %v223, 0.1
  %v352 = vmul.f32 %v224, 0.1
  %v353 = vmul.f32 %v225, 0.1
  %v354 = vmul.f32 %v226, 0.1
  %v355 = vmul.f32 %v227, 0.1
  %v356 = vmul.f32 %v228, 0.1
  %v357 = vmul.f32 %v229, 0.1
  %v358 = vmul.f32 %v230, 0.1
  %v359 = vmul.f32 %v231, 0.1
  %v360 = vmul.f32 %v232, 0.1
  %v361 = vmul.f32 %v233, 0.1
  %v362 = vmul.f32 %v234, 0.1
  %v363 = vmul.f32 %v235, 0.1
  %v364 = vmul.f32 %v236, 0.1
  %v365 = vmul.f32 %v237, 0.1
  %v366 = vmul.f32 %v238, 0.1
  %v367 = vmul.f32 %v239, 0.1
  %v368 = vmul.f32 %v240, 0.1
  %v369 = vmul.f32 %v241, 0.1
  %v370 = vmul.f32 %v242, 0.1
  %v371 = vmul.f32 %v243, 0.1
  %v372 = vmul.f32 %v244, 0.1
  %v373 = vmul.f32 %v245, 0.1
  %v374 = vmul.f32 %v246, 0.1
  %v375 = vmul.f32 %v247, 0.1
  %v376 = vmul.f32 %v248, 0.1
  %v377 = vmul.f32 %v249, 0.1
  %v378 = vmul.f32 %v250, 0.1
  %v379 = vmul.f32 %v251, 0.1
  %v380 = vmul.f32 %v252, 0.1
  %v381 = vmul.f32 %v253, 0.1
  %v382 = vmul.f32 %v254, 0.1
  %v383 = vmul.f32 %v255, 0.1
  %v384 = vmul.f32 %v256, 0.1
  %v385 = vmul.f32 %v257, 0.1
  %v386 = vmul.f32 %v258, 0.1
  %v387 = vmul.f32 %v259, 0.1
  %v388 = vmul.f32 %v260, 0.1
  %v389 = vmul.f32 %v261, 0.1
  %v390 = vmul.f32 %v262, 0.1
  %v391 = vmul.f32 %v263, 0.1
  %v392 = vmul.f32 %v264, 0.1
  %v393 = vmul.f32 %v265, 0.1
  %v394 = vmul.f32 %v266, 0.1
  %v395 = vmul.f32 %v267, 0.1
  %v396 = vmul.f32 %v268, 0.1
  %v397 = vmul.f32 %v269, 0.1
  %v398 = vmul.f32 %v270, 0.1
  %v399 = vmul.f32 %v271, 0.1
  %v400 = vmul.f32 %v272, 0.1
  %v401 = vmul.f32 %v273, 0.1
  %v402 = vmul.f32 %v274, 0.1
  %v403 = vmul.f32 %v275, 0.1
  %v404 = vmul.f32 %v276, 0.1
  %v405 = vmul.f32 %v277, 0.1
  %v406 = vsel %vm278, %v214, %v342
  %v407 = vsel %vm279, %v215, %v343
  %v408 = vsel %vm280, %v216, %v344
  %v409 = vsel %vm281, %v217, %v345
  %v410 = vsel %vm282, %v218, %v346
  %v411 = vsel %vm283, %v219, %v347
  %v412 = vsel %vm284, %v220, %v348
  %v413 = vsel %vm285, %v221, %v349
  %v414 = vsel %vm286, %v222, %v350
  %v415 = vsel %vm287, %v223, %v351
  %v416 = vsel %vm288, %v224, %v352
  %v417 = vsel %vm289, %v225, %v353
  %v418 = vsel %vm290, %v226, %v354
  %v419 = vsel %vm291, %v227, %v355
  %v420 = vsel %vm292, %v228, %v356
  %v421 = vsel %vm293, %v229, %v357
  %v422 = vsel %vm294, %v230, %v358
  %v423 = vsel %vm295, %v231, %v359
  %v424 = vsel %vm296, %v232, %v360
  %v425 = vsel %vm297, %v233, %v361
  %v426 = vsel %vm298, %v234, %v362
  %v427 = vsel %vm299, %v235, %v363
  %v428 = vsel %vm300, %v236, %v364
  %v429 = vsel %vm301, %v237, %v365
  %v430 = vsel %vm302, %v238, %v366
  %v431 = vsel %vm303, %v239, %v367
  %v432 = vsel %vm304, %v240, %v368
  %v433 = vsel %vm305, %v241, %v369
  %v434 = vsel %vm306, %v242, %v370
  %v435 = vsel %vm307, %v243, %v371
  %v436 = vsel %vm308, %v244, %v372
  %v437 = vsel %vm309, %v245, %v373
  %v438 = vsel %vm310, %v246, %v374
  %v439 = vsel %vm311, %v247, %v375
  %v440 = vsel %vm312, %v248, %v376
  %v441 = vsel %vm313, %v249, %v377
  %v442 = vsel %vm314, %v250, %v378
  %v443 = vsel %vm315, %v251, %v379
  %v444 = vsel %vm316, %v252, %v380
  %v445 = vsel %vm317, %v253, %v381
  %v446 = vsel %vm318, %v254, %v382
  %v447 = vsel %vm319, %v255, %v383
  %v448 = vsel %vm320, %v256, %v384
  %v449 = vsel %vm321, %v257, %v385
  %v450 = vsel %vm322, %v258, %v386
  %v451 = vsel %vm323, %v259, %v387
  %v452 = vsel %vm324, %v260, %v388
  %v453 = vsel %vm325, %v261, %v389
  %v454 = vsel %vm326, %v262, %v390
  %v455 = vsel %vm327, %v263, %v391
  %v456 = vsel %vm328, %v264, %v392
  %v457 = vsel %vm329, %v265, %v393
  %v458 = vsel %vm330, %v266, %v394
  %v459 = vsel %vm331, %v267, %v395
  %v460 = vsel %vm332, %v268, %v396
  %v461 = vsel %vm333, %v269, %v397
  %v462 = vsel %vm334, %v270, %v398
  %v463 = vsel %vm335, %v271, %v399
  %v464 = vsel %vm336, %v272, %v400
  %v465 = vsel %vm337, %v273, %v401
  %v466 = vsel %vm338, %v274, %v402
  %v467 = vsel %vm339, %v275, %v403
  %v468 = vsel %vm340, %v276, %v404
  %v469 = vsel %vm341, %v277, %v405
  %470 = vst [vmem:[%s3] sm:$0xff] %v406
  %471 = vst [vmem:[%s3 + $0x8] sm:$0xff] %v407
  %472 = vst [vmem:[%s3 + $0x10] sm:$0xff] %v408
  %473 = vst [vmem:[%s3 + $0x18] sm:$0xff] %v409
  %474 = vst [vmem:[%s3 + $0x20] sm:$0xff] %v410
  %475 = vst [vmem:[%s3 + $0x28] sm:$0xff] %v411
  %476 = vst [vmem:[%s3 + $0x30] sm:$0xff] %v412
  %477 = vst [vmem:[%s3 + $0x38] sm:$0xff] %v413
  %478 = vst [vmem:[%s3 + $0x40] sm:$0xff] %v414
  %479 = vst [vmem:[%s3 + $0x48] sm:$0xff] %v415
  %480 = vst [vmem:[%s3 + $0x50] sm:$0xff] %v416
  %481 = vst [vmem:[%s3 + $0x58] sm:$0xff] %v417
  %482 = vst [vmem:[%s3 + $0x60] sm:$0xff] %v418
  %483 = vst [vmem:[%s3 + $0x68] sm:$0xff] %v419
  %484 = vst [vmem:[%s3 + $0x70] sm:$0xff] %v420
  %485 = vst [vmem:[%s3 + $0x78] sm:$0xff] %v421
  %486 = vst [vmem:[%s3 + $0x80] sm:$0xff] %v422
  %487 = vst [vmem:[%s3 + $0x88] sm:$0xff] %v423
  %488 = vst [vmem:[%s3 + $0x90] sm:$0xff] %v424
  %489 = vst [vmem:[%s3 + $0x98] sm:$0xff] %v425
  %490 = vst [vmem:[%s3 + $0xa0] sm:$0xff] %v426
  %491 = vst [vmem:[%s3 + $0xa8] sm:$0xff] %v427
  %492 = vst [vmem:[%s3 + $0xb0] sm:$0xff] %v428
  %493 = vst [vmem:[%s3 + $0xb8] sm:$0xff] %v429
  %494 = vst [vmem:[%s3 + $0xc0] sm:$0xff] %v430
  %495 = vst [vmem:[%s3 + $0xc8] sm:$0xff] %v431
  %496 = vst [vmem:[%s3 + $0xd0] sm:$0xff] %v432
  %497 = vst [vmem:[%s3 + $0xd8] sm:$0xff] %v433
  %498 = vst [vmem:[%s3 + $0xe0] sm:$0xff] %v434
  %499 = vst [vmem:[%s3 + $0xe8] sm:$0xff] %v435
  %500 = vst [vmem:[%s3 + $0xf0] sm:$0xff] %v436
  %501 = vst [vmem:[%s3 + $0xf8] sm:$0xff] %v437
  %502 = vst [vmem:[%s3 + $0x100] sm:$0xff] %v438
  %503 = vst [vmem:[%s3 + $0x108] sm:$0xff] %v439
  %504 = vst [vmem:[%s3 + $0x110] sm:$0xff] %v440
  %505 = vst [vmem:[%s3 + $0x118] sm:$0xff] %v441
  %506 = vst [vmem:[%s3 + $0x120] sm:$0xff] %v442
  %507 = vst [vmem:[%s3 + $0x128] sm:$0xff] %v443
  %508 = vst [vmem:[%s3 + $0x130] sm:$0xff] %v444
  %509 = vst [vmem:[%s3 + $0x138] sm:$0xff] %v445
  %510 = vst [vmem:[%s3 + $0x140] sm:$0xff] %v446
  %511 = vst [vmem:[%s3 + $0x148] sm:$0xff] %v447
  %512 = vst [vmem:[%s3 + $0x150] sm:$0xff] %v448
  %513 = vst [vmem:[%s3 + $0x158] sm:$0xff] %v449
  %514 = vst [vmem:[%s3 + $0x160] sm:$0xff] %v450
  %515 = vst [vmem:[%s3 + $0x168] sm:$0xff] %v451
  %516 = vst [vmem:[%s3 + $0x170] sm:$0xff] %v452
  %517 = vst [vmem:[%s3 + $0x178] sm:$0xff] %v453
  %518 = vst [vmem:[%s3 + $0x180] sm:$0xff] %v454
  %519 = vst [vmem:[%s3 + $0x188] sm:$0xff] %v455
  %520 = vst [vmem:[%s3 + $0x190] sm:$0xff] %v456
  %521 = vst [vmem:[%s3 + $0x198] sm:$0xff] %v457
  %522 = vst [vmem:[%s3 + $0x1a0] sm:$0xff] %v458
  %523 = vst [vmem:[%s3 + $0x1a8] sm:$0xff] %v459
  %524 = vst [vmem:[%s3 + $0x1b0] sm:$0xff] %v460
  %525 = vst [vmem:[%s3 + $0x1b8] sm:$0xff] %v461
  %526 = vst [vmem:[%s3 + $0x1c0] sm:$0xff] %v462
  %527 = vst [vmem:[%s3 + $0x1c8] sm:$0xff] %v463
  %528 = vst [vmem:[%s3 + $0x1d0] sm:$0xff] %v464
  %529 = vst [vmem:[%s3 + $0x1d8] sm:$0xff] %v465
  %530 = vst [vmem:[%s3 + $0x1e0] sm:$0xff] %v466
  %531 = vst [vmem:[%s3 + $0x1e8] sm:$0xff] %v467
  %532 = vst [vmem:[%s3 + $0x1f0] sm:$0xff] %v468
  %533 = vst [vmem:[%s3 + $0x1f8] sm:$0xff] %v469
  // Predicated region
  $region14: #{block_forward.3} parent=0 // pred_check
    _
  $region15: #{block_forward.3} parent=0 // pred_check_branch
    %535 = sbr.rel (0) target = $region17
  $region16: #{block_forward.3} parent=0 // pred_region
    _
  $region17: #{block_forward.3} parent=0 // pred_fallthru
    _
  // Predicated region
  $region18: #{block_forward.3} parent=0 // pred_check
    _
  $region19: #{block_forward.3} parent=0 // pred_check_branch
    %537 = sbr.rel (0) target = $region21
  $region20: #{block_forward.3} parent=0 // pred_region
    _
  $region21: #{block_forward.3} parent=0 // pred_fallthru
    _

// kernel: block_forward.2
$region0: #{block_forward.2}
  #allocation0 [shape = 'u32[]', space=smem, size = 0x4, offset = 0x4, fixed_abs, tag = 'smem constant byte address 0x4 - core index']
  #allocation1 [shape = 'u32[72,128]{1,0:T(1,128)}', space=vmem, size = 0x9000, scoped, tag = 'internal scratch']
  %s0 = inlined_call_operand.vmem [shape: bf16[18,32,12], index: 0, kind: input, shape index: {}, may-alias: {0,1,2}]
  %s1 = inlined_call_operand.vmem [shape: bf16[18,32,12], index: 1, kind: input, shape index: {}, may-alias: {0,1,2}]
  %s2 = inlined_call_operand.vmem [shape: bf16[18,32,12], index: 2, kind: input, shape index: {}, may-alias: {0,1,2}]
  %s3 = inlined_call_operand.vmem [shape: bf16[3,12,128], index: 3, kind: input, shape index: {}]
  %s4 = inlined_call_operand.vmem [shape: bf16[16,32,128], index: 4, kind: output, shape index: {0}]
  %s5 = inlined_call_operand.vmem [shape: f32[1,1,128], index: 5, kind: output, shape index: {1}]
  %s6 = inlined_call_operand.vmem [shape: f32[1,1,128], index: 6, kind: output, shape index: {2}]
  %7 = xla_tuple %s4, %s5, %s6
  %s8 = sld [smem:[#allocation0]]
  $region42: #{block_forward.2} parent=0
    _
  %s10 = ssub.s32 1, %s8
  %s11 = scalar_select 0, %s10, %s8
  // Predicated region
  $region2: #{block_forward.2} parent=0 // pred_check
    _
  $region3: #{block_forward.2} parent=0 // pred_check_branch
    %13 = sbr.rel (0) target = $region5
  $region4: #{block_forward.2} parent=0 // pred_region
    _
  $region5: #{block_forward.2} parent=0 // pred_fallthru
    _
  // Predicated region
  $region6: #{block_forward.2} parent=0 // pred_check
    _
  $region7: #{block_forward.2} parent=0 // pred_check_branch
    %15 = sbr.rel (0) target = $region9
  $region8: #{block_forward.2} parent=0 // pred_region
    %s16 = smul.u32 0, 16
    %s17 = sadd.s32 %s16, 16
    %p18 = scmp.lt.s32.totalorder %s17, 17
    %s19 = scalar_select %p18, %s17, 17
    %s20 = smul.addr %s19, 4
    %s21 = smul.addr %s20, 4
    %s22 = scalar_lea.vmem %s1, %s21
    %s23 = smul.u32 0, 16
    %s24 = sadd.s32 %s23, 16
  $region9: #{block_forward.2} parent=0 // pred_fallthru
    _
  // Predicated region
  $region10: #{block_forward.2} parent=0 // pred_check
    _
  $region11: #{block_forward.2} parent=0 // pred_check_branch
    %26 = sbr.rel (0) target = $region13
  $region12: #{block_forward.2} parent=0 // pred_region
    %s27 = smul.u32 0, 16
    %s28 = sadd.s32 %s27, 17
    %p29 = scmp.lt.s32.totalorder %s28, 17
    %s30 = scalar_select %p29, %s28, 17
    %s31 = smul.addr %s30, 4
    %s32 = smul.addr %s31, 4
    %s33 = scalar_lea.vmem %s2, %s32
    %s34 = smul.u32 0, 16
    %s35 = sadd.s32 %s34, 17
  $region13: #{block_forward.2} parent=0 // pred_fallthru
    _
  // Predicated region
  $region14: #{block_forward.2} parent=0 // pred_check
    _
  $region15: #{block_forward.2} parent=0 // pred_check_branch
    %37 = sbr.rel (0) target = $region17
  $region16: #{block_forward.2} parent=0 // pred_region
    _
  $region17: #{block_forward.2} parent=0 // pred_fallthru
    _
  %s38 = smul.u32 0, 16
  %s39 = sadd.s32 %s38, 16
  %p40 = scmp.lt.s32.totalorder %s39, 17
  %s41 = scalar_select %p40, %s39, 17
  %s42 = smul.addr %s41, 4
  %s43 = smul.addr %s42, 4
  %s44 = scalar_lea.vmem %s1, %s43
  %s45 = smul.u32 0, 16
  %s46 = sadd.s32 %s45, 17
  %p47 = scmp.lt.s32.totalorder %s46, 17
  %s48 = scalar_select %p47, %s46, 17
  %s49 = smul.addr %s48, 4
  %s50 = smul.addr %s49, 4
  %s51 = scalar_lea.vmem %s2, %s50
  %s52 = smul.u32 0, 16
  %s53 = sadd.s32 %s52, 16
  %p54 = scmp.lt.s32.totalorder %s53, 17
  %s55 = scalar_select %p54, %s53, 17
  %s56 = smul.addr %s55, 4
  %s57 = smul.addr %s56, 4
  %s58 = scalar_lea.vmem %s1, %s57
  %s59 = smul.u32 0, 16
  %s60 = sadd.s32 %s59, 16
  %s61 = smul.u32 0, 16
  %s62 = sadd.s32 %s61, 17
  %p63 = scmp.lt.s32.totalorder %s62, 17
  %s64 = scalar_select %p63, %s62, 17
  %s65 = smul.addr %s64, 4
  %s66 = smul.addr %s65, 4
  %s67 = scalar_lea.vmem %s2, %s66
  %s68 = smul.u32 0, 16
  %s69 = sadd.s32 %s68, 17
  %v71 = vld [vmem:[%s3] sm:$0xf]
  %v72 = vld [vmem:[%s3 + $0x4] sm:$0x3]
  %s73 = scalar_lea.vmem %s3, 8
  %v74 = vld [vmem:[%s73] sm:$0xf]
  %v75 = vld [vmem:[%s73 + $0x4] sm:$0x3]
  %s76 = scalar_lea.vmem %s3, 16
  %v77 = vld [vmem:[%s76] sm:$0xf]
  %v78 = vld [vmem:[%s76 + $0x4] sm:$0x3]
  %v79 = vld [vmem:[%s0] sm:$0xf]
  %v80 = vld [vmem:[%s0 + $0x4] sm:$0xf]
  %v81 = vld [vmem:[%s0 + $0x8] sm:$0xf]
  %v82 = vld [vmem:[%s0 + $0xc] sm:$0xf]
  %s83 = scalar_lea.vmem %s0, 16
  %v84 = vld [vmem:[%s83] sm:$0xf]
  %v85 = vld [vmem:[%s83 + $0x4] sm:$0xf]
  %v86 = vld [vmem:[%s83 + $0x8] sm:$0xf]
  %v87 = vld [vmem:[%s83 + $0xc] sm:$0xf]
  %v92 = vunpack.c.l.b16 %v84
  %v93 = vunpack.c.l.b16 %v85
  %v94 = vunpack.c.l.b16 %v86
  %v95 = vunpack.c.l.b16 %v87
  %v96 = vpack.c.b16 %v93, %v92
  %v97 = vpack.c.b16 %v95, %v94
  %v100 = vunpack.c.l.b16 %v74
  %v101 = vunpack.c.l.b16 %v75
  %v102 = vpack.c.b16 %v101, %v100
  %vm103 = vcmask 97280
  %v105 = vsel %vm103, %v96, 0
  %v108 = vsel %vm103, %v97, 0
  %vm110 = vcmask 1045504
  %v112 = vsel %vm110, %v102, 0
  %114 = vmatpush.bf16.msra.mxu0 0
  %115 = vmatpush.bf16.msra.mxu0 0
  %116 = vmatpush.bf16.msra.mxu0 0
  %117 = vmatpush.bf16.msra.mxu0 0
  %118 = vmatpush.bf16.msra.mxu0 0
  %119 = vmatpush.bf16.msra.mxu0 0
  %120 = vmatpush.bf16.msra.mxu0 0
  %121 = vmatpush.bf16.msra.mxu0 %v112
  %122 = vmatmul.bf16.gmra.mxu0 %v105
  %v123 = vpop.f32.mrf.mxu0
  %v124 = vadd.f32 0.0, %v123
  %v125 = vpop.f32.mrf.mxu0
  %v126 = vadd.f32 0.0, %v125
  %127 = vmatmul.bf16.gmra.mxu0 %v108
  %v128 = vpop.f32.mrf.mxu0
  %v129 = vadd.f32 0.0, %v128
  %v130 = vpop.f32.mrf.mxu0
  %v131 = vadd.f32 0.0, %v130
  %132 = vdwg.mxu0
  %v137 = vunpack.c.l.b16 %v79
  %v138 = vunpack.c.l.b16 %v80
  %v139 = vunpack.c.l.b16 %v81
  %v140 = vunpack.c.l.b16 %v82
  %v141 = vpack.c.b16 %v138, %v137
  %v142 = vpack.c.b16 %v140, %v139
  %v145 = vunpack.c.l.b16 %v71
  %v146 = vunpack.c.l.b16 %v72
  %v147 = vpack.c.b16 %v146, %v145
  %v149 = vsel %vm103, %v141, 0
  %v152 = vsel %vm103, %v142, 0
  %v155 = vsel %vm110, %v147, 0
  %157 = vmatpush.bf16.msra.mxu0 0
  %158 = vmatpush.bf16.msra.mxu0 0
  %159 = vmatpush.bf16.msra.mxu0 0
  %160 = vmatpush.bf16.msra.mxu0 0
  %161 = vmatpush.bf16.msra.mxu0 0
  %162 = vmatpush.bf16.msra.mxu0 0
  %163 = vmatpush.bf16.msra.mxu0 0
  %164 = vmatpush.bf16.msra.mxu0 %v155
  %165 = vmatmul.bf16.gmra.mxu0 %v149
  %v166 = vpop.f32.mrf.mxu0
  %v167 = vadd.f32 %v124, %v166
  %v168 = vpop.f32.mrf.mxu0
  %v169 = vadd.f32 %v126, %v168
  %170 = vmatmul.bf16.gmra.mxu0 %v152
  %v171 = vpop.f32.mrf.mxu0
  %v172 = vadd.f32 %v129, %v171
  %v173 = vpop.f32.mrf.mxu0
  %v174 = vadd.f32 %v131, %v173
  %175 = vdwg.mxu0
  %s176 = scalar_lea.vmem %s0, 32
  %v177 = vld [vmem:[%s176] sm:$0xf]
  %v178 = vld [vmem:[%s176 + $0x4] sm:$0xf]
  %v179 = vld [vmem:[%s176 + $0x8] sm:$0xf]
  %v180 = vld [vmem:[%s176 + $0xc] sm:$0xf]
  %v185 = vunpack.c.l.b16 %v177
  %v186 = vunpack.c.l.b16 %v178
  %v187 = vunpack.c.l.b16 %v179
  %v188 = vunpack.c.l.b16 %v180
  %v189 = vpack.c.b16 %v186, %v185
  %v190 = vpack.c.b16 %v188, %v187
  %v193 = vunpack.c.l.b16 %v77
  %v194 = vunpack.c.l.b16 %v78
  %v195 = vpack.c.b16 %v194, %v193
  %v197 = vsel %vm103, %v189, 0
  %v200 = vsel %vm103, %v190, 0
  %v203 = vsel %vm110, %v195, 0
  %205 = vmatpush.bf16.msra.mxu0 0
  %206 = vmatpush.bf16.msra.mxu0 0
  %207 = vmatpush.bf16.msra.mxu0 0
  %208 = vmatpush.bf16.msra.mxu0 0
  %209 = vmatpush.bf16.msra.mxu0 0
  %210 = vmatpush.bf16.msra.mxu0 0
  %211 = vmatpush.bf16.msra.mxu0 0
  %212 = vmatpush.bf16.msra.mxu0 %v203
  %213 = vmatmul.bf16.gmra.mxu0 %v197
  %v214 = vpop.f32.mrf.mxu0
  %v215 = vadd.f32 0.0, %v214
  %v216 = vpop.f32.mrf.mxu0
  %v217 = vadd.f32 0.0, %v216
  %218 = vmatmul.bf16.gmra.mxu0 %v200
  %v219 = vpop.f32.mrf.mxu0
  %v220 = vadd.f32 0.0, %v219
  %v221 = vpop.f32.mrf.mxu0
  %v222 = vadd.f32 0.0, %v221
  %223 = vdwg.mxu0
  %v224 = vadd.f32 %v167, %v215
  %v225 = vadd.f32 %v169, %v217
  %v226 = vadd.f32 %v172, %v220
  %v227 = vadd.f32 %v174, %v222
  %v228 = vpack.c.bf16 %v224, %v224
  %v229 = vpack.c.bf16 %v225, %v225
  %v230 = vpack.c.bf16 %v226, %v226
  %v231 = vpack.c.bf16 %v227, %v227
  %232 = vst [vmem:[%s4] sm:$0xf] %v228
  %233 = vst [vmem:[%s4 + $0x4] sm:$0xf] %v229
  %234 = vst [vmem:[%s4 + $0x8] sm:$0xf] %v230
  %235 = vst [vmem:[%s4 + $0xc] sm:$0xf] %v231
  %v236 = vadd.f32 %v224, %v225
  %v237 = vadd.f32 %v236, %v226
  %v238 = vadd.f32 %v237, %v227
  %v239 = vrot.slane %v238, 4
  %v240 = vadd.f32 %v238, %v239
  %v241 = vrot.slane %v240, 2
  %v242 = vadd.f32 %v240, %v241
  %v243 = vrot.slane %v242, 1
  %v244 = vadd.f32 %v242, %v243
  %v245 = vadd.f32 %v244, 0.0
  %v246 = vmul.f32 %v224, %v224
  %v247 = vmul.f32 %v225, %v225
  %v248 = vmul.f32 %v226, %v226
  %v249 = vmul.f32 %v227, %v227
  %v250 = vadd.f32 %v246, %v247
  %v251 = vadd.f32 %v250, %v248
  %v252 = vadd.f32 %v251, %v249
  %v253 = vrot.slane %v252, 4
  %v254 = vadd.f32 %v252, %v253
  %v255 = vrot.slane %v254, 2
  %v256 = vadd.f32 %v254, %v255
  %v257 = vrot.slane %v256, 1
  %v258 = vadd.f32 %v256, %v257
  %v259 = vadd.f32 %v258, 0.0
  %v260 = vld [vmem:[%s83] sm:$0xf]
  %v261 = vld [vmem:[%s83 + $0x4] sm:$0xf]
  %v262 = vld [vmem:[%s83 + $0x8] sm:$0xf]
  %v263 = vld [vmem:[%s83 + $0xc] sm:$0xf]
  %v264 = vld [vmem:[%s176] sm:$0xf]
  %v265 = vld [vmem:[%s176 + $0x4] sm:$0xf]
  %v266 = vld [vmem:[%s176 + $0x8] sm:$0xf]
  %v267 = vld [vmem:[%s176 + $0xc] sm:$0xf]
  %v272 = vunpack.c.l.b16 %v264
  %v273 = vunpack.c.l.b16 %v265
  %v274 = vunpack.c.l.b16 %v266
  %v275 = vunpack.c.l.b16 %v267
  %v276 = vpack.c.b16 %v273, %v272
  %v277 = vpack.c.b16 %v275, %v274
  %v279 = vsel %vm103, %v276, 0
  %v282 = vsel %vm103, %v277, 0
  %284 = vmatpush.bf16.msra.mxu0 0
  %285 = vmatpush.bf16.msra.mxu0 0
  %286 = vmatpush.bf16.msra.mxu0 0
  %287 = vmatpush.bf16.msra.mxu0 0
  %288 = vmatpush.bf16.msra.mxu0 0
  %289 = vmatpush.bf16.msra.mxu0 0
  %290 = vmatpush.bf16.msra.mxu0 0
  %291 = vmatpush.bf16.msra.mxu0 %v112
  %292 = vmatmul.bf16.gmra.mxu0 %v279
  %v293 = vpop.f32.mrf.mxu0
  %v294 = vadd.f32 0.0, %v293
  %v295 = vpop.f32.mrf.mxu0
  %v296 = vadd.f32 0.0, %v295
  %297 = vmatmul.bf16.gmra.mxu0 %v282
  %v298 = vpop.f32.mrf.mxu0
  %v299 = vadd.f32 0.0, %v298
  %v300 = vpop.f32.mrf.mxu0
  %v301 = vadd.f32 0.0, %v300
  %302 = vdwg.mxu0
  %v307 = vunpack.c.l.b16 %v260
  %v308 = vunpack.c.l.b16 %v261
  %v309 = vunpack.c.l.b16 %v262
  %v310 = vunpack.c.l.b16 %v263
  %v311 = vpack.c.b16 %v308, %v307
  %v312 = vpack.c.b16 %v310, %v309
  %v314 = vsel %vm103, %v311, 0
  %v317 = vsel %vm103, %v312, 0
  %319 = vmatpush.bf16.msra.mxu0 0
  %320 = vmatpush.bf16.msra.mxu0 0
  %321 = vmatpush.bf16.msra.mxu0 0
  %322 = vmatpush.bf16.msra.mxu0 0
  %323 = vmatpush.bf16.msra.mxu0 0
  %324 = vmatpush.bf16.msra.mxu0 0
  %325 = vmatpush.bf16.msra.mxu0 0
  %326 = vmatpush.bf16.msra.mxu0 %v155
  %327 = vmatmul.bf16.gmra.mxu0 %v314
  %v328 = vpop.f32.mrf.mxu0
  %v329 = vadd.f32 %v294, %v328
  %v330 = vpop.f32.mrf.mxu0
  %v331 = vadd.f32 %v296, %v330
  %332 = vmatmul.bf16.gmra.mxu0 %v317
  %v333 = vpop.f32.mrf.mxu0
  %v334 = vadd.f32 %v299, %v333
  %v335 = vpop.f32.mrf.mxu0
  %v336 = vadd.f32 %v301, %v335
  %337 = vdwg.mxu0
  %s338 = scalar_lea.vmem %s0, 48
  %v339 = vld [vmem:[%s338] sm:$0xf]
  %v340 = vld [vmem:[%s338 + $0x4] sm:$0xf]
  %v341 = vld [vmem:[%s338 + $0x8] sm:$0xf]
  %v342 = vld [vmem:[%s338 + $0xc] sm:$0xf]
  %v347 = vunpack.c.l.b16 %v339
  %v348 = vunpack.c.l.b16 %v340
  %v349 = vunpack.c.l.b16 %v341
  %v350 = vunpack.c.l.b16 %v342
  %v351 = vpack.c.b16 %v348, %v347
  %v352 = vpack.c.b16 %v350, %v349
  %v354 = vsel %vm103, %v351, 0
  %v357 = vsel %vm103, %v352, 0
  %359 = vmatpush.bf16.msra.mxu0 0
  %360 = vmatpush.bf16.msra.mxu0 0
  %361 = vmatpush.bf16.msra.mxu0 0
  %362 = vmatpush.bf16.msra.mxu0 0
  %363 = vmatpush.bf16.msra.mxu0 0
  %364 = vmatpush.bf16.msra.mxu0 0
  %365 = vmatpush.bf16.msra.mxu0 0
  %366 = vmatpush.bf16.msra.mxu0 %v203
  %367 = vmatmul.bf16.gmra.mxu0 %v354
  %v368 = vpop.f32.mrf.mxu0
  %v369 = vadd.f32 0.0, %v368
  %v370 = vpop.f32.mrf.mxu0
  %v371 = vadd.f32 0.0, %v370
  %372 = vmatmul.bf16.gmra.mxu0 %v357
  %v373 = vpop.f32.mrf.mxu0
  %v374 = vadd.f32 0.0, %v373
  %v375 = vpop.f32.mrf.mxu0
  %v376 = vadd.f32 0.0, %v375
  %377 = vdwg.mxu0
  %v378 = vadd.f32 %v329, %v369
  %v379 = vadd.f32 %v331, %v371
  %v380 = vadd.f32 %v334, %v374
  %v381 = vadd.f32 %v336, %v376
  %v382 = vpack.c.bf16 %v378, %v378
  %v383 = vpack.c.bf16 %v379, %v379
  %v384 = vpack.c.bf16 %v380, %v380
  %v385 = vpack.c.bf16 %v381, %v381
  %s386 = scalar_lea.vmem %s4, 16
  %387 = vst [vmem:[%s386] sm:$0xf] %v382
  %388 = vst [vmem:[%s386 + $0x4] sm:$0xf] %v383
  %389 = vst [vmem:[%s386 + $0x8] sm:$0xf] %v384
  %390 = vst [vmem:[%s386 + $0xc] sm:$0xf] %v385
  %v391 = vadd.f32 %v378, %v379
  %v392 = vadd.f32 %v391, %v380
  %v393 = vadd.f32 %v392, %v381
  %v394 = vrot.slane %v393, 4
  %v395 = vadd.f32 %v393, %v394
  %v396 = vrot.slane %v395, 2
  %v397 = vadd.f32 %v395, %v396
  %v398 = vrot.slane %v397, 1
  %v399 = vadd.f32 %v397, %v398
  %v400 = vadd.f32 %v245, %v399
  %v401 = vmul.f32 %v378, %v378
  %v402 = vmul.f32 %v379, %v379
  %v403 = vmul.f32 %v380, %v380
  %v404 = vmul.f32 %v381, %v381
  %v405 = vadd.f32 %v401, %v402
  %v406 = vadd.f32 %v405, %v403
  %v407 = vadd.f32 %v406, %v404
  %v408 = vrot.slane %v407, 4
  %v409 = vadd.f32 %v407, %v408
  %v410 = vrot.slane %v409, 2
  %v411 = vadd.f32 %v409, %v410
  %v412 = vrot.slane %v411, 1
  %v413 = vadd.f32 %v411, %v412
  %v414 = vadd.f32 %v259, %v413
  %v415 = vld [vmem:[%s176] sm:$0xf]
  %v416 = vld [vmem:[%s176 + $0x4] sm:$0xf]
  %v417 = vld [vmem:[%s176 + $0x8] sm:$0xf]
  %v418 = vld [vmem:[%s176 + $0xc] sm:$0xf]
  %v419 = vld [vmem:[%s338] sm:$0xf]
  %v420 = vld [vmem:[%s338 + $0x4] sm:$0xf]
  %v421 = vld [vmem:[%s338 + $0x8] sm:$0xf]
  %v422 = vld [vmem:[%s338 + $0xc] sm:$0xf]
  %v427 = vunpack.c.l.b16 %v419
  %v428 = vunpack.c.l.b16 %v420
  %v429 = vunpack.c.l.b16 %v421
  %v430 = vunpack.c.l.b16 %v422
  %v431 = vpack.c.b16 %v428, %v427
  %v432 = vpack.c.b16 %v430, %v429
  %v434 = vsel %vm103, %v431, 0
  %v437 = vsel %vm103, %v432, 0
  %439 = vmatpush.bf16.msra.mxu0 0
  %440 = vmatpush.bf16.msra.mxu0 0
  %441 = vmatpush.bf16.msra.mxu0 0
  %442 = vmatpush.bf16.msra.mxu0 0
  %443 = vmatpush.bf16.msra.mxu0 0
  %444 = vmatpush.bf16.msra.mxu0 0
  %445 = vmatpush.bf16.msra.mxu0 0
  %446 = vmatpush.bf16.msra.mxu0 %v112
  %447 = vmatmul.bf16.gmra.mxu0 %v434
  %v448 = vpop.f32.mrf.mxu0
  %v449 = vadd.f32 0.0, %v448
  %v450 = vpop.f32.mrf.mxu0
  %v451 = vadd.f32 0.0, %v450
  %452 = vmatmul.bf16.gmra.mxu0 %v437
  %v453 = vpop.f32.mrf.mxu0
  %v454 = vadd.f32 0.0, %v453
  %v455 = vpop.f32.mrf.mxu0
  %v456 = vadd.f32 0.0, %v455
  %457 = vdwg.mxu0
  %v462 = vunpack.c.l.b16 %v415
  %v463 = vunpack.c.l.b16 %v416
  %v464 = vunpack.c.l.b16 %v417
  %v465 = vunpack.c.l.b16 %v418
  %v466 = vpack.c.b16 %v463, %v462
  %v467 = vpack.c.b16 %v465, %v464
  %v469 = vsel %vm103, %v466, 0
  %v472 = vsel %vm103, %v467, 0
  %474 = vmatpush.bf16.msra.mxu0 0
  %475 = vmatpush.bf16.msra.mxu0 0
  %476 = vmatpush.bf16.msra.mxu0 0
  %477 = vmatpush.bf16.msra.mxu0 0
  %478 = vmatpush.bf16.msra.mxu0 0
  %479 = vmatpush.bf16.msra.mxu0 0
  %480 = vmatpush.bf16.msra.mxu0 0
  %481 = vmatpush.bf16.msra.mxu0 %v155
  %482 = vmatmul.bf16.gmra.mxu0 %v469
  %v483 = vpop.f32.mrf.mxu0
  %v484 = vadd.f32 %v449, %v483
  %v485 = vpop.f32.mrf.mxu0
  %v486 = vadd.f32 %v451, %v485
  %487 = vmatmul.bf16.gmra.mxu0 %v472
  %v488 = vpop.f32.mrf.mxu0
  %v489 = vadd.f32 %v454, %v488
  %v490 = vpop.f32.mrf.mxu0
  %v491 = vadd.f32 %v456, %v490
  %492 = vdwg.mxu0
  %s493 = scalar_lea.vmem %s0, 64
  %v494 = vld [vmem:[%s493] sm:$0xf]
  %v495 = vld [vmem:[%s493 + $0x4] sm:$0xf]
  %v496 = vld [vmem:[%s493 + $0x8] sm:$0xf]
  %v497 = vld [vmem:[%s493 + $0xc] sm:$0xf]
  %v502 = vunpack.c.l.b16 %v494
  %v503 = vunpack.c.l.b16 %v495
  %v504 = vunpack.c.l.b16 %v496
  %v505 = vunpack.c.l.b16 %v497
  %v506 = vpack.c.b16 %v503, %v502
  %v507 = vpack.c.b16 %v505, %v504
  %v509 = vsel %vm103, %v506, 0
  %v512 = vsel %vm103, %v507, 0
  %514 = vmatpush.bf16.msra.mxu0 0
  %515 = vmatpush.bf16.msra.mxu0 0
  %516 = vmatpush.bf16.msra.mxu0 0
  %517 = vmatpush.bf16.msra.mxu0 0
  %518 = vmatpush.bf16.msra.mxu0 0
  %519 = vmatpush.bf16.msra.mxu0 0
  %520 = vmatpush.bf16.msra.mxu0 0
  %521 = vmatpush.bf16.msra.mxu0 %v203
  %522 = vmatmul.bf16.gmra.mxu0 %v509
  %v523 = vpop.f32.mrf.mxu0
  %v524 = vadd.f32 0.0, %v523
  %v525 = vpop.f32.mrf.mxu0
  %v526 = vadd.f32 0.0, %v525
  %527 = vmatmul.bf16.gmra.mxu0 %v512
  %v528 = vpop.f32.mrf.mxu0
  %v529 = vadd.f32 0.0, %v528
  %v530 = vpop.f32.mrf.mxu0
  %v531 = vadd.f32 0.0, %v530
  %532 = vdwg.mxu0
  %v533 = vadd.f32 %v484, %v524
  %v534 = vadd.f32 %v486, %v526
  %v535 = vadd.f32 %v489, %v529
  %v536 = vadd.f32 %v491, %v531
  %v537 = vpack.c.bf16 %v533, %v533
  %v538 = vpack.c.bf16 %v534, %v534
  %v539 = vpack.c.bf16 %v535, %v535
  %v540 = vpack.c.bf16 %v536, %v536
  %s541 = scalar_lea.vmem %s4, 32
  %542 = vst [vmem:[%s541] sm:$0xf] %v537
  %543 = vst [vmem:[%s541 + $0x4] sm:$0xf] %v538
  %544 = vst [vmem:[%s541 + $0x8] sm:$0xf] %v539
  %545 = vst [vmem:[%s541 + $0xc] sm:$0xf] %v540
  %v546 = vadd.f32 %v533, %v534
  %v547 = vadd.f32 %v546, %v535
  %v548 = vadd.f32 %v547, %v536
  %v549 = vrot.slane %v548, 4
  %v550 = vadd.f32 %v548, %v549
  %v551 = vrot.slane %v550, 2
  %v552 = vadd.f32 %v550, %v551
  %v553 = vrot.slane %v552, 1
  %v554 = vadd.f32 %v552, %v553
  %v555 = vadd.f32 %v400, %v554
  %v556 = vmul.f32 %v533, %v533
  %v557 = vmul.f32 %v534, %v534
  %v558 = vmul.f32 %v535, %v535
  %v559 = vmul.f32 %v536, %v536
  %v560 = vadd.f32 %v556, %v557
  %v561 = vadd.f32 %v560, %v558
  %v562 = vadd.f32 %v561, %v559
  %v563 = vrot.slane %v562, 4
  %v564 = vadd.f32 %v562, %v563
  %v565 = vrot.slane %v564, 2
  %v566 = vadd.f32 %v564, %v565
  %v567 = vrot.slane %v566, 1
  %v568 = vadd.f32 %v566, %v567
  %v569 = vadd.f32 %v414, %v568
  %v570 = vld [vmem:[%s338] sm:$0xf]
  %v571 = vld [vmem:[%s338 + $0x4] sm:$0xf]
  %v572 = vld [vmem:[%s338 + $0x8] sm:$0xf]
  %v573 = vld [vmem:[%s338 + $0xc] sm:$0xf]
  %v574 = vld [vmem:[%s493] sm:$0xf]
  %v575 = vld [vmem:[%s493 + $0x4] sm:$0xf]
  %v576 = vld [vmem:[%s493 + $0x8] sm:$0xf]
  %v577 = vld [vmem:[%s493 + $0xc] sm:$0xf]
  %v582 = vunpack.c.l.b16 %v574
  %v583 = vunpack.c.l.b16 %v575
  %v584 = vunpack.c.l.b16 %v576
  %v585 = vunpack.c.l.b16 %v577
  %v586 = vpack.c.b16 %v583, %v582
  %v587 = vpack.c.b16 %v585, %v584
  %v589 = vsel %vm103, %v586, 0
  %v592 = vsel %vm103, %v587, 0
  %594 = vmatpush.bf16.msra.mxu0 0
  %595 = vmatpush.bf16.msra.mxu0 0
  %596 = vmatpush.bf16.msra.mxu0 0
  %597 = vmatpush.bf16.msra.mxu0 0
  %598 = vmatpush.bf16.msra.mxu0 0
  %599 = vmatpush.bf16.msra.mxu0 0
  %600 = vmatpush.bf16.msra.mxu0 0
  %601 = vmatpush.bf16.msra.mxu0 %v112
  %602 = vmatmul.bf16.gmra.mxu0 %v589
  %v603 = vpop.f32.mrf.mxu0
  %v604 = vadd.f32 0.0, %v603
  %v605 = vpop.f32.mrf.mxu0
  %v606 = vadd.f32 0.0, %v605
  %607 = vmatmul.bf16.gmra.mxu0 %v592
  %v608 = vpop.f32.mrf.mxu0
  %v609 = vadd.f32 0.0, %v608
  %v610 = vpop.f32.mrf.mxu0
  %v611 = vadd.f32 0.0, %v610
  %612 = vdwg.mxu0
  %v617 = vunpack.c.l.b16 %v570
  %v618 = vunpack.c.l.b16 %v571
  %v619 = vunpack.c.l.b16 %v572
  %v620 = vunpack.c.l.b16 %v573
  %v621 = vpack.c.b16 %v618, %v617
  %v622 = vpack.c.b16 %v620, %v619
  %v624 = vsel %vm103, %v621, 0
  %v627 = vsel %vm103, %v622, 0
  %629 = vmatpush.bf16.msra.mxu0 0
  %630 = vmatpush.bf16.msra.mxu0 0
  %631 = vmatpush.bf16.msra.mxu0 0
  %632 = vmatpush.bf16.msra.mxu0 0
  %633 = vmatpush.bf16.msra.mxu0 0
  %634 = vmatpush.bf16.msra.mxu0 0
  %635 = vmatpush.bf16.msra.mxu0 0
  %636 = vmatpush.bf16.msra.mxu0 %v155
  %637 = vmatmul.bf16.gmra.mxu0 %v624
  %v638 = vpop.f32.mrf.mxu0
  %v639 = vadd.f32 %v604, %v638
  %v640 = vpop.f32.mrf.mxu0
  %v641 = vadd.f32 %v606, %v640
  %642 = vmatmul.bf16.gmra.mxu0 %v627
  %v643 = vpop.f32.mrf.mxu0
  %v644 = vadd.f32 %v609, %v643
  %v645 = vpop.f32.mrf.mxu0
  %v646 = vadd.f32 %v611, %v645
  %647 = vdwg.mxu0
  %s648 = scalar_lea.vmem %s0, 80
  %v649 = vld [vmem:[%s648] sm:$0xf]
  %v650 = vld [vmem:[%s648 + $0x4] sm:$0xf]
  %v651 = vld [vmem:[%s648 + $0x8] sm:$0xf]
  %v652 = vld [vmem:[%s648 + $0xc] sm:$0xf]
  %v657 = vunpack.c.l.b16 %v649
  %v658 = vunpack.c.l.b16 %v650
  %v659 = vunpack.c.l.b16 %v651
  %v660 = vunpack.c.l.b16 %v652
  %v661 = vpack.c.b16 %v658, %v657
  %v662 = vpack.c.b16 %v660, %v659
  %v664 = vsel %vm103, %v661, 0
  %v667 = vsel %vm103, %v662, 0
  %669 = vmatpush.bf16.msra.mxu0 0
  %670 = vmatpush.bf16.msra.mxu0 0
  %671 = vmatpush.bf16.msra.mxu0 0
  %672 = vmatpush.bf16.msra.mxu0 0
  %673 = vmatpush.bf16.msra.mxu0 0
  %674 = vmatpush.bf16.msra.mxu0 0
  %675 = vmatpush.bf16.msra.mxu0 0
  %676 = vmatpush.bf16.msra.mxu0 %v203
  %677 = vmatmul.bf16.gmra.mxu0 %v664
  %v678 = vpop.f32.mrf.mxu0
  %v679 = vadd.f32 0.0, %v678
  %v680 = vpop.f32.mrf.mxu0
  %v681 = vadd.f32 0.0, %v680
  %682 = vmatmul.bf16.gmra.mxu0 %v667
  %v683 = vpop.f32.mrf.mxu0
  %v684 = vadd.f32 0.0, %v683
  %v685 = vpop.f32.mrf.mxu0
  %v686 = vadd.f32 0.0, %v685
  %687 = vdwg.mxu0
  %v688 = vadd.f32 %v639, %v679
  %v689 = vadd.f32 %v641, %v681
  %v690 = vadd.f32 %v644, %v684
  %v691 = vadd.f32 %v646, %v686
  %v692 = vpack.c.bf16 %v688, %v688
  %v693 = vpack.c.bf16 %v689, %v689
  %v694 = vpack.c.bf16 %v690, %v690
  %v695 = vpack.c.bf16 %v691, %v691
  %s696 = scalar_lea.vmem %s4, 48
  %697 = vst [vmem:[%s696] sm:$0xf] %v692
  %698 = vst [vmem:[%s696 + $0x4] sm:$0xf] %v693
  %699 = vst [vmem:[%s696 + $0x8] sm:$0xf] %v694
  %700 = vst [vmem:[%s696 + $0xc] sm:$0xf] %v695
  %v701 = vadd.f32 %v688, %v689
  %v702 = vadd.f32 %v701, %v690
  %v703 = vadd.f32 %v702, %v691
  %v704 = vrot.slane %v703, 4
  %v705 = vadd.f32 %v703, %v704
  %v706 = vrot.slane %v705, 2
  %v707 = vadd.f32 %v705, %v706
  %v708 = vrot.slane %v707, 1
  %v709 = vadd.f32 %v707, %v708
  %v710 = vadd.f32 %v555, %v709
  %v711 = vmul.f32 %v688, %v688
  %v712 = vmul.f32 %v689, %v689
  %v713 = vmul.f32 %v690, %v690
  %v714 = vmul.f32 %v691, %v691
  %v715 = vadd.f32 %v711, %v712
  %v716 = vadd.f32 %v715, %v713
  %v717 = vadd.f32 %v716, %v714
  %v718 = vrot.slane %v717, 4
  %v719 = vadd.f32 %v717, %v718
  %v720 = vrot.slane %v719, 2
  %v721 = vadd.f32 %v719, %v720
  %v722 = vrot.slane %v721, 1
  %v723 = vadd.f32 %v721, %v722
  %v724 = vadd.f32 %v569, %v723
  %v725 = vld [vmem:[%s493] sm:$0xf]
  %v726 = vld [vmem:[%s493 + $0x4] sm:$0xf]
  %v727 = vld [vmem:[%s493 + $0x8] sm:$0xf]
  %v728 = vld [vmem:[%s493 + $0xc] sm:$0xf]
  %v729 = vld [vmem:[%s648] sm:$0xf]
  %v730 = vld [vmem:[%s648 + $0x4] sm:$0xf]
  %v731 = vld [vmem:[%s648 + $0x8] sm:$0xf]
  %v732 = vld [vmem:[%s648 + $0xc] sm:$0xf]
  %v737 = vunpack.c.l.b16 %v729
  %v738 = vunpack.c.l.b16 %v730
  %v739 = vunpack.c.l.b16 %v731
  %v740 = vunpack.c.l.b16 %v732
  %v741 = vpack.c.b16 %v738, %v737
  %v742 = vpack.c.b16 %v740, %v739
  %v744 = vsel %vm103, %v741, 0
  %v747 = vsel %vm103, %v742, 0
  %749 = vmatpush.bf16.msra.mxu0 0
  %750 = vmatpush.bf16.msra.mxu0 0
  %751 = vmatpush.bf16.msra.mxu0 0
  %752 = vmatpush.bf16.msra.mxu0 0
  %753 = vmatpush.bf16.msra.mxu0 0
  %754 = vmatpush.bf16.msra.mxu0 0
  %755 = vmatpush.bf16.msra.mxu0 0
  %756 = vmatpush.bf16.msra.mxu0 %v112
  %757 = vmatmul.bf16.gmra.mxu0 %v744
  %v758 = vpop.f32.mrf.mxu0
  %v759 = vadd.f32 0.0, %v758
  %v760 = vpop.f32.mrf.mxu0
  %v761 = vadd.f32 0.0, %v760
  %762 = vmatmul.bf16.gmra.mxu0 %v747
  %v763 = vpop.f32.mrf.mxu0
  %v764 = vadd.f32 0.0, %v763
  %v765 = vpop.f32.mrf.mxu0
  %v766 = vadd.f32 0.0, %v765
  %767 = vdwg.mxu0
  %v772 = vunpack.c.l.b16 %v725
  %v773 = vunpack.c.l.b16 %v726
  %v774 = vunpack.c.l.b16 %v727
  %v775 = vunpack.c.l.b16 %v728
  %v776 = vpack.c.b16 %v773, %v772
  %v777 = vpack.c.b16 %v775, %v774
  %v779 = vsel %vm103, %v776, 0
  %v782 = vsel %vm103, %v777, 0
  %784 = vmatpush.bf16.msra.mxu0 0
  %785 = vmatpush.bf16.msra.mxu0 0
  %786 = vmatpush.bf16.msra.mxu0 0
  %787 = vmatpush.bf16.msra.mxu0 0
  %788 = vmatpush.bf16.msra.mxu0 0
  %789 = vmatpush.bf16.msra.mxu0 0
  %790 = vmatpush.bf16.msra.mxu0 0
  %791 = vmatpush.bf16.msra.mxu0 %v155
  %792 = vmatmul.bf16.gmra.mxu0 %v779
  %v793 = vpop.f32.mrf.mxu0
  %v794 = vadd.f32 %v759, %v793
  %v795 = vpop.f32.mrf.mxu0
  %v796 = vadd.f32 %v761, %v795
  %797 = vmatmul.bf16.gmra.mxu0 %v782
  %v798 = vpop.f32.mrf.mxu0
  %v799 = vadd.f32 %v764, %v798
  %v800 = vpop.f32.mrf.mxu0
  %v801 = vadd.f32 %v766, %v800
  %802 = vdwg.mxu0
  %s803 = scalar_lea.vmem %s0, 96
  %v804 = vld [vmem:[%s803] sm:$0xf]
  %v805 = vld [vmem:[%s803 + $0x4] sm:$0xf]
  %v806 = vld [vmem:[%s803 + $0x8] sm:$0xf]
  %v807 = vld [vmem:[%s803 + $0xc] sm:$0xf]
  %v812 = vunpack.c.l.b16 %v804
  %v813 = vunpack.c.l.b16 %v805
  %v814 = vunpack.c.l.b16 %v806
  %v815 = vunpack.c.l.b16 %v807
  %v816 = vpack.c.b16 %v813, %v812
  %v817 = vpack.c.b16 %v815, %v814
  %v819 = vsel %vm103, %v816, 0
  %v822 = vsel %vm103, %v817, 0
  %824 = vmatpush.bf16.msra.mxu0 0
  %825 = vmatpush.bf16.msra.mxu0 0
  %826 = vmatpush.bf16.msra.mxu0 0
  %827 = vmatpush.bf16.msra.mxu0 0
  %828 = vmatpush.bf16.msra.mxu0 0
  %829 = vmatpush.bf16.msra.mxu0 0
  %830 = vmatpush.bf16.msra.mxu0 0
  %831 = vmatpush.bf16.msra.mxu0 %v203
  %832 = vmatmul.bf16.gmra.mxu0 %v819
  %v833 = vpop.f32.mrf.mxu0
  %v834 = vadd.f32 0.0, %v833
  %v835 = vpop.f32.mrf.mxu0
  %v836 = vadd.f32 0.0, %v835
  %837 = vmatmul.bf16.gmra.mxu0 %v822
  %v838 = vpop.f32.mrf.mxu0
  %v839 = vadd.f32 0.0, %v838
  %v840 = vpop.f32.mrf.mxu0
  %v841 = vadd.f32 0.0, %v840
  %842 = vdwg.mxu0
  %v843 = vadd.f32 %v794, %v834
  %v844 = vadd.f32 %v796, %v836
  %v845 = vadd.f32 %v799, %v839
  %v846 = vadd.f32 %v801, %v841
  %v847 = vpack.c.bf16 %v843, %v843
  %v848 = vpack.c.bf16 %v844, %v844
  %v849 = vpack.c.bf16 %v845, %v845
  %v850 = vpack.c.bf16 %v846, %v846
  %s851 = scalar_lea.vmem %s4, 64
  %852 = vst [vmem:[%s851] sm:$0xf] %v847
  %853 = vst [vmem:[%s851 + $0x4] sm:$0xf] %v848
  %854 = vst [vmem:[%s851 + $0x8] sm:$0xf] %v849
  %855 = vst [vmem:[%s851 + $0xc] sm:$0xf] %v850
  %v856 = vadd.f32 %v843, %v844
  %v857 = vadd.f32 %v856, %v845
  %v858 = vadd.f32 %v857, %v846
  %v859 = vrot.slane %v858, 4
  %v860 = vadd.f32 %v858, %v859
  %v861 = vrot.slane %v860, 2
  %v862 = vadd.f32 %v860, %v861
  %v863 = vrot.slane %v862, 1
  %v864 = vadd.f32 %v862, %v863
  %v865 = vadd.f32 %v710, %v864
  %v866 = vmul.f32 %v843, %v843
  %v867 = vmul.f32 %v844, %v844
  %v868 = vmul.f32 %v845, %v845
  %v869 = vmul.f32 %v846, %v846
  %v870 = vadd.f32 %v866, %v867
  %v871 = vadd.f32 %v870, %v868
  %v872 = vadd.f32 %v871, %v869
  %v873 = vrot.slane %v872, 4
  %v874 = vadd.f32 %v872, %v873
  %v875 = vrot.slane %v874, 2
  %v876 = vadd.f32 %v874, %v875
  %v877 = vrot.slane %v876, 1
  %v878 = vadd.f32 %v876, %v877
  %v879 = vadd.f32 %v724, %v878
  %v880 = vld [vmem:[%s648] sm:$0xf]
  %v881 = vld [vmem:[%s648 + $0x4] sm:$0xf]
  %v882 = vld [vmem:[%s648 + $0x8] sm:$0xf]
  %v883 = vld [vmem:[%s648 + $0xc] sm:$0xf]
  %v884 = vld [vmem:[%s803] sm:$0xf]
  %v885 = vld [vmem:[%s803 + $0x4] sm:$0xf]
  %v886 = vld [vmem:[%s803 + $0x8] sm:$0xf]
  %v887 = vld [vmem:[%s803 + $0xc] sm:$0xf]
  %v892 = vunpack.c.l.b16 %v884
  %v893 = vunpack.c.l.b16 %v885
  %v894 = vunpack.c.l.b16 %v886
  %v895 = vunpack.c.l.b16 %v887
  %v896 = vpack.c.b16 %v893, %v892
  %v897 = vpack.c.b16 %v895, %v894
  %v899 = vsel %vm103, %v896, 0
  %v902 = vsel %vm103, %v897, 0
  %904 = vmatpush.bf16.msra.mxu0 0
  %905 = vmatpush.bf16.msra.mxu0 0
  %906 = vmatpush.bf16.msra.mxu0 0
  %907 = vmatpush.bf16.msra.mxu0 0
  %908 = vmatpush.bf16.msra.mxu0 0
  %909 = vmatpush.bf16.msra.mxu0 0
  %910 = vmatpush.bf16.msra.mxu0 0
  %911 = vmatpush.bf16.msra.mxu0 %v112
  %912 = vmatmul.bf16.gmra.mxu0 %v899
  %v913 = vpop.f32.mrf.mxu0
  %v914 = vadd.f32 0.0, %v913
  %v915 = vpop.f32.mrf.mxu0
  %v916 = vadd.f32 0.0, %v915
  %917 = vmatmul.bf16.gmra.mxu0 %v902
  %v918 = vpop.f32.mrf.mxu0
  %v919 = vadd.f32 0.0, %v918
  %v920 = vpop.f32.mrf.mxu0
  %v921 = vadd.f32 0.0, %v920
  %922 = vdwg.mxu0
  %v927 = vunpack.c.l.b16 %v880
  %v928 = vunpack.c.l.b16 %v881
  %v929 = vunpack.c.l.b16 %v882
  %v930 = vunpack.c.l.b16 %v883
  %v931 = vpack.c.b16 %v928, %v927
  %v932 = vpack.c.b16 %v930, %v929
  %v934 = vsel %vm103, %v931, 0
  %v937 = vsel %vm103, %v932, 0
  %939 = vmatpush.bf16.msra.mxu0 0
  %940 = vmatpush.bf16.msra.mxu0 0
  %941 = vmatpush.bf16.msra.mxu0 0
  %942 = vmatpush.bf16.msra.mxu0 0
  %943 = vmatpush.bf16.msra.mxu0 0
  %944 = vmatpush.bf16.msra.mxu0 0
  %945 = vmatpush.bf16.msra.mxu0 0
  %946 = vmatpush.bf16.msra.mxu0 %v155
  %947 = vmatmul.bf16.gmra.mxu0 %v934
  %v948 = vpop.f32.mrf.mxu0
  %v949 = vadd.f32 %v914, %v948
  %v950 = vpop.f32.mrf.mxu0
  %v951 = vadd.f32 %v916, %v950
  %952 = vmatmul.bf16.gmra.mxu0 %v937
  %v953 = vpop.f32.mrf.mxu0
  %v954 = vadd.f32 %v919, %v953
  %v955 = vpop.f32.mrf.mxu0
  %v956 = vadd.f32 %v921, %v955
  %957 = vdwg.mxu0
  %s958 = scalar_lea.vmem %s0, 112
  %v959 = vld [vmem:[%s958] sm:$0xf]
  %v960 = vld [vmem:[%s958 + $0x4] sm:$0xf]
  %v961 = vld [vmem:[%s958 + $0x8] sm:$0xf]
  %v962 = vld [vmem:[%s958 + $0xc] sm:$0xf]
  %v967 = vunpack.c.l.b16 %v959
  %v968 = vunpack.c.l.b16 %v960
  %v969 = vunpack.c.l.b16 %v961
  %v970 = vunpack.c.l.b16 %v962
  %v971 = vpack.c.b16 %v968, %v967
  %v972 = vpack.c.b16 %v970, %v969
  %v974 = vsel %vm103, %v971, 0
  %v977 = vsel %vm103, %v972, 0
  %979 = vmatpush.bf16.msra.mxu0 0
  %980 = vmatpush.bf16.msra.mxu0 0
  %981 = vmatpush.bf16.msra.mxu0 0
  %982 = vmatpush.bf16.msra.mxu0 0
  %983 = vmatpush.bf16.msra.mxu0 0
  %984 = vmatpush.bf16.msra.mxu0 0
  %985 = vmatpush.bf16.msra.mxu0 0
  %986 = vmatpush.bf16.msra.mxu0 %v203
  %987 = vmatmul.bf16.gmra.mxu0 %v974
  %v988 = vpop.f32.mrf.mxu0
  %v989 = vadd.f32 0.0, %v988
  %v990 = vpop.f32.mrf.mxu0
  %v991 = vadd.f32 0.0, %v990
  %992 = vmatmul.bf16.gmra.mxu0 %v977
  %v993 = vpop.f32.mrf.mxu0
  %v994 = vadd.f32 0.0, %v993
  %v995 = vpop.f32.mrf.mxu0
  %v996 = vadd.f32 0.0, %v995
  %997 = vdwg.mxu0
  %v998 = vadd.f32 %v949, %v989
  %v999 = vadd.f32 %v951, %v991
  %v1000 = vadd.f32 %v954, %v994
  %v1001 = vadd.f32 %v956, %v996
  %v1002 = vpack.c.bf16 %v998, %v998
  %v1003 = vpack.c.bf16 %v999, %v999
  %v1004 = vpack.c.bf16 %v1000, %v1000
  %v1005 = vpack.c.bf16 %v1001, %v1001
  %s1006 = scalar_lea.vmem %s4, 80
  %1007 = vst [vmem:[%s1006] sm:$0xf] %v1002
  %1008 = vst [vmem:[%s1006 + $0x4] sm:$0xf] %v1003
  %1009 = vst [vmem:[%s1006 + $0x8] sm:$0xf] %v1004
  %1010 = vst [vmem:[%s1006 + $0xc] sm:$0xf] %v1005
  %v1011 = vadd.f32 %v998, %v999
  %v1012 = vadd.f32 %v1011, %v1000
  %v1013 = vadd.f32 %v1012, %v1001
  %v1014 = vrot.slane %v1013, 4
  %v1015 = vadd.f32 %v1013, %v1014
  %v1016 = vrot.slane %v1015, 2
  %v1017 = vadd.f32 %v1015, %v1016
  %v1018 = vrot.slane %v1017, 1
  %v1019 = vadd.f32 %v1017, %v1018
  %v1020 = vadd.f32 %v865, %v1019
  %v1021 = vmul.f32 %v998, %v998
  %v1022 = vmul.f32 %v999, %v999
  %v1023 = vmul.f32 %v1000, %v1000
  %v1024 = vmul.f32 %v1001, %v1001
  %v1025 = vadd.f32 %v1021, %v1022
  %v1026 = vadd.f32 %v1025, %v1023
  %v1027 = vadd.f32 %v1026, %v1024
  %v1028 = vrot.slane %v1027, 4
  %v1029 = vadd.f32 %v1027, %v1028
  %v1030 = vrot.slane %v1029, 2
  %v1031 = vadd.f32 %v1029, %v1030
  %v1032 = vrot.slane %v1031, 1
  %v1033 = vadd.f32 %v1031, %v1032
  %v1034 = vadd.f32 %v879, %v1033
  %v1035 = vld [vmem:[%s803] sm:$0xf]
  %v1036 = vld [vmem:[%s803 + $0x4] sm:$0xf]
  %v1037 = vld [vmem:[%s803 + $0x8] sm:$0xf]
  %v1038 = vld [vmem:[%s803 + $0xc] sm:$0xf]
  %v1039 = vld [vmem:[%s958] sm:$0xf]
  %v1040 = vld [vmem:[%s958 + $0x4] sm:$0xf]
  %v1041 = vld [vmem:[%s958 + $0x8] sm:$0xf]
  %v1042 = vld [vmem:[%s958 + $0xc] sm:$0xf]
  %v1047 = vunpack.c.l.b16 %v1039
  %v1048 = vunpack.c.l.b16 %v1040
  %v1049 = vunpack.c.l.b16 %v1041
  %v1050 = vunpack.c.l.b16 %v1042
  %v1051 = vpack.c.b16 %v1048, %v1047
  %v1052 = vpack.c.b16 %v1050, %v1049
  %v1054 = vsel %vm103, %v1051, 0
  %v1057 = vsel %vm103, %v1052, 0
  %1059 = vmatpush.bf16.msra.mxu0 0
  %1060 = vmatpush.bf16.msra.mxu0 0
  %1061 = vmatpush.bf16.msra.mxu0 0
  %1062 = vmatpush.bf16.msra.mxu0 0
  %1063 = vmatpush.bf16.msra.mxu0 0
  %1064 = vmatpush.bf16.msra.mxu0 0
  %1065 = vmatpush.bf16.msra.mxu0 0
  %1066 = vmatpush.bf16.msra.mxu0 %v112
  %1067 = vmatmul.bf16.gmra.mxu0 %v1054
  %v1068 = vpop.f32.mrf.mxu0
  %v1069 = vadd.f32 0.0, %v1068
  %v1070 = vpop.f32.mrf.mxu0
  %v1071 = vadd.f32 0.0, %v1070
  %1072 = vmatmul.bf16.gmra.mxu0 %v1057
  %v1073 = vpop.f32.mrf.mxu0
  %v1074 = vadd.f32 0.0, %v1073
  %v1075 = vpop.f32.mrf.mxu0
  %v1076 = vadd.f32 0.0, %v1075
  %1077 = vdwg.mxu0
  %v1082 = vunpack.c.l.b16 %v1035
  %v1083 = vunpack.c.l.b16 %v1036
  %v1084 = vunpack.c.l.b16 %v1037
  %v1085 = vunpack.c.l.b16 %v1038
  %v1086 = vpack.c.b16 %v1083, %v1082
  %v1087 = vpack.c.b16 %v1085, %v1084
  %v1089 = vsel %vm103, %v1086, 0
  %v1092 = vsel %vm103, %v1087, 0
  %1094 = vmatpush.bf16.msra.mxu0 0
  %1095 = vmatpush.bf16.msra.mxu0 0
  %1096 = vmatpush.bf16.msra.mxu0 0
  %1097 = vmatpush.bf16.msra.mxu0 0
  %1098 = vmatpush.bf16.msra.mxu0 0
  %1099 = vmatpush.bf16.msra.mxu0 0
  %1100 = vmatpush.bf16.msra.mxu0 0
  %1101 = vmatpush.bf16.msra.mxu0 %v155
  %1102 = vmatmul.bf16.gmra.mxu0 %v1089
  %v1103 = vpop.f32.mrf.mxu0
  %v1104 = vadd.f32 %v1069, %v1103
  %v1105 = vpop.f32.mrf.mxu0
  %v1106 = vadd.f32 %v1071, %v1105
  %1107 = vmatmul.bf16.gmra.mxu0 %v1092
  %v1108 = vpop.f32.mrf.mxu0
  %v1109 = vadd.f32 %v1074, %v1108
  %v1110 = vpop.f32.mrf.mxu0
  %v1111 = vadd.f32 %v1076, %v1110
  %1112 = vdwg.mxu0
  %s1113 = scalar_lea.vmem %s0, 128
  %v1114 = vld [vmem:[%s1113] sm:$0xf]
  %v1115 = vld [vmem:[%s1113 + $0x4] sm:$0xf]
  %v1116 = vld [vmem:[%s1113 + $0x8] sm:$0xf]
  %v1117 = vld [vmem:[%s1113 + $0xc] sm:$0xf]
  %v1122 = vunpack.c.l.b16 %v1114
  %v1123 = vunpack.c.l.b16 %v1115
  %v1124 = vunpack.c.l.b16 %v1116
  %v1125 = vunpack.c.l.b16 %v1117
  %v1126 = vpack.c.b16 %v1123, %v1122
  %v1127 = vpack.c.b16 %v1125, %v1124
  %v1129 = vsel %vm103, %v1126, 0
  %v1132 = vsel %vm103, %v1127, 0
  %1134 = vmatpush.bf16.msra.mxu0 0
  %1135 = vmatpush.bf16.msra.mxu0 0
  %1136 = vmatpush.bf16.msra.mxu0 0
  %1137 = vmatpush.bf16.msra.mxu0 0
  %1138 = vmatpush.bf16.msra.mxu0 0
  %1139 = vmatpush.bf16.msra.mxu0 0
  %1140 = vmatpush.bf16.msra.mxu0 0
  %1141 = vmatpush.bf16.msra.mxu0 %v203
  %1142 = vmatmul.bf16.gmra.mxu0 %v1129
  %v1143 = vpop.f32.mrf.mxu0
  %v1144 = vadd.f32 0.0, %v1143
  %v1145 = vpop.f32.mrf.mxu0
  %v1146 = vadd.f32 0.0, %v1145
  %1147 = vmatmul.bf16.gmra.mxu0 %v1132
  %v1148 = vpop.f32.mrf.mxu0
  %v1149 = vadd.f32 0.0, %v1148
  %v1150 = vpop.f32.mrf.mxu0
  %v1151 = vadd.f32 0.0, %v1150
  %1152 = vdwg.mxu0
  %v1153 = vadd.f32 %v1104, %v1144
  %v1154 = vadd.f32 %v1106, %v1146
  %v1155 = vadd.f32 %v1109, %v1149
  %v1156 = vadd.f32 %v1111, %v1151
  %v1157 = vpack.c.bf16 %v1153, %v1153
  %v1158 = vpack.c.bf16 %v1154, %v1154
  %v1159 = vpack.c.bf16 %v1155, %v1155
  %v1160 = vpack.c.bf16 %v1156, %v1156
  %s1161 = scalar_lea.vmem %s4, 96
  %1162 = vst [vmem:[%s1161] sm:$0xf] %v1157
  %1163 = vst [vmem:[%s1161 + $0x4] sm:$0xf] %v1158
  %1164 = vst [vmem:[%s1161 + $0x8] sm:$0xf] %v1159
  %1165 = vst [vmem:[%s1161 + $0xc] sm:$0xf] %v1160
  %v1166 = vadd.f32 %v1153, %v1154
  %v1167 = vadd.f32 %v1166, %v1155
  %v1168 = vadd.f32 %v1167, %v1156
  %v1169 = vrot.slane %v1168, 4
  %v1170 = vadd.f32 %v1168, %v1169
  %v1171 = vrot.slane %v1170, 2
  %v1172 = vadd.f32 %v1170, %v1171
  %v1173 = vrot.slane %v1172, 1
  %v1174 = vadd.f32 %v1172, %v1173
  %v1175 = vadd.f32 %v1020, %v1174
  %v1176 = vmul.f32 %v1153, %v1153
  %v1177 = vmul.f32 %v1154, %v1154
  %v1178 = vmul.f32 %v1155, %v1155
  %v1179 = vmul.f32 %v1156, %v1156
  %v1180 = vadd.f32 %v1176, %v1177
  %v1181 = vadd.f32 %v1180, %v1178
  %v1182 = vadd.f32 %v1181, %v1179
  %v1183 = vrot.slane %v1182, 4
  %v1184 = vadd.f32 %v1182, %v1183
  %v1185 = vrot.slane %v1184, 2
  %v1186 = vadd.f32 %v1184, %v1185
  %v1187 = vrot.slane %v1186, 1
  %v1188 = vadd.f32 %v1186, %v1187
  %v1189 = vadd.f32 %v1034, %v1188
  %v1190 = vld [vmem:[%s958] sm:$0xf]
  %v1191 = vld [vmem:[%s958 + $0x4] sm:$0xf]
  %v1192 = vld [vmem:[%s958 + $0x8] sm:$0xf]
  %v1193 = vld [vmem:[%s958 + $0xc] sm:$0xf]
  %v1194 = vld [vmem:[%s1113] sm:$0xf]
  %v1195 = vld [vmem:[%s1113 + $0x4] sm:$0xf]
  %v1196 = vld [vmem:[%s1113 + $0x8] sm:$0xf]
  %v1197 = vld [vmem:[%s1113 + $0xc] sm:$0xf]
  %v1202 = vunpack.c.l.b16 %v1194
  %v1203 = vunpack.c.l.b16 %v1195
  %v1204 = vunpack.c.l.b16 %v1196
  %v1205 = vunpack.c.l.b16 %v1197
  %v1206 = vpack.c.b16 %v1203, %v1202
  %v1207 = vpack.c.b16 %v1205, %v1204
  %v1209 = vsel %vm103, %v1206, 0
  %v1212 = vsel %vm103, %v1207, 0
  %1214 = vmatpush.bf16.msra.mxu0 0
  %1215 = vmatpush.bf16.msra.mxu0 0
  %1216 = vmatpush.bf16.msra.mxu0 0
  %1217 = vmatpush.bf16.msra.mxu0 0
  %1218 = vmatpush.bf16.msra.mxu0 0
  %1219 = vmatpush.bf16.msra.mxu0 0
  %1220 = vmatpush.bf16.msra.mxu0 0
  %1221 = vmatpush.bf16.msra.mxu0 %v112
  %1222 = vmatmul.bf16.gmra.mxu0 %v1209
  %v1223 = vpop.f32.mrf.mxu0
  %v1224 = vadd.f32 0.0, %v1223
  %v1225 = vpop.f32.mrf.mxu0
  %v1226 = vadd.f32 0.0, %v1225
  %1227 = vmatmul.bf16.gmra.mxu0 %v1212
  %v1228 = vpop.f32.mrf.mxu0
  %v1229 = vadd.f32 0.0, %v1228
  %v1230 = vpop.f32.mrf.mxu0
  %v1231 = vadd.f32 0.0, %v1230
  %1232 = vdwg.mxu0
  %v1237 = vunpack.c.l.b16 %v1190
  %v1238 = vunpack.c.l.b16 %v1191
  %v1239 = vunpack.c.l.b16 %v1192
  %v1240 = vunpack.c.l.b16 %v1193
  %v1241 = vpack.c.b16 %v1238, %v1237
  %v1242 = vpack.c.b16 %v1240, %v1239
  %v1244 = vsel %vm103, %v1241, 0
  %v1247 = vsel %vm103, %v1242, 0
  %1249 = vmatpush.bf16.msra.mxu0 0
  %1250 = vmatpush.bf16.msra.mxu0 0
  %1251 = vmatpush.bf16.msra.mxu0 0
  %1252 = vmatpush.bf16.msra.mxu0 0
  %1253 = vmatpush.bf16.msra.mxu0 0
  %1254 = vmatpush.bf16.msra.mxu0 0
  %1255 = vmatpush.bf16.msra.mxu0 0
  %1256 = vmatpush.bf16.msra.mxu0 %v155
  %1257 = vmatmul.bf16.gmra.mxu0 %v1244
  %v1258 = vpop.f32.mrf.mxu0
  %v1259 = vadd.f32 %v1224, %v1258
  %v1260 = vpop.f32.mrf.mxu0
  %v1261 = vadd.f32 %v1226, %v1260
  %1262 = vmatmul.bf16.gmra.mxu0 %v1247
  %v1263 = vpop.f32.mrf.mxu0
  %v1264 = vadd.f32 %v1229, %v1263
  %v1265 = vpop.f32.mrf.mxu0
  %v1266 = vadd.f32 %v1231, %v1265
  %1267 = vdwg.mxu0
  %s1268 = scalar_lea.vmem %s0, 144
  %v1269 = vld [vmem:[%s1268] sm:$0xf]
  %v1270 = vld [vmem:[%s1268 + $0x4] sm:$0xf]
  %v1271 = vld [vmem:[%s1268 + $0x8] sm:$0xf]
  %v1272 = vld [vmem:[%s1268 + $0xc] sm:$0xf]
  %v1277 = vunpack.c.l.b16 %v1269
  %v1278 = vunpack.c.l.b16 %v1270
  %v1279 = vunpack.c.l.b16 %v1271
  %v1280 = vunpack.c.l.b16 %v1272
  %v1281 = vpack.c.b16 %v1278, %v1277
  %v1282 = vpack.c.b16 %v1280, %v1279
  %v1284 = vsel %vm103, %v1281, 0
  %v1287 = vsel %vm103, %v1282, 0
  %1289 = vmatpush.bf16.msra.mxu0 0
  %1290 = vmatpush.bf16.msra.mxu0 0
  %1291 = vmatpush.bf16.msra.mxu0 0
  %1292 = vmatpush.bf16.msra.mxu0 0
  %1293 = vmatpush.bf16.msra.mxu0 0
  %1294 = vmatpush.bf16.msra.mxu0 0
  %1295 = vmatpush.bf16.msra.mxu0 0
  %1296 = vmatpush.bf16.msra.mxu0 %v203
  %1297 = vmatmul.bf16.gmra.mxu0 %v1284
  %v1298 = vpop.f32.mrf.mxu0
  %v1299 = vadd.f32 0.0, %v1298
  %v1300 = vpop.f32.mrf.mxu0
  %v1301 = vadd.f32 0.0, %v1300
  %1302 = vmatmul.bf16.gmra.mxu0 %v1287
  %v1303 = vpop.f32.mrf.mxu0
  %v1304 = vadd.f32 0.0, %v1303
  %v1305 = vpop.f32.mrf.mxu0
  %v1306 = vadd.f32 0.0, %v1305
  %1307 = vdwg.mxu0
  %v1308 = vadd.f32 %v1259, %v1299
  %v1309 = vadd.f32 %v1261, %v1301
  %v1310 = vadd.f32 %v1264, %v1304
  %v1311 = vadd.f32 %v1266, %v1306
  %v1312 = vpack.c.bf16 %v1308, %v1308
  %v1313 = vpack.c.bf16 %v1309, %v1309
  %v1314 = vpack.c.bf16 %v1310, %v1310
  %v1315 = vpack.c.bf16 %v1311, %v1311
  %s1316 = scalar_lea.vmem %s4, 112
  %1317 = vst [vmem:[%s1316] sm:$0xf] %v1312
  %1318 = vst [vmem:[%s1316 + $0x4] sm:$0xf] %v1313
  %1319 = vst [vmem:[%s1316 + $0x8] sm:$0xf] %v1314
  %1320 = vst [vmem:[%s1316 + $0xc] sm:$0xf] %v1315
  %v1321 = vadd.f32 %v1308, %v1309
  %v1322 = vadd.f32 %v1321, %v1310
  %v1323 = vadd.f32 %v1322, %v1311
  %v1324 = vrot.slane %v1323, 4
  %v1325 = vadd.f32 %v1323, %v1324
  %v1326 = vrot.slane %v1325, 2
  %v1327 = vadd.f32 %v1325, %v1326
  %v1328 = vrot.slane %v1327, 1
  %v1329 = vadd.f32 %v1327, %v1328
  %v1330 = vadd.f32 %v1175, %v1329
  %v1331 = vmul.f32 %v1308, %v1308
  %v1332 = vmul.f32 %v1309, %v1309
  %v1333 = vmul.f32 %v1310, %v1310
  %v1334 = vmul.f32 %v1311, %v1311
  %v1335 = vadd.f32 %v1331, %v1332
  %v1336 = vadd.f32 %v1335, %v1333
  %v1337 = vadd.f32 %v1336, %v1334
  %v1338 = vrot.slane %v1337, 4
  %v1339 = vadd.f32 %v1337, %v1338
  %v1340 = vrot.slane %v1339, 2
  %v1341 = vadd.f32 %v1339, %v1340
  %v1342 = vrot.slane %v1341, 1
  %v1343 = vadd.f32 %v1341, %v1342
  %v1344 = vadd.f32 %v1189, %v1343
  %v1345 = vld [vmem:[%s1113] sm:$0xf]
  %v1346 = vld [vmem:[%s1113 + $0x4] sm:$0xf]
  %v1347 = vld [vmem:[%s1113 + $0x8] sm:$0xf]
  %v1348 = vld [vmem:[%s1113 + $0xc] sm:$0xf]
  %v1349 = vld [vmem:[%s1268] sm:$0xf]
  %v1350 = vld [vmem:[%s1268 + $0x4] sm:$0xf]
  %v1351 = vld [vmem:[%s1268 + $0x8] sm:$0xf]
  %v1352 = vld [vmem:[%s1268 + $0xc] sm:$0xf]
  %v1357 = vunpack.c.l.b16 %v1349
  %v1358 = vunpack.c.l.b16 %v1350
  %v1359 = vunpack.c.l.b16 %v1351
  %v1360 = vunpack.c.l.b16 %v1352
  %v1361 = vpack.c.b16 %v1358, %v1357
  %v1362 = vpack.c.b16 %v1360, %v1359
  %v1364 = vsel %vm103, %v1361, 0
  %v1367 = vsel %vm103, %v1362, 0
  %1369 = vmatpush.bf16.msra.mxu0 0
  %1370 = vmatpush.bf16.msra.mxu0 0
  %1371 = vmatpush.bf16.msra.mxu0 0
  %1372 = vmatpush.bf16.msra.mxu0 0
  %1373 = vmatpush.bf16.msra.mxu0 0
  %1374 = vmatpush.bf16.msra.mxu0 0
  %1375 = vmatpush.bf16.msra.mxu0 0
  %1376 = vmatpush.bf16.msra.mxu0 %v112
  %1377 = vmatmul.bf16.gmra.mxu0 %v1364
  %v1378 = vpop.f32.mrf.mxu0
  %v1379 = vadd.f32 0.0, %v1378
  %v1380 = vpop.f32.mrf.mxu0
  %v1381 = vadd.f32 0.0, %v1380
  %1382 = vmatmul.bf16.gmra.mxu0 %v1367
  %v1383 = vpop.f32.mrf.mxu0
  %v1384 = vadd.f32 0.0, %v1383
  %v1385 = vpop.f32.mrf.mxu0
  %v1386 = vadd.f32 0.0, %v1385
  %1387 = vdwg.mxu0
  %v1392 = vunpack.c.l.b16 %v1345
  %v1393 = vunpack.c.l.b16 %v1346
  %v1394 = vunpack.c.l.b16 %v1347
  %v1395 = vunpack.c.l.b16 %v1348
  %v1396 = vpack.c.b16 %v1393, %v1392
  %v1397 = vpack.c.b16 %v1395, %v1394
  %v1399 = vsel %vm103, %v1396, 0
  %v1402 = vsel %vm103, %v1397, 0
  %1404 = vmatpush.bf16.msra.mxu0 0
  %1405 = vmatpush.bf16.msra.mxu0 0
  %1406 = vmatpush.bf16.msra.mxu0 0
  %1407 = vmatpush.bf16.msra.mxu0 0
  %1408 = vmatpush.bf16.msra.mxu0 0
  %1409 = vmatpush.bf16.msra.mxu0 0
  %1410 = vmatpush.bf16.msra.mxu0 0
  %1411 = vmatpush.bf16.msra.mxu0 %v155
  %1412 = vmatmul.bf16.gmra.mxu0 %v1399
  %v1413 = vpop.f32.mrf.mxu0
  %v1414 = vadd.f32 %v1379, %v1413
  %v1415 = vpop.f32.mrf.mxu0
  %v1416 = vadd.f32 %v1381, %v1415
  %1417 = vmatmul.bf16.gmra.mxu0 %v1402
  %v1418 = vpop.f32.mrf.mxu0
  %v1419 = vadd.f32 %v1384, %v1418
  %v1420 = vpop.f32.mrf.mxu0
  %v1421 = vadd.f32 %v1386, %v1420
  %1422 = vdwg.mxu0
  %s1423 = scalar_lea.vmem %s0, 160
  %v1424 = vld [vmem:[%s1423] sm:$0xf]
  %v1425 = vld [vmem:[%s1423 + $0x4] sm:$0xf]
  %v1426 = vld [vmem:[%s1423 + $0x8] sm:$0xf]
  %v1427 = vld [vmem:[%s1423 + $0xc] sm:$0xf]
  %v1432 = vunpack.c.l.b16 %v1424
  %v1433 = vunpack.c.l.b16 %v1425
  %v1434 = vunpack.c.l.b16 %v1426
  %v1435 = vunpack.c.l.b16 %v1427
  %v1436 = vpack.c.b16 %v1433, %v1432
  %v1437 = vpack.c.b16 %v1435, %v1434
  %v1439 = vsel %vm103, %v1436, 0
  %v1442 = vsel %vm103, %v1437, 0
  %1444 = vmatpush.bf16.msra.mxu0 0
  %1445 = vmatpush.bf16.msra.mxu0 0
  %1446 = vmatpush.bf16.msra.mxu0 0
  %1447 = vmatpush.bf16.msra.mxu0 0
  %1448 = vmatpush.bf16.msra.mxu0 0
  %1449 = vmatpush.bf16.msra.mxu0 0
  %1450 = vmatpush.bf16.msra.mxu0 0
  %1451 = vmatpush.bf16.msra.mxu0 %v203
  %1452 = vmatmul.bf16.gmra.mxu0 %v1439
  %v1453 = vpop.f32.mrf.mxu0
  %v1454 = vadd.f32 0.0, %v1453
  %v1455 = vpop.f32.mrf.mxu0
  %v1456 = vadd.f32 0.0, %v1455
  %1457 = vmatmul.bf16.gmra.mxu0 %v1442
  %v1458 = vpop.f32.mrf.mxu0
  %v1459 = vadd.f32 0.0, %v1458
  %v1460 = vpop.f32.mrf.mxu0
  %v1461 = vadd.f32 0.0, %v1460
  %1462 = vdwg.mxu0
  %v1463 = vadd.f32 %v1414, %v1454
  %v1464 = vadd.f32 %v1416, %v1456
  %v1465 = vadd.f32 %v1419, %v1459
  %v1466 = vadd.f32 %v1421, %v1461
  %v1467 = vpack.c.bf16 %v1463, %v1463
  %v1468 = vpack.c.bf16 %v1464, %v1464
  %v1469 = vpack.c.bf16 %v1465, %v1465
  %v1470 = vpack.c.bf16 %v1466, %v1466
  %s1471 = scalar_lea.vmem %s4, 128
  %1472 = vst [vmem:[%s1471] sm:$0xf] %v1467
  %1473 = vst [vmem:[%s1471 + $0x4] sm:$0xf] %v1468
  %1474 = vst [vmem:[%s1471 + $0x8] sm:$0xf] %v1469
  %1475 = vst [vmem:[%s1471 + $0xc] sm:$0xf] %v1470
  %v1476 = vadd.f32 %v1463, %v1464
  %v1477 = vadd.f32 %v1476, %v1465
  %v1478 = vadd.f32 %v1477, %v1466
  %v1479 = vrot.slane %v1478, 4
  %v1480 = vadd.f32 %v1478, %v1479
  %v1481 = vrot.slane %v1480, 2
  %v1482 = vadd.f32 %v1480, %v1481
  %v1483 = vrot.slane %v1482, 1
  %v1484 = vadd.f32 %v1482, %v1483
  %v1485 = vadd.f32 %v1330, %v1484
  %v1486 = vmul.f32 %v1463, %v1463
  %v1487 = vmul.f32 %v1464, %v1464
  %v1488 = vmul.f32 %v1465, %v1465
  %v1489 = vmul.f32 %v1466, %v1466
  %v1490 = vadd.f32 %v1486, %v1487
  %v1491 = vadd.f32 %v1490, %v1488
  %v1492 = vadd.f32 %v1491, %v1489
  %v1493 = vrot.slane %v1492, 4
  %v1494 = vadd.f32 %v1492, %v1493
  %v1495 = vrot.slane %v1494, 2
  %v1496 = vadd.f32 %v1494, %v1495
  %v1497 = vrot.slane %v1496, 1
  %v1498 = vadd.f32 %v1496, %v1497
  %v1499 = vadd.f32 %v1344, %v1498
  %v1500 = vld [vmem:[%s1268] sm:$0xf]
  %v1501 = vld [vmem:[%s1268 + $0x4] sm:$0xf]
  %v1502 = vld [vmem:[%s1268 + $0x8] sm:$0xf]
  %v1503 = vld [vmem:[%s1268 + $0xc] sm:$0xf]
  %v1504 = vld [vmem:[%s1423] sm:$0xf]
  %v1505 = vld [vmem:[%s1423 + $0x4] sm:$0xf]
  %v1506 = vld [vmem:[%s1423 + $0x8] sm:$0xf]
  %v1507 = vld [vmem:[%s1423 + $0xc] sm:$0xf]
  %v1512 = vunpack.c.l.b16 %v1504
  %v1513 = vunpack.c.l.b16 %v1505
  %v1514 = vunpack.c.l.b16 %v1506
  %v1515 = vunpack.c.l.b16 %v1507
  %v1516 = vpack.c.b16 %v1513, %v1512
  %v1517 = vpack.c.b16 %v1515, %v1514
  %v1519 = vsel %vm103, %v1516, 0
  %v1522 = vsel %vm103, %v1517, 0
  %1524 = vmatpush.bf16.msra.mxu0 0
  %1525 = vmatpush.bf16.msra.mxu0 0
  %1526 = vmatpush.bf16.msra.mxu0 0
  %1527 = vmatpush.bf16.msra.mxu0 0
  %1528 = vmatpush.bf16.msra.mxu0 0
  %1529 = vmatpush.bf16.msra.mxu0 0
  %1530 = vmatpush.bf16.msra.mxu0 0
  %1531 = vmatpush.bf16.msra.mxu0 %v112
  %1532 = vmatmul.bf16.gmra.mxu0 %v1519
  %v1533 = vpop.f32.mrf.mxu0
  %v1534 = vadd.f32 0.0, %v1533
  %v1535 = vpop.f32.mrf.mxu0
  %v1536 = vadd.f32 0.0, %v1535
  %1537 = vmatmul.bf16.gmra.mxu0 %v1522
  %v1538 = vpop.f32.mrf.mxu0
  %v1539 = vadd.f32 0.0, %v1538
  %v1540 = vpop.f32.mrf.mxu0
  %v1541 = vadd.f32 0.0, %v1540
  %1542 = vdwg.mxu0
  %v1547 = vunpack.c.l.b16 %v1500
  %v1548 = vunpack.c.l.b16 %v1501
  %v1549 = vunpack.c.l.b16 %v1502
  %v1550 = vunpack.c.l.b16 %v1503
  %v1551 = vpack.c.b16 %v1548, %v1547
  %v1552 = vpack.c.b16 %v1550, %v1549
  %v1554 = vsel %vm103, %v1551, 0
  %v1557 = vsel %vm103, %v1552, 0
  %1559 = vmatpush.bf16.msra.mxu0 0
  %1560 = vmatpush.bf16.msra.mxu0 0
  %1561 = vmatpush.bf16.msra.mxu0 0
  %1562 = vmatpush.bf16.msra.mxu0 0
  %1563 = vmatpush.bf16.msra.mxu0 0
  %1564 = vmatpush.bf16.msra.mxu0 0
  %1565 = vmatpush.bf16.msra.mxu0 0
  %1566 = vmatpush.bf16.msra.mxu0 %v155
  %1567 = vmatmul.bf16.gmra.mxu0 %v1554
  %v1568 = vpop.f32.mrf.mxu0
  %v1569 = vadd.f32 %v1534, %v1568
  %v1570 = vpop.f32.mrf.mxu0
  %v1571 = vadd.f32 %v1536, %v1570
  %1572 = vmatmul.bf16.gmra.mxu0 %v1557
  %v1573 = vpop.f32.mrf.mxu0
  %v1574 = vadd.f32 %v1539, %v1573
  %v1575 = vpop.f32.mrf.mxu0
  %v1576 = vadd.f32 %v1541, %v1575
  %1577 = vdwg.mxu0
  %s1578 = scalar_lea.vmem %s0, 176
  %v1579 = vld [vmem:[%s1578] sm:$0xf]
  %v1580 = vld [vmem:[%s1578 + $0x4] sm:$0xf]
  %v1581 = vld [vmem:[%s1578 + $0x8] sm:$0xf]
  %v1582 = vld [vmem:[%s1578 + $0xc] sm:$0xf]
  %v1587 = vunpack.c.l.b16 %v1579
  %v1588 = vunpack.c.l.b16 %v1580
  %v1589 = vunpack.c.l.b16 %v1581
  %v1590 = vunpack.c.l.b16 %v1582
  %v1591 = vpack.c.b16 %v1588, %v1587
  %v1592 = vpack.c.b16 %v1590, %v1589
  %v1594 = vsel %vm103, %v1591, 0
  %v1597 = vsel %vm103, %v1592, 0
  %1599 = vmatpush.bf16.msra.mxu0 0
  %1600 = vmatpush.bf16.msra.mxu0 0
  %1601 = vmatpush.bf16.msra.mxu0 0
  %1602 = vmatpush.bf16.msra.mxu0 0
  %1603 = vmatpush.bf16.msra.mxu0 0
  %1604 = vmatpush.bf16.msra.mxu0 0
  %1605 = vmatpush.bf16.msra.mxu0 0
  %1606 = vmatpush.bf16.msra.mxu0 %v203
  %1607 = vmatmul.bf16.gmra.mxu0 %v1594
  %v1608 = vpop.f32.mrf.mxu0
  %v1609 = vadd.f32 0.0, %v1608
  %v1610 = vpop.f32.mrf.mxu0
  %v1611 = vadd.f32 0.0, %v1610
  %1612 = vmatmul.bf16.gmra.mxu0 %v1597
  %v1613 = vpop.f32.mrf.mxu0
  %v1614 = vadd.f32 0.0, %v1613
  %v1615 = vpop.f32.mrf.mxu0
  %v1616 = vadd.f32 0.0, %v1615
  %1617 = vdwg.mxu0
  %v1618 = vadd.f32 %v1569, %v1609
  %v1619 = vadd.f32 %v1571, %v1611
  %v1620 = vadd.f32 %v1574, %v1614
  %v1621 = vadd.f32 %v1576, %v1616
  %v1622 = vpack.c.bf16 %v1618, %v1618
  %v1623 = vpack.c.bf16 %v1619, %v1619
  %v1624 = vpack.c.bf16 %v1620, %v1620
  %v1625 = vpack.c.bf16 %v1621, %v1621
  %s1626 = scalar_lea.vmem %s4, 144
  %1627 = vst [vmem:[%s1626] sm:$0xf] %v1622
  %1628 = vst [vmem:[%s1626 + $0x4] sm:$0xf] %v1623
  %1629 = vst [vmem:[%s1626 + $0x8] sm:$0xf] %v1624
  %1630 = vst [vmem:[%s1626 + $0xc] sm:$0xf] %v1625
  %v1631 = vadd.f32 %v1618, %v1619
  %v1632 = vadd.f32 %v1631, %v1620
  %v1633 = vadd.f32 %v1632, %v1621
  %v1634 = vrot.slane %v1633, 4
  %v1635 = vadd.f32 %v1633, %v1634
  %v1636 = vrot.slane %v1635, 2
  %v1637 = vadd.f32 %v1635, %v1636
  %v1638 = vrot.slane %v1637, 1
  %v1639 = vadd.f32 %v1637, %v1638
  %v1640 = vadd.f32 %v1485, %v1639
  %v1641 = vmul.f32 %v1618, %v1618
  %v1642 = vmul.f32 %v1619, %v1619
  %v1643 = vmul.f32 %v1620, %v1620
  %v1644 = vmul.f32 %v1621, %v1621
  %v1645 = vadd.f32 %v1641, %v1642
  %v1646 = vadd.f32 %v1645, %v1643
  %v1647 = vadd.f32 %v1646, %v1644
  %v1648 = vrot.slane %v1647, 4
  %v1649 = vadd.f32 %v1647, %v1648
  %v1650 = vrot.slane %v1649, 2
  %v1651 = vadd.f32 %v1649, %v1650
  %v1652 = vrot.slane %v1651, 1
  %v1653 = vadd.f32 %v1651, %v1652
  %v1654 = vadd.f32 %v1499, %v1653
  %v1655 = vld [vmem:[%s1423] sm:$0xf]
  %v1656 = vld [vmem:[%s1423 + $0x4] sm:$0xf]
  %v1657 = vld [vmem:[%s1423 + $0x8] sm:$0xf]
  %v1658 = vld [vmem:[%s1423 + $0xc] sm:$0xf]
  %v1659 = vld [vmem:[%s1578] sm:$0xf]
  %v1660 = vld [vmem:[%s1578 + $0x4] sm:$0xf]
  %v1661 = vld [vmem:[%s1578 + $0x8] sm:$0xf]
  %v1662 = vld [vmem:[%s1578 + $0xc] sm:$0xf]
  %v1667 = vunpack.c.l.b16 %v1659
  %v1668 = vunpack.c.l.b16 %v1660
  %v1669 = vunpack.c.l.b16 %v1661
  %v1670 = vunpack.c.l.b16 %v1662
  %v1671 = vpack.c.b16 %v1668, %v1667
  %v1672 = vpack.c.b16 %v1670, %v1669
  %v1674 = vsel %vm103, %v1671, 0
  %v1677 = vsel %vm103, %v1672, 0
  %1679 = vmatpush.bf16.msra.mxu0 0
  %1680 = vmatpush.bf16.msra.mxu0 0
  %1681 = vmatpush.bf16.msra.mxu0 0
  %1682 = vmatpush.bf16.msra.mxu0 0
  %1683 = vmatpush.bf16.msra.mxu0 0
  %1684 = vmatpush.bf16.msra.mxu0 0
  %1685 = vmatpush.bf16.msra.mxu0 0
  %1686 = vmatpush.bf16.msra.mxu0 %v112
  %1687 = vmatmul.bf16.gmra.mxu0 %v1674
  %v1688 = vpop.f32.mrf.mxu0
  %v1689 = vadd.f32 0.0, %v1688
  %v1690 = vpop.f32.mrf.mxu0
  %v1691 = vadd.f32 0.0, %v1690
  %1692 = vmatmul.bf16.gmra.mxu0 %v1677
  %v1693 = vpop.f32.mrf.mxu0
  %v1694 = vadd.f32 0.0, %v1693
  %v1695 = vpop.f32.mrf.mxu0
  %v1696 = vadd.f32 0.0, %v1695
  %1697 = vdwg.mxu0
  %v1702 = vunpack.c.l.b16 %v1655
  %v1703 = vunpack.c.l.b16 %v1656
  %v1704 = vunpack.c.l.b16 %v1657
  %v1705 = vunpack.c.l.b16 %v1658
  %v1706 = vpack.c.b16 %v1703, %v1702
  %v1707 = vpack.c.b16 %v1705, %v1704
  %v1709 = vsel %vm103, %v1706, 0
  %v1712 = vsel %vm103, %v1707, 0
  %1714 = vmatpush.bf16.msra.mxu0 0
  %1715 = vmatpush.bf16.msra.mxu0 0
  %1716 = vmatpush.bf16.msra.mxu0 0
  %1717 = vmatpush.bf16.msra.mxu0 0
  %1718 = vmatpush.bf16.msra.mxu0 0
  %1719 = vmatpush.bf16.msra.mxu0 0
  %1720 = vmatpush.bf16.msra.mxu0 0
  %1721 = vmatpush.bf16.msra.mxu0 %v155
  %1722 = vmatmul.bf16.gmra.mxu0 %v1709
  %v1723 = vpop.f32.mrf.mxu0
  %v1724 = vadd.f32 %v1689, %v1723
  %v1725 = vpop.f32.mrf.mxu0
  %v1726 = vadd.f32 %v1691, %v1725
  %1727 = vmatmul.bf16.gmra.mxu0 %v1712
  %v1728 = vpop.f32.mrf.mxu0
  %v1729 = vadd.f32 %v1694, %v1728
  %v1730 = vpop.f32.mrf.mxu0
  %v1731 = vadd.f32 %v1696, %v1730
  %1732 = vdwg.mxu0
  %s1733 = scalar_lea.vmem %s0, 192
  %v1734 = vld [vmem:[%s1733] sm:$0xf]
  %v1735 = vld [vmem:[%s1733 + $0x4] sm:$0xf]
  %v1736 = vld [vmem:[%s1733 + $0x8] sm:$0xf]
  %v1737 = vld [vmem:[%s1733 + $0xc] sm:$0xf]
  %v1742 = vunpack.c.l.b16 %v1734
  %v1743 = vunpack.c.l.b16 %v1735
  %v1744 = vunpack.c.l.b16 %v1736
  %v1745 = vunpack.c.l.b16 %v1737
  %v1746 = vpack.c.b16 %v1743, %v1742
  %v1747 = vpack.c.b16 %v1745, %v1744
  %v1749 = vsel %vm103, %v1746, 0
  %v1752 = vsel %vm103, %v1747, 0
  %1754 = vmatpush.bf16.msra.mxu0 0
  %1755 = vmatpush.bf16.msra.mxu0 0
  %1756 = vmatpush.bf16.msra.mxu0 0
  %1757 = vmatpush.bf16.msra.mxu0 0
  %1758 = vmatpush.bf16.msra.mxu0 0
  %1759 = vmatpush.bf16.msra.mxu0 0
  %1760 = vmatpush.bf16.msra.mxu0 0
  %1761 = vmatpush.bf16.msra.mxu0 %v203
  %1762 = vmatmul.bf16.gmra.mxu0 %v1749
  %v1763 = vpop.f32.mrf.mxu0
  %v1764 = vadd.f32 0.0, %v1763
  %v1765 = vpop.f32.mrf.mxu0
  %v1766 = vadd.f32 0.0, %v1765
  %1767 = vmatmul.bf16.gmra.mxu0 %v1752
  %v1768 = vpop.f32.mrf.mxu0
  %v1769 = vadd.f32 0.0, %v1768
  %v1770 = vpop.f32.mrf.mxu0
  %v1771 = vadd.f32 0.0, %v1770
  %1772 = vdwg.mxu0
  %v1773 = vadd.f32 %v1724, %v1764
  %v1774 = vadd.f32 %v1726, %v1766
  %v1775 = vadd.f32 %v1729, %v1769
  %v1776 = vadd.f32 %v1731, %v1771
  %v1777 = vpack.c.bf16 %v1773, %v1773
  %v1778 = vpack.c.bf16 %v1774, %v1774
  %v1779 = vpack.c.bf16 %v1775, %v1775
  %v1780 = vpack.c.bf16 %v1776, %v1776
  %s1781 = scalar_lea.vmem %s4, 160
  %1782 = vst [vmem:[%s1781] sm:$0xf] %v1777
  %1783 = vst [vmem:[%s1781 + $0x4] sm:$0xf] %v1778
  %1784 = vst [vmem:[%s1781 + $0x8] sm:$0xf] %v1779
  %1785 = vst [vmem:[%s1781 + $0xc] sm:$0xf] %v1780
  %v1786 = vadd.f32 %v1773, %v1774
  %v1787 = vadd.f32 %v1786, %v1775
  %v1788 = vadd.f32 %v1787, %v1776
  %v1789 = vrot.slane %v1788, 4
  %v1790 = vadd.f32 %v1788, %v1789
  %v1791 = vrot.slane %v1790, 2
  %v1792 = vadd.f32 %v1790, %v1791
  %v1793 = vrot.slane %v1792, 1
  %v1794 = vadd.f32 %v1792, %v1793
  %v1795 = vadd.f32 %v1640, %v1794
  %v1796 = vmul.f32 %v1773, %v1773
  %v1797 = vmul.f32 %v1774, %v1774
  %v1798 = vmul.f32 %v1775, %v1775
  %v1799 = vmul.f32 %v1776, %v1776
  %v1800 = vadd.f32 %v1796, %v1797
  %v1801 = vadd.f32 %v1800, %v1798
  %v1802 = vadd.f32 %v1801, %v1799
  %v1803 = vrot.slane %v1802, 4
  %v1804 = vadd.f32 %v1802, %v1803
  %v1805 = vrot.slane %v1804, 2
  %v1806 = vadd.f32 %v1804, %v1805
  %v1807 = vrot.slane %v1806, 1
  %v1808 = vadd.f32 %v1806, %v1807
  %v1809 = vadd.f32 %v1654, %v1808
  %v1810 = vld [vmem:[%s1578] sm:$0xf]
  %v1811 = vld [vmem:[%s1578 + $0x4] sm:$0xf]
  %v1812 = vld [vmem:[%s1578 + $0x8] sm:$0xf]
  %v1813 = vld [vmem:[%s1578 + $0xc] sm:$0xf]
  %v1814 = vld [vmem:[%s1733] sm:$0xf]
  %v1815 = vld [vmem:[%s1733 + $0x4] sm:$0xf]
  %v1816 = vld [vmem:[%s1733 + $0x8] sm:$0xf]
  %v1817 = vld [vmem:[%s1733 + $0xc] sm:$0xf]
  %v1822 = vunpack.c.l.b16 %v1814
  %v1823 = vunpack.c.l.b16 %v1815
  %v1824 = vunpack.c.l.b16 %v1816
  %v1825 = vunpack.c.l.b16 %v1817
  %v1826 = vpack.c.b16 %v1823, %v1822
  %v1827 = vpack.c.b16 %v1825, %v1824
  %v1829 = vsel %vm103, %v1826, 0
  %v1832 = vsel %vm103, %v1827, 0
  %1834 = vmatpush.bf16.msra.mxu0 0
  %1835 = vmatpush.bf16.msra.mxu0 0
  %1836 = vmatpush.bf16.msra.mxu0 0
  %1837 = vmatpush.bf16.msra.mxu0 0
  %1838 = vmatpush.bf16.msra.mxu0 0
  %1839 = vmatpush.bf16.msra.mxu0 0
  %1840 = vmatpush.bf16.msra.mxu0 0
  %1841 = vmatpush.bf16.msra.mxu0 %v112
  %1842 = vmatmul.bf16.gmra.mxu0 %v1829
  %v1843 = vpop.f32.mrf.mxu0
  %v1844 = vadd.f32 0.0, %v1843
  %v1845 = vpop.f32.mrf.mxu0
  %v1846 = vadd.f32 0.0, %v1845
  %1847 = vmatmul.bf16.gmra.mxu0 %v1832
  %v1848 = vpop.f32.mrf.mxu0
  %v1849 = vadd.f32 0.0, %v1848
  %v1850 = vpop.f32.mrf.mxu0
  %v1851 = vadd.f32 0.0, %v1850
  %1852 = vdwg.mxu0
  %v1857 = vunpack.c.l.b16 %v1810
  %v1858 = vunpack.c.l.b16 %v1811
  %v1859 = vunpack.c.l.b16 %v1812
  %v1860 = vunpack.c.l.b16 %v1813
  %v1861 = vpack.c.b16 %v1858, %v1857
  %v1862 = vpack.c.b16 %v1860, %v1859
  %v1864 = vsel %vm103, %v1861, 0
  %v1867 = vsel %vm103, %v1862, 0
  %1869 = vmatpush.bf16.msra.mxu0 0
  %1870 = vmatpush.bf16.msra.mxu0 0
  %1871 = vmatpush.bf16.msra.mxu0 0
  %1872 = vmatpush.bf16.msra.mxu0 0
  %1873 = vmatpush.bf16.msra.mxu0 0
  %1874 = vmatpush.bf16.msra.mxu0 0
  %1875 = vmatpush.bf16.msra.mxu0 0
  %1876 = vmatpush.bf16.msra.mxu0 %v155
  %1877 = vmatmul.bf16.gmra.mxu0 %v1864
  %v1878 = vpop.f32.mrf.mxu0
  %v1879 = vadd.f32 %v1844, %v1878
  %v1880 = vpop.f32.mrf.mxu0
  %v1881 = vadd.f32 %v1846, %v1880
  %1882 = vmatmul.bf16.gmra.mxu0 %v1867
  %v1883 = vpop.f32.mrf.mxu0
  %v1884 = vadd.f32 %v1849, %v1883
  %v1885 = vpop.f32.mrf.mxu0
  %v1886 = vadd.f32 %v1851, %v1885
  %1887 = vdwg.mxu0
  %s1888 = scalar_lea.vmem %s0, 208
  %v1889 = vld [vmem:[%s1888] sm:$0xf]
  %v1890 = vld [vmem:[%s1888 + $0x4] sm:$0xf]
  %v1891 = vld [vmem:[%s1888 + $0x8] sm:$0xf]
  %v1892 = vld [vmem:[%s1888 + $0xc] sm:$0xf]
  %v1897 = vunpack.c.l.b16 %v1889
  %v1898 = vunpack.c.l.b16 %v1890
  %v1899 = vunpack.c.l.b16 %v1891
  %v1900 = vunpack.c.l.b16 %v1892
  %v1901 = vpack.c.b16 %v1898, %v1897
  %v1902 = vpack.c.b16 %v1900, %v1899
  %v1904 = vsel %vm103, %v1901, 0
  %v1907 = vsel %vm103, %v1902, 0
  %1909 = vmatpush.bf16.msra.mxu0 0
  %1910 = vmatpush.bf16.msra.mxu0 0
  %1911 = vmatpush.bf16.msra.mxu0 0
  %1912 = vmatpush.bf16.msra.mxu0 0
  %1913 = vmatpush.bf16.msra.mxu0 0
  %1914 = vmatpush.bf16.msra.mxu0 0
  %1915 = vmatpush.bf16.msra.mxu0 0
  %1916 = vmatpush.bf16.msra.mxu0 %v203
  %1917 = vmatmul.bf16.gmra.mxu0 %v1904
  %v1918 = vpop.f32.mrf.mxu0
  %v1919 = vadd.f32 0.0, %v1918
  %v1920 = vpop.f32.mrf.mxu0
  %v1921 = vadd.f32 0.0, %v1920
  %1922 = vmatmul.bf16.gmra.mxu0 %v1907
  %v1923 = vpop.f32.mrf.mxu0
  %v1924 = vadd.f32 0.0, %v1923
  %v1925 = vpop.f32.mrf.mxu0
  %v1926 = vadd.f32 0.0, %v1925
  %1927 = vdwg.mxu0
  %v1928 = vadd.f32 %v1879, %v1919
  %v1929 = vadd.f32 %v1881, %v1921
  %v1930 = vadd.f32 %v1884, %v1924
  %v1931 = vadd.f32 %v1886, %v1926
  %v1932 = vpack.c.bf16 %v1928, %v1928
  %v1933 = vpack.c.bf16 %v1929, %v1929
  %v1934 = vpack.c.bf16 %v1930, %v1930
  %v1935 = vpack.c.bf16 %v1931, %v1931
  %s1936 = scalar_lea.vmem %s4, 176
  %1937 = vst [vmem:[%s1936] sm:$0xf] %v1932
  %1938 = vst [vmem:[%s1936 + $0x4] sm:$0xf] %v1933
  %1939 = vst [vmem:[%s1936 + $0x8] sm:$0xf] %v1934
  %1940 = vst [vmem:[%s1936 + $0xc] sm:$0xf] %v1935
  %v1941 = vadd.f32 %v1928, %v1929
  %v1942 = vadd.f32 %v1941, %v1930
  %v1943 = vadd.f32 %v1942, %v1931
  %v1944 = vrot.slane %v1943, 4
  %v1945 = vadd.f32 %v1943, %v1944
  %v1946 = vrot.slane %v1945, 2
  %v1947 = vadd.f32 %v1945, %v1946
  %v1948 = vrot.slane %v1947, 1
  %v1949 = vadd.f32 %v1947, %v1948
  %v1950 = vadd.f32 %v1795, %v1949
  %v1951 = vmul.f32 %v1928, %v1928
  %v1952 = vmul.f32 %v1929, %v1929
  %v1953 = vmul.f32 %v1930, %v1930
  %v1954 = vmul.f32 %v1931, %v1931
  %v1955 = vadd.f32 %v1951, %v1952
  %v1956 = vadd.f32 %v1955, %v1953
  %v1957 = vadd.f32 %v1956, %v1954
  %v1958 = vrot.slane %v1957, 4
  %v1959 = vadd.f32 %v1957, %v1958
  %v1960 = vrot.slane %v1959, 2
  %v1961 = vadd.f32 %v1959, %v1960
  %v1962 = vrot.slane %v1961, 1
  %v1963 = vadd.f32 %v1961, %v1962
  %v1964 = vadd.f32 %v1809, %v1963
  %v1965 = vld [vmem:[%s1733] sm:$0xf]
  %v1966 = vld [vmem:[%s1733 + $0x4] sm:$0xf]
  %v1967 = vld [vmem:[%s1733 + $0x8] sm:$0xf]
  %v1968 = vld [vmem:[%s1733 + $0xc] sm:$0xf]
  %v1969 = vld [vmem:[%s1888] sm:$0xf]
  %v1970 = vld [vmem:[%s1888 + $0x4] sm:$0xf]
  %v1971 = vld [vmem:[%s1888 + $0x8] sm:$0xf]
  %v1972 = vld [vmem:[%s1888 + $0xc] sm:$0xf]
  %v1977 = vunpack.c.l.b16 %v1969
  %v1978 = vunpack.c.l.b16 %v1970
  %v1979 = vunpack.c.l.b16 %v1971
  %v1980 = vunpack.c.l.b16 %v1972
  %v1981 = vpack.c.b16 %v1978, %v1977
  %v1982 = vpack.c.b16 %v1980, %v1979
  %v1984 = vsel %vm103, %v1981, 0
  %v1987 = vsel %vm103, %v1982, 0
  %1989 = vmatpush.bf16.msra.mxu0 0
  %1990 = vmatpush.bf16.msra.mxu0 0
  %1991 = vmatpush.bf16.msra.mxu0 0
  %1992 = vmatpush.bf16.msra.mxu0 0
  %1993 = vmatpush.bf16.msra.mxu0 0
  %1994 = vmatpush.bf16.msra.mxu0 0
  %1995 = vmatpush.bf16.msra.mxu0 0
  %1996 = vmatpush.bf16.msra.mxu0 %v112
  %1997 = vmatmul.bf16.gmra.mxu0 %v1984
  %v1998 = vpop.f32.mrf.mxu0
  %v1999 = vadd.f32 0.0, %v1998
  %v2000 = vpop.f32.mrf.mxu0
  %v2001 = vadd.f32 0.0, %v2000
  %2002 = vmatmul.bf16.gmra.mxu0 %v1987
  %v2003 = vpop.f32.mrf.mxu0
  %v2004 = vadd.f32 0.0, %v2003
  %v2005 = vpop.f32.mrf.mxu0
  %v2006 = vadd.f32 0.0, %v2005
  %2007 = vdwg.mxu0
  %v2012 = vunpack.c.l.b16 %v1965
  %v2013 = vunpack.c.l.b16 %v1966
  %v2014 = vunpack.c.l.b16 %v1967
  %v2015 = vunpack.c.l.b16 %v1968
  %v2016 = vpack.c.b16 %v2013, %v2012
  %v2017 = vpack.c.b16 %v2015, %v2014
  %v2019 = vsel %vm103, %v2016, 0
  %v2022 = vsel %vm103, %v2017, 0
  %2024 = vmatpush.bf16.msra.mxu0 0
  %2025 = vmatpush.bf16.msra.mxu0 0
  %2026 = vmatpush.bf16.msra.mxu0 0
  %2027 = vmatpush.bf16.msra.mxu0 0
  %2028 = vmatpush.bf16.msra.mxu0 0
  %2029 = vmatpush.bf16.msra.mxu0 0
  %2030 = vmatpush.bf16.msra.mxu0 0
  %2031 = vmatpush.bf16.msra.mxu0 %v155
  %2032 = vmatmul.bf16.gmra.mxu0 %v2019
  %v2033 = vpop.f32.mrf.mxu0
  %v2034 = vadd.f32 %v1999, %v2033
  %v2035 = vpop.f32.mrf.mxu0
  %v2036 = vadd.f32 %v2001, %v2035
  %2037 = vmatmul.bf16.gmra.mxu0 %v2022
  %v2038 = vpop.f32.mrf.mxu0
  %v2039 = vadd.f32 %v2004, %v2038
  %v2040 = vpop.f32.mrf.mxu0
  %v2041 = vadd.f32 %v2006, %v2040
  %2042 = vdwg.mxu0
  %s2043 = scalar_lea.vmem %s0, 224
  %v2044 = vld [vmem:[%s2043] sm:$0xf]
  %v2045 = vld [vmem:[%s2043 + $0x4] sm:$0xf]
  %v2046 = vld [vmem:[%s2043 + $0x8] sm:$0xf]
  %v2047 = vld [vmem:[%s2043 + $0xc] sm:$0xf]
  %v2052 = vunpack.c.l.b16 %v2044
  %v2053 = vunpack.c.l.b16 %v2045
  %v2054 = vunpack.c.l.b16 %v2046
  %v2055 = vunpack.c.l.b16 %v2047
  %v2056 = vpack.c.b16 %v2053, %v2052
  %v2057 = vpack.c.b16 %v2055, %v2054
  %v2059 = vsel %vm103, %v2056, 0
  %v2062 = vsel %vm103, %v2057, 0
  %2064 = vmatpush.bf16.msra.mxu0 0
  %2065 = vmatpush.bf16.msra.mxu0 0
  %2066 = vmatpush.bf16.msra.mxu0 0
  %2067 = vmatpush.bf16.msra.mxu0 0
  %2068 = vmatpush.bf16.msra.mxu0 0
  %2069 = vmatpush.bf16.msra.mxu0 0
  %2070 = vmatpush.bf16.msra.mxu0 0
  %2071 = vmatpush.bf16.msra.mxu0 %v203
  %2072 = vmatmul.bf16.gmra.mxu0 %v2059
  %v2073 = vpop.f32.mrf.mxu0
  %v2074 = vadd.f32 0.0, %v2073
  %v2075 = vpop.f32.mrf.mxu0
  %v2076 = vadd.f32 0.0, %v2075
  %2077 = vmatmul.bf16.gmra.mxu0 %v2062
  %v2078 = vpop.f32.mrf.mxu0
  %v2079 = vadd.f32 0.0, %v2078
  %v2080 = vpop.f32.mrf.mxu0
  %v2081 = vadd.f32 0.0, %v2080
  %2082 = vdwg.mxu0
  %v2083 = vadd.f32 %v2034, %v2074
  %v2084 = vadd.f32 %v2036, %v2076
  %v2085 = vadd.f32 %v2039, %v2079
  %v2086 = vadd.f32 %v2041, %v2081
  %v2087 = vpack.c.bf16 %v2083, %v2083
  %v2088 = vpack.c.bf16 %v2084, %v2084
  %v2089 = vpack.c.bf16 %v2085, %v2085
  %v2090 = vpack.c.bf16 %v2086, %v2086
  %s2091 = scalar_lea.vmem %s4, 192
  %2092 = vst [vmem:[%s2091] sm:$0xf] %v2087
  %2093 = vst [vmem:[%s2091 + $0x4] sm:$0xf] %v2088
  %2094 = vst [vmem:[%s2091 + $0x8] sm:$0xf] %v2089
  %2095 = vst [vmem:[%s2091 + $0xc] sm:$0xf] %v2090
  %v2096 = vadd.f32 %v2083, %v2084
  %v2097 = vadd.f32 %v2096, %v2085
  %v2098 = vadd.f32 %v2097, %v2086
  %v2099 = vrot.slane %v2098, 4
  %v2100 = vadd.f32 %v2098, %v2099
  %v2101 = vrot.slane %v2100, 2
  %v2102 = vadd.f32 %v2100, %v2101
  %v2103 = vrot.slane %v2102, 1
  %v2104 = vadd.f32 %v2102, %v2103
  %v2105 = vadd.f32 %v1950, %v2104
  %v2106 = vmul.f32 %v2083, %v2083
  %v2107 = vmul.f32 %v2084, %v2084
  %v2108 = vmul.f32 %v2085, %v2085
  %v2109 = vmul.f32 %v2086, %v2086
  %v2110 = vadd.f32 %v2106, %v2107
  %v2111 = vadd.f32 %v2110, %v2108
  %v2112 = vadd.f32 %v2111, %v2109
  %v2113 = vrot.slane %v2112, 4
  %v2114 = vadd.f32 %v2112, %v2113
  %v2115 = vrot.slane %v2114, 2
  %v2116 = vadd.f32 %v2114, %v2115
  %v2117 = vrot.slane %v2116, 1
  %v2118 = vadd.f32 %v2116, %v2117
  %v2119 = vadd.f32 %v1964, %v2118
  %v2120 = vld [vmem:[%s1888] sm:$0xf]
  %v2121 = vld [vmem:[%s1888 + $0x4] sm:$0xf]
  %v2122 = vld [vmem:[%s1888 + $0x8] sm:$0xf]
  %v2123 = vld [vmem:[%s1888 + $0xc] sm:$0xf]
  %v2124 = vld [vmem:[%s2043] sm:$0xf]
  %v2125 = vld [vmem:[%s2043 + $0x4] sm:$0xf]
  %v2126 = vld [vmem:[%s2043 + $0x8] sm:$0xf]
  %v2127 = vld [vmem:[%s2043 + $0xc] sm:$0xf]
  %v2132 = vunpack.c.l.b16 %v2124
  %v2133 = vunpack.c.l.b16 %v2125
  %v2134 = vunpack.c.l.b16 %v2126
  %v2135 = vunpack.c.l.b16 %v2127
  %v2136 = vpack.c.b16 %v2133, %v2132
  %v2137 = vpack.c.b16 %v2135, %v2134
  %v2139 = vsel %vm103, %v2136, 0
  %v2142 = vsel %vm103, %v2137, 0
  %2144 = vmatpush.bf16.msra.mxu0 0
  %2145 = vmatpush.bf16.msra.mxu0 0
  %2146 = vmatpush.bf16.msra.mxu0 0
  %2147 = vmatpush.bf16.msra.mxu0 0
  %2148 = vmatpush.bf16.msra.mxu0 0
  %2149 = vmatpush.bf16.msra.mxu0 0
  %2150 = vmatpush.bf16.msra.mxu0 0
  %2151 = vmatpush.bf16.msra.mxu0 %v112
  %2152 = vmatmul.bf16.gmra.mxu0 %v2139
  %v2153 = vpop.f32.mrf.mxu0
  %v2154 = vadd.f32 0.0, %v2153
  %v2155 = vpop.f32.mrf.mxu0
  %v2156 = vadd.f32 0.0, %v2155
  %2157 = vmatmul.bf16.gmra.mxu0 %v2142
  %v2158 = vpop.f32.mrf.mxu0
  %v2159 = vadd.f32 0.0, %v2158
  %v2160 = vpop.f32.mrf.mxu0
  %v2161 = vadd.f32 0.0, %v2160
  %2162 = vdwg.mxu0
  %v2167 = vunpack.c.l.b16 %v2120
  %v2168 = vunpack.c.l.b16 %v2121
  %v2169 = vunpack.c.l.b16 %v2122
  %v2170 = vunpack.c.l.b16 %v2123
  %v2171 = vpack.c.b16 %v2168, %v2167
  %v2172 = vpack.c.b16 %v2170, %v2169
  %v2174 = vsel %vm103, %v2171, 0
  %v2177 = vsel %vm103, %v2172, 0
  %2179 = vmatpush.bf16.msra.mxu0 0
  %2180 = vmatpush.bf16.msra.mxu0 0
  %2181 = vmatpush.bf16.msra.mxu0 0
  %2182 = vmatpush.bf16.msra.mxu0 0
  %2183 = vmatpush.bf16.msra.mxu0 0
  %2184 = vmatpush.bf16.msra.mxu0 0
  %2185 = vmatpush.bf16.msra.mxu0 0
  %2186 = vmatpush.bf16.msra.mxu0 %v155
  %2187 = vmatmul.bf16.gmra.mxu0 %v2174
  %v2188 = vpop.f32.mrf.mxu0
  %v2189 = vadd.f32 %v2154, %v2188
  %v2190 = vpop.f32.mrf.mxu0
  %v2191 = vadd.f32 %v2156, %v2190
  %2192 = vmatmul.bf16.gmra.mxu0 %v2177
  %v2193 = vpop.f32.mrf.mxu0
  %v2194 = vadd.f32 %v2159, %v2193
  %v2195 = vpop.f32.mrf.mxu0
  %v2196 = vadd.f32 %v2161, %v2195
  %2197 = vdwg.mxu0
  %s2198 = scalar_lea.vmem %s0, 240
  %v2199 = vld [vmem:[%s2198] sm:$0xf]
  %v2200 = vld [vmem:[%s2198 + $0x4] sm:$0xf]
  %v2201 = vld [vmem:[%s2198 + $0x8] sm:$0xf]
  %v2202 = vld [vmem:[%s2198 + $0xc] sm:$0xf]
  %v2207 = vunpack.c.l.b16 %v2199
  %v2208 = vunpack.c.l.b16 %v2200
  %v2209 = vunpack.c.l.b16 %v2201
  %v2210 = vunpack.c.l.b16 %v2202
  %v2211 = vpack.c.b16 %v2208, %v2207
  %v2212 = vpack.c.b16 %v2210, %v2209
  %v2214 = vsel %vm103, %v2211, 0
  %v2217 = vsel %vm103, %v2212, 0
  %2219 = vmatpush.bf16.msra.mxu0 0
  %2220 = vmatpush.bf16.msra.mxu0 0
  %2221 = vmatpush.bf16.msra.mxu0 0
  %2222 = vmatpush.bf16.msra.mxu0 0
  %2223 = vmatpush.bf16.msra.mxu0 0
  %2224 = vmatpush.bf16.msra.mxu0 0
  %2225 = vmatpush.bf16.msra.mxu0 0
  %2226 = vmatpush.bf16.msra.mxu0 %v203
  %2227 = vmatmul.bf16.gmra.mxu0 %v2214
  %v2228 = vpop.f32.mrf.mxu0
  %v2229 = vadd.f32 0.0, %v2228
  %v2230 = vpop.f32.mrf.mxu0
  %v2231 = vadd.f32 0.0, %v2230
  %2232 = vmatmul.bf16.gmra.mxu0 %v2217
  %v2233 = vpop.f32.mrf.mxu0
  %v2234 = vadd.f32 0.0, %v2233
  %v2235 = vpop.f32.mrf.mxu0
  %v2236 = vadd.f32 0.0, %v2235
  %2237 = vdwg.mxu0
  %v2238 = vadd.f32 %v2189, %v2229
  %v2239 = vadd.f32 %v2191, %v2231
  %v2240 = vadd.f32 %v2194, %v2234
  %v2241 = vadd.f32 %v2196, %v2236
  %v2242 = vpack.c.bf16 %v2238, %v2238
  %v2243 = vpack.c.bf16 %v2239, %v2239
  %v2244 = vpack.c.bf16 %v2240, %v2240
  %v2245 = vpack.c.bf16 %v2241, %v2241
  %s2246 = scalar_lea.vmem %s4, 208
  %2247 = vst [vmem:[%s2246] sm:$0xf] %v2242
  %2248 = vst [vmem:[%s2246 + $0x4] sm:$0xf] %v2243
  %2249 = vst [vmem:[%s2246 + $0x8] sm:$0xf] %v2244
  %2250 = vst [vmem:[%s2246 + $0xc] sm:$0xf] %v2245
  %v2251 = vadd.f32 %v2238, %v2239
  %v2252 = vadd.f32 %v2251, %v2240
  %v2253 = vadd.f32 %v2252, %v2241
  %v2254 = vrot.slane %v2253, 4
  %v2255 = vadd.f32 %v2253, %v2254
  %v2256 = vrot.slane %v2255, 2
  %v2257 = vadd.f32 %v2255, %v2256
  %v2258 = vrot.slane %v2257, 1
  %v2259 = vadd.f32 %v2257, %v2258
  %v2260 = vadd.f32 %v2105, %v2259
  %v2261 = vmul.f32 %v2238, %v2238
  %v2262 = vmul.f32 %v2239, %v2239
  %v2263 = vmul.f32 %v2240, %v2240
  %v2264 = vmul.f32 %v2241, %v2241
  %v2265 = vadd.f32 %v2261, %v2262
  %v2266 = vadd.f32 %v2265, %v2263
  %v2267 = vadd.f32 %v2266, %v2264
  %v2268 = vrot.slane %v2267, 4
  %v2269 = vadd.f32 %v2267, %v2268
  %v2270 = vrot.slane %v2269, 2
  %v2271 = vadd.f32 %v2269, %v2270
  %v2272 = vrot.slane %v2271, 1
  %v2273 = vadd.f32 %v2271, %v2272
  %v2274 = vadd.f32 %v2119, %v2273
  %v2275 = vld [vmem:[%s2043] sm:$0xf]
  %v2276 = vld [vmem:[%s2043 + $0x4] sm:$0xf]
  %v2277 = vld [vmem:[%s2043 + $0x8] sm:$0xf]
  %v2278 = vld [vmem:[%s2043 + $0xc] sm:$0xf]
  %v2279 = vld [vmem:[%s2198] sm:$0xf]
  %v2280 = vld [vmem:[%s2198 + $0x4] sm:$0xf]
  %v2281 = vld [vmem:[%s2198 + $0x8] sm:$0xf]
  %v2282 = vld [vmem:[%s2198 + $0xc] sm:$0xf]
  %v2287 = vunpack.c.l.b16 %v2279
  %v2288 = vunpack.c.l.b16 %v2280
  %v2289 = vunpack.c.l.b16 %v2281
  %v2290 = vunpack.c.l.b16 %v2282
  %v2291 = vpack.c.b16 %v2288, %v2287
  %v2292 = vpack.c.b16 %v2290, %v2289
  %v2294 = vsel %vm103, %v2291, 0
  %v2297 = vsel %vm103, %v2292, 0
  %2299 = vmatpush.bf16.msra.mxu0 0
  %2300 = vmatpush.bf16.msra.mxu0 0
  %2301 = vmatpush.bf16.msra.mxu0 0
  %2302 = vmatpush.bf16.msra.mxu0 0
  %2303 = vmatpush.bf16.msra.mxu0 0
  %2304 = vmatpush.bf16.msra.mxu0 0
  %2305 = vmatpush.bf16.msra.mxu0 0
  %2306 = vmatpush.bf16.msra.mxu0 %v112
  %2307 = vmatmul.bf16.gmra.mxu0 %v2294
  %v2308 = vpop.f32.mrf.mxu0
  %v2309 = vadd.f32 0.0, %v2308
  %v2310 = vpop.f32.mrf.mxu0
  %v2311 = vadd.f32 0.0, %v2310
  %2312 = vmatmul.bf16.gmra.mxu0 %v2297
  %v2313 = vpop.f32.mrf.mxu0
  %v2314 = vadd.f32 0.0, %v2313
  %v2315 = vpop.f32.mrf.mxu0
  %v2316 = vadd.f32 0.0, %v2315
  %2317 = vdwg.mxu0
  %v2322 = vunpack.c.l.b16 %v2275
  %v2323 = vunpack.c.l.b16 %v2276
  %v2324 = vunpack.c.l.b16 %v2277
  %v2325 = vunpack.c.l.b16 %v2278
  %v2326 = vpack.c.b16 %v2323, %v2322
  %v2327 = vpack.c.b16 %v2325, %v2324
  %v2329 = vsel %vm103, %v2326, 0
  %v2332 = vsel %vm103, %v2327, 0
  %2334 = vmatpush.bf16.msra.mxu0 0
  %2335 = vmatpush.bf16.msra.mxu0 0
  %2336 = vmatpush.bf16.msra.mxu0 0
  %2337 = vmatpush.bf16.msra.mxu0 0
  %2338 = vmatpush.bf16.msra.mxu0 0
  %2339 = vmatpush.bf16.msra.mxu0 0
  %2340 = vmatpush.bf16.msra.mxu0 0
  %2341 = vmatpush.bf16.msra.mxu0 %v155
  %2342 = vmatmul.bf16.gmra.mxu0 %v2329
  %v2343 = vpop.f32.mrf.mxu0
  %v2344 = vadd.f32 %v2309, %v2343
  %v2345 = vpop.f32.mrf.mxu0
  %v2346 = vadd.f32 %v2311, %v2345
  %2347 = vmatmul.bf16.gmra.mxu0 %v2332
  %v2348 = vpop.f32.mrf.mxu0
  %v2349 = vadd.f32 %v2314, %v2348
  %v2350 = vpop.f32.mrf.mxu0
  %v2351 = vadd.f32 %v2316, %v2350
  %2352 = vdwg.mxu0
  %v2353 = vld [vmem:[%s58] sm:$0xf]
  %v2354 = vld [vmem:[%s58 + $0x4] sm:$0xf]
  %v2355 = vld [vmem:[%s58 + $0x8] sm:$0xf]
  %v2356 = vld [vmem:[%s58 + $0xc] sm:$0xf]
  %v2361 = vunpack.c.l.b16 %v2353
  %v2362 = vunpack.c.l.b16 %v2354
  %v2363 = vunpack.c.l.b16 %v2355
  %v2364 = vunpack.c.l.b16 %v2356
  %v2365 = vpack.c.b16 %v2362, %v2361
  %v2366 = vpack.c.b16 %v2364, %v2363
  %v2368 = vsel %vm103, %v2365, 0
  %v2371 = vsel %vm103, %v2366, 0
  %2373 = vmatpush.bf16.msra.mxu0 0
  %2374 = vmatpush.bf16.msra.mxu0 0
  %2375 = vmatpush.bf16.msra.mxu0 0
  %2376 = vmatpush.bf16.msra.mxu0 0
  %2377 = vmatpush.bf16.msra.mxu0 0
  %2378 = vmatpush.bf16.msra.mxu0 0
  %2379 = vmatpush.bf16.msra.mxu0 0
  %2380 = vmatpush.bf16.msra.mxu0 %v203
  %2381 = vmatmul.bf16.gmra.mxu0 %v2368
  %v2382 = vpop.f32.mrf.mxu0
  %v2383 = vadd.f32 0.0, %v2382
  %v2384 = vpop.f32.mrf.mxu0
  %v2385 = vadd.f32 0.0, %v2384
  %2386 = vmatmul.bf16.gmra.mxu0 %v2371
  %v2387 = vpop.f32.mrf.mxu0
  %v2388 = vadd.f32 0.0, %v2387
  %v2389 = vpop.f32.mrf.mxu0
  %v2390 = vadd.f32 0.0, %v2389
  %2391 = vdwg.mxu0
  %v2392 = vadd.f32 %v2344, %v2383
  %v2393 = vadd.f32 %v2346, %v2385
  %v2394 = vadd.f32 %v2349, %v2388
  %v2395 = vadd.f32 %v2351, %v2390
  %v2396 = vpack.c.bf16 %v2392, %v2392
  %v2397 = vpack.c.bf16 %v2393, %v2393
  %v2398 = vpack.c.bf16 %v2394, %v2394
  %v2399 = vpack.c.bf16 %v2395, %v2395
  %s2400 = scalar_lea.vmem %s4, 224
  %2401 = vst [vmem:[%s2400] sm:$0xf] %v2396
  %2402 = vst [vmem:[%s2400 + $0x4] sm:$0xf] %v2397
  %2403 = vst [vmem:[%s2400 + $0x8] sm:$0xf] %v2398
  %2404 = vst [vmem:[%s2400 + $0xc] sm:$0xf] %v2399
  %v2405 = vadd.f32 %v2392, %v2393
  %v2406 = vadd.f32 %v2405, %v2394
  %v2407 = vadd.f32 %v2406, %v2395
  %v2408 = vrot.slane %v2407, 4
  %v2409 = vadd.f32 %v2407, %v2408
  %v2410 = vrot.slane %v2409, 2
  %v2411 = vadd.f32 %v2409, %v2410
  %v2412 = vrot.slane %v2411, 1
  %v2413 = vadd.f32 %v2411, %v2412
  %v2414 = vadd.f32 %v2260, %v2413
  %v2415 = vmul.f32 %v2392, %v2392
  %v2416 = vmul.f32 %v2393, %v2393
  %v2417 = vmul.f32 %v2394, %v2394
  %v2418 = vmul.f32 %v2395, %v2395
  %v2419 = vadd.f32 %v2415, %v2416
  %v2420 = vadd.f32 %v2419, %v2417
  %v2421 = vadd.f32 %v2420, %v2418
  %v2422 = vrot.slane %v2421, 4
  %v2423 = vadd.f32 %v2421, %v2422
  %v2424 = vrot.slane %v2423, 2
  %v2425 = vadd.f32 %v2423, %v2424
  %v2426 = vrot.slane %v2425, 1
  %v2427 = vadd.f32 %v2425, %v2426
  %v2428 = vadd.f32 %v2274, %v2427
  %v2429 = vld [vmem:[%s2198] sm:$0xf]
  %v2430 = vld [vmem:[%s2198 + $0x4] sm:$0xf]
  %v2431 = vld [vmem:[%s2198 + $0x8] sm:$0xf]
  %v2432 = vld [vmem:[%s2198 + $0xc] sm:$0xf]
  %v2433 = vld [vmem:[%s58] sm:$0xf]
  %v2434 = vld [vmem:[%s58 + $0x4] sm:$0xf]
  %v2435 = vld [vmem:[%s58 + $0x8] sm:$0xf]
  %v2436 = vld [vmem:[%s58 + $0xc] sm:$0xf]
  %v2441 = vunpack.c.l.b16 %v2433
  %v2442 = vunpack.c.l.b16 %v2434
  %v2443 = vunpack.c.l.b16 %v2435
  %v2444 = vunpack.c.l.b16 %v2436
  %v2445 = vpack.c.b16 %v2442, %v2441
  %v2446 = vpack.c.b16 %v2444, %v2443
  %v2448 = vsel %vm103, %v2445, 0
  %v2451 = vsel %vm103, %v2446, 0
  %2453 = vmatpush.bf16.msra.mxu0 0
  %2454 = vmatpush.bf16.msra.mxu0 0
  %2455 = vmatpush.bf16.msra.mxu0 0
  %2456 = vmatpush.bf16.msra.mxu0 0
  %2457 = vmatpush.bf16.msra.mxu0 0
  %2458 = vmatpush.bf16.msra.mxu0 0
  %2459 = vmatpush.bf16.msra.mxu0 0
  %2460 = vmatpush.bf16.msra.mxu0 %v112
  %2461 = vmatmul.bf16.gmra.mxu0 %v2448
  %v2462 = vpop.f32.mrf.mxu0
  %v2463 = vadd.f32 0.0, %v2462
  %v2464 = vpop.f32.mrf.mxu0
  %v2465 = vadd.f32 0.0, %v2464
  %2466 = vmatmul.bf16.gmra.mxu0 %v2451
  %v2467 = vpop.f32.mrf.mxu0
  %v2468 = vadd.f32 0.0, %v2467
  %v2469 = vpop.f32.mrf.mxu0
  %v2470 = vadd.f32 0.0, %v2469
  %2471 = vdwg.mxu0
  %v2476 = vunpack.c.l.b16 %v2429
  %v2477 = vunpack.c.l.b16 %v2430
  %v2478 = vunpack.c.l.b16 %v2431
  %v2479 = vunpack.c.l.b16 %v2432
  %v2480 = vpack.c.b16 %v2477, %v2476
  %v2481 = vpack.c.b16 %v2479, %v2478
  %v2483 = vsel %vm103, %v2480, 0
  %v2486 = vsel %vm103, %v2481, 0
  %2488 = vmatpush.bf16.msra.mxu0 0
  %2489 = vmatpush.bf16.msra.mxu0 0
  %2490 = vmatpush.bf16.msra.mxu0 0
  %2491 = vmatpush.bf16.msra.mxu0 0
  %2492 = vmatpush.bf16.msra.mxu0 0
  %2493 = vmatpush.bf16.msra.mxu0 0
  %2494 = vmatpush.bf16.msra.mxu0 0
  %2495 = vmatpush.bf16.msra.mxu0 %v155
  %2496 = vmatmul.bf16.gmra.mxu0 %v2483
  %v2497 = vpop.f32.mrf.mxu0
  %v2498 = vadd.f32 %v2463, %v2497
  %v2499 = vpop.f32.mrf.mxu0
  %v2500 = vadd.f32 %v2465, %v2499
  %2501 = vmatmul.bf16.gmra.mxu0 %v2486
  %v2502 = vpop.f32.mrf.mxu0
  %v2503 = vadd.f32 %v2468, %v2502
  %v2504 = vpop.f32.mrf.mxu0
  %v2505 = vadd.f32 %v2470, %v2504
  %2506 = vdwg.mxu0
  %v2507 = vld [vmem:[%s67] sm:$0xf]
  %v2508 = vld [vmem:[%s67 + $0x4] sm:$0xf]
  %v2509 = vld [vmem:[%s67 + $0x8] sm:$0xf]
  %v2510 = vld [vmem:[%s67 + $0xc] sm:$0xf]
  %v2515 = vunpack.c.l.b16 %v2507
  %v2516 = vunpack.c.l.b16 %v2508
  %v2517 = vunpack.c.l.b16 %v2509
  %v2518 = vunpack.c.l.b16 %v2510
  %v2519 = vpack.c.b16 %v2516, %v2515
  %v2520 = vpack.c.b16 %v2518, %v2517
  %v2522 = vsel %vm103, %v2519, 0
  %v2525 = vsel %vm103, %v2520, 0
  %2527 = vmatpush.bf16.msra.mxu0 0
  %2528 = vmatpush.bf16.msra.mxu0 0
  %2529 = vmatpush.bf16.msra.mxu0 0
  %2530 = vmatpush.bf16.msra.mxu0 0
  %2531 = vmatpush.bf16.msra.mxu0 0
  %2532 = vmatpush.bf16.msra.mxu0 0
  %2533 = vmatpush.bf16.msra.mxu0 0
  %2534 = vmatpush.bf16.msra.mxu0 %v203
  %2535 = vmatmul.bf16.gmra.mxu0 %v2522
  %v2536 = vpop.f32.mrf.mxu0
  %v2537 = vadd.f32 0.0, %v2536
  %v2538 = vpop.f32.mrf.mxu0
  %v2539 = vadd.f32 0.0, %v2538
  %2540 = vmatmul.bf16.gmra.mxu0 %v2525
  %v2541 = vpop.f32.mrf.mxu0
  %v2542 = vadd.f32 0.0, %v2541
  %v2543 = vpop.f32.mrf.mxu0
  %v2544 = vadd.f32 0.0, %v2543
  %2545 = vdwg.mxu0
  %v2546 = vadd.f32 %v2498, %v2537
  %v2547 = vadd.f32 %v2500, %v2539
  %v2548 = vadd.f32 %v2503, %v2542
  %v2549 = vadd.f32 %v2505, %v2544
  %v2550 = vpack.c.bf16 %v2546, %v2546
  %v2551 = vpack.c.bf16 %v2547, %v2547
  %v2552 = vpack.c.bf16 %v2548, %v2548
  %v2553 = vpack.c.bf16 %v2549, %v2549
  %s2554 = scalar_lea.vmem %s4, 240
  %2555 = vst [vmem:[%s2554] sm:$0xf] %v2550
  %2556 = vst [vmem:[%s2554 + $0x4] sm:$0xf] %v2551
  %2557 = vst [vmem:[%s2554 + $0x8] sm:$0xf] %v2552
  %2558 = vst [vmem:[%s2554 + $0xc] sm:$0xf] %v2553
  %v2559 = vadd.f32 %v2546, %v2547
  %v2560 = vadd.f32 %v2559, %v2548
  %v2561 = vadd.f32 %v2560, %v2549
  %v2562 = vrot.slane %v2561, 4
  %v2563 = vadd.f32 %v2561, %v2562
  %v2564 = vrot.slane %v2563, 2
  %v2565 = vadd.f32 %v2563, %v2564
  %v2566 = vrot.slane %v2565, 1
  %v2567 = vadd.f32 %v2565, %v2566
  %v2568 = vadd.f32 %v2414, %v2567
  %v2569 = vmul.f32 %v2546, %v2546
  %v2570 = vmul.f32 %v2547, %v2547
  %v2571 = vmul.f32 %v2548, %v2548
  %v2572 = vmul.f32 %v2549, %v2549
  %v2573 = vadd.f32 %v2569, %v2570
  %v2574 = vadd.f32 %v2573, %v2571
  %v2575 = vadd.f32 %v2574, %v2572
  %v2576 = vrot.slane %v2575, 4
  %v2577 = vadd.f32 %v2575, %v2576
  %v2578 = vrot.slane %v2577, 2
  %v2579 = vadd.f32 %v2577, %v2578
  %v2580 = vrot.slane %v2579, 1
  %v2581 = vadd.f32 %v2579, %v2580
  %v2582 = vadd.f32 %v2428, %v2581
  %2583 = vst [vmem:[%s5] sm:$0x1] %v2568
  %2584 = vst [vmem:[%s6] sm:$0x1] %v2582
  // Predicated region
  $region18: #{block_forward.2} parent=0 // pred_check
    _
  $region19: #{block_forward.2} parent=0 // pred_check_branch
    %2586 = sbr.rel (0) target = $region21
  $region20: #{block_forward.2} parent=0 // pred_region
    _
  $region21: #{block_forward.2} parent=0 // pred_fallthru
    _
  // Predicated region
  $region22: #{block_forward.2} parent=0 // pred_check
    _
  $region23: #{block_forward.2} parent=0 // pred_check_branch
    %2588 = sbr.rel (0) target = $region25
  $region24: #{block_forward.2} parent=0 // pred_region
    _
  $region25: #{block_forward.2} parent=0 // pred_fallthru
    _
  // Predicated region
  $region26: #{block_forward.2} parent=0 // pred_check
    _
  $region27: #{block_forward.2} parent=0 // pred_check_branch
    %2590 = sbr.rel (0) target = $region29
  $region28: #{block_forward.2} parent=0 // pred_region
    _
  $region29: #{block_forward.2} parent=0 // pred_fallthru
    _
  // Predicated region
  $region30: #{block_forward.2} parent=0 // pred_check
    _
  $region31: #{block_forward.2} parent=0 // pred_check_branch
    %2592 = sbr.rel (0) target = $region33
  $region32: #{block_forward.2} parent=0 // pred_region
    _
  $region33: #{block_forward.2} parent=0 // pred_fallthru
    _
  // Predicated region
  $region34: #{block_forward.2} parent=0 // pred_check
    _
  $region35: #{block_forward.2} parent=0 // pred_check_branch
    %2594 = sbr.rel (0) target = $region37
  $region36: #{block_forward.2} parent=0 // pred_region
    _
  $region37: #{block_forward.2} parent=0 // pred_fallthru
    _
  // Predicated region
  $region38: #{block_forward.2} parent=0 // pred_check
    _
  $region39: #{block_forward.2} parent=0 // pred_check_branch
    %2596 = sbr.rel (0) target = $region41
  $region40: #{block_forward.2} parent=0 // pred_region
    _
  $region41: #{block_forward.2} parent=0 // pred_fallthru
    _

</llo_original>
